<compile_context>
chip_gen: v7x
topology: tpu7x:2x2x1
jax: 0.10.0
libtpu: 0.0.40
codegen_flags: <defaults>
</compile_context>

<pallas_src>
import math

import jax
import jax.numpy as jnp
from jax.experimental import pallas as pl
from jax.experimental.pallas import tpu as pltpu

# ----------------------------- config (small, synthetic BERT) ----------------
VOCAB = 100
MAX_POS = 16
TYPE_VOCAB = 2
HIDDEN = 32              # real hidden size
HEADS = 4
HEAD_DIM = HIDDEN // HEADS
INTERMEDIATE = 64        # real FFN intermediate size
LAYERS = 2
LN_EPS = 1e-12

HP = 128                 # hidden padded to a full lane group (lane-dense I/O)
IP = 128                 # FFN intermediate padded to a full lane group
QKV_OUT = 3 * HIDDEN     # fused q|k|v projection output width


# ----------------------------- in-kernel helpers ------------------------------
def _layernorm_padded(x, gamma, beta, lane_mask):
    """LayerNorm over the first HIDDEN lanes of a (rows, HP) activation.

    Padded lanes [HIDDEN:HP] are zero on input and stay zero on output
    (gamma/beta are zero-padded), so results match the unpadded model exactly.
    All statistics in float32.
    """
    mean = jnp.sum(x, axis=-1, keepdims=True) * (1.0 / HIDDEN)
    xc = (x - mean) * lane_mask
    var = jnp.sum(xc * xc, axis=-1, keepdims=True) * (1.0 / HIDDEN)
    return xc * jax.lax.rsqrt(var + LN_EPS) * gamma + beta


def _gelu_tanh(x):
    return 0.5 * x * (1.0 + jnp.tanh(0.7978845608028654 *
                                     (x + 0.044715 * x * x * x)))


# ----------------------------- fused tower kernel ------------------------------
def bert_tower_kernel(x_ref, neg_ref, eg_ref, eb_ref,
                      wqkv_ref, bqkv_ref, wo_ref, bo_ref, g1_ref, be1_ref,
                      w1_ref, b1_ref, w2_ref, b2_ref, g2_ref, be2_ref,
                      o_ref):
    # One grid step == one batch element.  The whole tower runs here, so the
    # activation stays resident in VMEM/vregs for all layers.
    lane_mask = (jax.lax.broadcasted_iota(jnp.int32, (1, HP), 1)
                 < HIDDEN).astype(jnp.float32)
    neg = neg_ref[0]                 # (1, S)  additive attention mask
    x = x_ref[0]                     # (S, HP) f32; lanes [HIDDEN:] are zero

    # Embedding LayerNorm (fused into the same kernel).
    x = _layernorm_padded(x, eg_ref[...], eb_ref[...], lane_mask)

    scale = 1.0 / math.sqrt(HEAD_DIM)
    for l in range(LAYERS):          # static unroll over stacked layer weights
        # ---- fused QKV projection: one (S, HP) @ (HP, 3*HIDDEN) bf16 matmul --
        qkv = jnp.dot(x.astype(jnp.bfloat16), wqkv_ref[l],
                      preferred_element_type=jnp.float32) + bqkv_ref[l]

        # ---- per-head attention (tiny 8x8 score/context matmuls, f32) -------
        ctxs = []
        for h in range(HEADS):
            q = qkv[:, h * HEAD_DIM:(h + 1) * HEAD_DIM]
            k = qkv[:, HIDDEN + h * HEAD_DIM:HIDDEN + (h + 1) * HEAD_DIM]
            v = qkv[:, 2 * HIDDEN + h * HEAD_DIM:2 * HIDDEN + (h + 1) * HEAD_DIM]
            s = jax.lax.dot_general(q, k, (((1,), (1,)), ((), ())),
                                    preferred_element_type=jnp.float32)
            s = s * scale + neg
            s = s - jnp.max(s, axis=-1, keepdims=True)
            p = jnp.exp(s)
            p = p * pl.reciprocal(jnp.sum(p, axis=-1, keepdims=True),
                                  approx=True)
            ctxs.append(jnp.dot(p, v, preferred_element_type=jnp.float32))
        ctx = jnp.concatenate(ctxs, axis=-1)                   # (S, HIDDEN)

        # ---- fused output projection across all heads ------------------------
        attn = jnp.dot(ctx.astype(jnp.bfloat16), wo_ref[l],
                       preferred_element_type=jnp.float32) + bo_ref[l]
        x = _layernorm_padded(x + attn, g1_ref[l], be1_ref[l], lane_mask)

        # ---- FFN: (S,HP)@(HP,IP) -> GELU (f32) -> (S,IP)@(IP,HP) -------------
        h1 = jnp.dot(x.astype(jnp.bfloat16), w1_ref[l],
                     preferred_element_type=jnp.float32) + b1_ref[l]
        h1 = _gelu_tanh(h1)
        h2 = jnp.dot(h1.astype(jnp.bfloat16), w2_ref[l],
                     preferred_element_type=jnp.float32) + b2_ref[l]
        x = _layernorm_padded(x + h2, g2_ref[l], be2_ref[l], lane_mask)

    o_ref[0] = x                    # lane-dense (S, 128) f32 store


# ----------------------------- parameter init / packing -----------------------
def init_bert_params(key):
    """Standard (unpadded, float32) BERT-tower parameters; y = x @ W + b."""
    keys = iter(jax.random.split(key, 3 + LAYERS * 6))

    def norm(shape):
        return 0.02 * jax.random.normal(next(keys), shape, jnp.float32)

    params = {
        'word_emb': norm((VOCAB, HIDDEN)),
        'pos_emb': norm((MAX_POS, HIDDEN)),
        'type_emb': norm((TYPE_VOCAB, HIDDEN)),
        'emb_ln_g': jnp.ones((HIDDEN,), jnp.float32),
        'emb_ln_b': jnp.zeros((HIDDEN,), jnp.float32),
        'layers': [],
    }
    for _ in range(LAYERS):
        params['layers'].append(dict(
            wq=norm((HIDDEN, HIDDEN)), bq=jnp.zeros((HIDDEN,), jnp.float32),
            wk=norm((HIDDEN, HIDDEN)), bk=jnp.zeros((HIDDEN,), jnp.float32),
            wv=norm((HIDDEN, HIDDEN)), bv=jnp.zeros((HIDDEN,), jnp.float32),
            wo=norm((HIDDEN, HIDDEN)), bo=jnp.zeros((HIDDEN,), jnp.float32),
            ln1_g=jnp.ones((HIDDEN,), jnp.float32),
            ln1_b=jnp.zeros((HIDDEN,), jnp.float32),
            w1=norm((HIDDEN, INTERMEDIATE)),
            b1=jnp.zeros((INTERMEDIATE,), jnp.float32),
            w2=norm((INTERMEDIATE, HIDDEN)),
            b2=jnp.zeros((HIDDEN,), jnp.float32),
            ln2_g=jnp.ones((HIDDEN,), jnp.float32),
            ln2_b=jnp.zeros((HIDDEN,), jnp.float32),
        ))
    return params


def pack_params(params):
    """Pad/stack weights into MXU- and lane-friendly kernel operands.

    Matmul weights -> bf16, zero-padded to 128 lanes; biases / LN params stay
    f32 and are zero-padded so padded activation lanes remain exactly zero.
    """
    def pad_to(a, shape):
        return jnp.pad(a, [(0, t - s) for s, t in zip(a.shape, shape)])

    cols = {k: [] for k in ('wqkv', 'bqkv', 'wo', 'bo', 'ln1_g', 'ln1_b',
                            'w1', 'b1', 'w2', 'b2', 'ln2_g', 'ln2_b')}
    for L in params['layers']:
        cols['wqkv'].append(pad_to(
            jnp.concatenate([L['wq'], L['wk'], L['wv']], axis=1),
            (HP, QKV_OUT)).astype(jnp.bfloat16))
        cols['bqkv'].append(
            jnp.concatenate([L['bq'], L['bk'], L['bv']])[None, :])
        cols['wo'].append(pad_to(L['wo'], (HIDDEN, HP)).astype(jnp.bfloat16))
        cols['bo'].append(pad_to(L['bo'][None, :], (1, HP)))
        cols['ln1_g'].append(pad_to(L['ln1_g'][None, :], (1, HP)))
        cols['ln1_b'].append(pad_to(L['ln1_b'][None, :], (1, HP)))
        cols['w1'].append(pad_to(L['w1'], (HP, IP)).astype(jnp.bfloat16))
        cols['b1'].append(pad_to(L['b1'][None, :], (1, IP)))
        cols['w2'].append(pad_to(L['w2'], (IP, HP)).astype(jnp.bfloat16))
        cols['b2'].append(pad_to(L['b2'][None, :], (1, HP)))
        cols['ln2_g'].append(pad_to(L['ln2_g'][None, :], (1, HP)))
        cols['ln2_b'].append(pad_to(L['ln2_b'][None, :], (1, HP)))

    packed = {k: jnp.stack(v, axis=0) for k, v in cols.items()}
    packed.update(
        word_emb=params['word_emb'],
        pos_emb=params['pos_emb'],
        type_emb=params['type_emb'],
        emb_ln_g=pad_to(params['emb_ln_g'][None, :], (1, HP)),
        emb_ln_b=pad_to(params['emb_ln_b'][None, :], (1, HP)),
    )
    return packed


# ----------------------------- pallas_call wrapper -----------------------------
def _full_spec(shape):
    # Whole array resident in VMEM; same block for every grid step.
    return pl.BlockSpec(shape, lambda b: (0,) * len(shape))


@jax.jit
def bert_tower_forward(packed, input_ids, attention_mask):
    B, S = input_ids.shape
    # TODO(synk): data-dependent embedding gather (word/pos/type lookup) stays
    # in plain JAX outside the Pallas kernel.
    x = (packed['word_emb'][input_ids]
         + packed['pos_emb'][:S][None, :, :]
         + packed['type_emb'][0][None, None, :])
    x = jnp.pad(x, ((0, 0), (0, 0), (0, HP - HIDDEN)))          # (B, S, HP)
    neg = ((1.0 - attention_mask.astype(jnp.float32)) * -10000.0)[:, None, :]

    in_specs = [
        pl.BlockSpec((1, S, HP), lambda b: (b, 0, 0)),          # activation
        pl.BlockSpec((1, 1, S), lambda b: (b, 0, 0)),           # additive mask
        _full_spec((1, HP)), _full_spec((1, HP)),               # emb LN g/b
        _full_spec((LAYERS, HP, QKV_OUT)), _full_spec((LAYERS, 1, QKV_OUT)),
        _full_spec((LAYERS, HIDDEN, HP)), _full_spec((LAYERS, 1, HP)),
        _full_spec((LAYERS, 1, HP)), _full_spec((LAYERS, 1, HP)),
        _full_spec((LAYERS, HP, IP)), _full_spec((LAYERS, 1, IP)),
        _full_spec((LAYERS, IP, HP)), _full_spec((LAYERS, 1, HP)),
        _full_spec((LAYERS, 1, HP)), _full_spec((LAYERS, 1, HP)),
    ]
    out = pl.pallas_call(
        bert_tower_kernel,
        out_shape=jax.ShapeDtypeStruct((B, S, HP), jnp.float32),
        grid=(B,),
        in_specs=in_specs,
        out_specs=pl.BlockSpec((1, S, HP), lambda b: (b, 0, 0)),
        compiler_params=pltpu.CompilerParams(
            dimension_semantics=("parallel",)),   # v7x: one TC per batch elem
    )(x, neg,
      packed['emb_ln_g'], packed['emb_ln_b'],
      packed['wqkv'], packed['bqkv'], packed['wo'], packed['bo'],
      packed['ln1_g'], packed['ln1_b'],
      packed['w1'], packed['b1'], packed['w2'], packed['b2'],
      packed['ln2_g'], packed['ln2_b'])
    return out                                                  # (B, S, HP)


# ----------------------------- BertBiEncoder forward ---------------------------
def bert_biencoder_forward(mention_params, candidate_params,
                           input_ids, attention_mask, is_mention=True):
    """Mirrors BertBiEncoder.forward (shard_bsz=None path)."""
    params = mention_params if is_mention else candidate_params
    bertrep = bert_tower_forward(params, input_ids, attention_mask)
    return bertrep[:, 0, :HIDDEN]       # [CLS] representation, shape (B, HIDDEN)


# ----------------------------- main --------------------------------------------
if __name__ == "__main__":
    key = jax.random.PRNGKey(0)
    k_mention, k_candidate, k_ids = jax.random.split(key, 3)

    mention_params = pack_params(init_bert_params(k_mention))
    candidate_params = pack_params(init_bert_params(k_candidate))

    B, S = 2, 8
    input_ids = jax.random.randint(k_ids, (B, S), 0, VOCAB, dtype=jnp.int32)
    attention_mask = jnp.ones((B, S), jnp.int32).at[1, 6:].set(0)

    rep_mention = bert_biencoder_forward(
        mention_params, candidate_params, input_ids, attention_mask,
        is_mention=True)
    rep_candidate = bert_biencoder_forward(
        mention_params, candidate_params, input_ids, attention_mask,
        is_mention=False)

    jax.block_until_ready(rep_mention)
    jax.block_until_ready(rep_candidate)

    assert rep_mention.shape == (B, HIDDEN)
    assert rep_candidate.shape == (B, HIDDEN)
    assert bool(jnp.all(jnp.isfinite(rep_mention)))
    assert bool(jnp.all(jnp.isfinite(rep_candidate)))
    print("KERNEL_OK")
</pallas_src>

<mosaic_0001>
module attributes {stable_mosaic.version = 11 : i64} {
  func.func @bert_tower_kernel(%arg0: i32, %arg1: memref<1x8x128xf32, #tpu.memory_space<vmem>>, %arg2: memref<1x1x8xf32, #tpu.memory_space<vmem>>, %arg3: memref<1x128xf32, #tpu.memory_space<vmem>>, %arg4: memref<1x128xf32, #tpu.memory_space<vmem>>, %arg5: memref<2x128x96xbf16, #tpu.memory_space<vmem>>, %arg6: memref<2x1x96xf32, #tpu.memory_space<vmem>>, %arg7: memref<2x32x128xbf16, #tpu.memory_space<vmem>>, %arg8: memref<2x1x128xf32, #tpu.memory_space<vmem>>, %arg9: memref<2x1x128xf32, #tpu.memory_space<vmem>>, %arg10: memref<2x1x128xf32, #tpu.memory_space<vmem>>, %arg11: memref<2x128x128xbf16, #tpu.memory_space<vmem>>, %arg12: memref<2x1x128xf32, #tpu.memory_space<vmem>>, %arg13: memref<2x128x128xbf16, #tpu.memory_space<vmem>>, %arg14: memref<2x1x128xf32, #tpu.memory_space<vmem>>, %arg15: memref<2x1x128xf32, #tpu.memory_space<vmem>>, %arg16: memref<2x1x128xf32, #tpu.memory_space<vmem>>, %arg17: memref<1x8x128xf32, #tpu.memory_space<vmem>>) attributes {dimension_semantics = [#tpu.dimension_semantics<parallel>], iteration_bounds = array<i64: 2>, scalar_prefetch = 0 : i64, scratch_operands = 0 : i64, tpu.core_type = #tpu.core_type<tc>, window_params = [{transform_indices = @transform_0, window_bounds = array<i64: 1, 8, 128>}, {transform_indices = @transform_1, window_bounds = array<i64: 1, 1, 8>}, {pipeline_mode = #tpu.pipeline_mode<synchronous>, transform_indices = @transform_2, window_bounds = array<i64: 1, 128>}, {pipeline_mode = #tpu.pipeline_mode<synchronous>, transform_indices = @transform_3, window_bounds = array<i64: 1, 128>}, {pipeline_mode = #tpu.pipeline_mode<synchronous>, transform_indices = @transform_4, window_bounds = array<i64: 2, 128, 96>}, {pipeline_mode = #tpu.pipeline_mode<synchronous>, transform_indices = @transform_5, window_bounds = array<i64: 2, 1, 96>}, {pipeline_mode = #tpu.pipeline_mode<synchronous>, transform_indices = @transform_6, window_bounds = array<i64: 2, 32, 128>}, {pipeline_mode = #tpu.pipeline_mode<synchronous>, transform_indices = @transform_7, window_bounds = array<i64: 2, 1, 128>}, {pipeline_mode = #tpu.pipeline_mode<synchronous>, transform_indices = @transform_8, window_bounds = array<i64: 2, 1, 128>}, {pipeline_mode = #tpu.pipeline_mode<synchronous>, transform_indices = @transform_9, window_bounds = array<i64: 2, 1, 128>}, {pipeline_mode = #tpu.pipeline_mode<synchronous>, transform_indices = @transform_10, window_bounds = array<i64: 2, 128, 128>}, {pipeline_mode = #tpu.pipeline_mode<synchronous>, transform_indices = @transform_11, window_bounds = array<i64: 2, 1, 128>}, {pipeline_mode = #tpu.pipeline_mode<synchronous>, transform_indices = @transform_12, window_bounds = array<i64: 2, 128, 128>}, {pipeline_mode = #tpu.pipeline_mode<synchronous>, transform_indices = @transform_13, window_bounds = array<i64: 2, 1, 128>}, {pipeline_mode = #tpu.pipeline_mode<synchronous>, transform_indices = @transform_14, window_bounds = array<i64: 2, 1, 128>}, {pipeline_mode = #tpu.pipeline_mode<synchronous>, transform_indices = @transform_15, window_bounds = array<i64: 2, 1, 128>}, {transform_indices = @transform_16, window_bounds = array<i64: 1, 8, 128>}]} {
    %0 = tpu.iota {dimensions = array<i32: 1>} : vector<1x128xi32>
    %c32_i32 = arith.constant 32 : i32
    %1 = vector.broadcast %c32_i32 : i32 to vector<1x128xi32>
    %2 = arith.cmpi slt, %0, %1 : vector<1x128xi32>
    %3 = arith.extui %2 : vector<1x128xi1> to vector<1x128xi32>
    %4 = arith.sitofp %3 : vector<1x128xi32> to vector<1x128xf32>
    %c0 = arith.constant 0 : index
    %c0_0 = arith.constant 0 : index
    %c0_1 = arith.constant 0 : index
    %5 = vector.load %arg2[%c0, %c0_0, %c0_1] : memref<1x1x8xf32, #tpu.memory_space<vmem>>, vector<1x1x8xf32>
    %6 = vector.shape_cast %5 : vector<1x1x8xf32> to vector<1x8xf32>
    %c0_2 = arith.constant 0 : index
    %c0_3 = arith.constant 0 : index
    %c0_4 = arith.constant 0 : index
    %7 = vector.load %arg1[%c0_2, %c0_3, %c0_4] : memref<1x8x128xf32, #tpu.memory_space<vmem>>, vector<1x8x128xf32>
    %8 = vector.shape_cast %7 : vector<1x8x128xf32> to vector<8x128xf32>
    %c0_5 = arith.constant 0 : index
    %c0_6 = arith.constant 0 : index
    %9 = vector.load %arg3[%c0_5, %c0_6] : memref<1x128xf32, #tpu.memory_space<vmem>>, vector<1x128xf32>
    %c0_7 = arith.constant 0 : index
    %c0_8 = arith.constant 0 : index
    %10 = vector.load %arg4[%c0_7, %c0_8] : memref<1x128xf32, #tpu.memory_space<vmem>>, vector<1x128xf32>
    %cst = arith.constant dense<0.000000e+00> : vector<8xf32>
    %11 = vector.multi_reduction <add>, %8, %cst [1] : vector<8x128xf32> to vector<8xf32>
    %12 = vector.shape_cast %11 : vector<8xf32> to vector<8x1xf32>
    %cst_9 = arith.constant 3.125000e-02 : f32
    %13 = vector.broadcast %cst_9 : f32 to vector<8x1xf32>
    %14 = arith.mulf %12, %13 : vector<8x1xf32>
    %15 = vector.broadcast %14 : vector<8x1xf32> to vector<8x128xf32>
    %16 = arith.subf %8, %15 : vector<8x128xf32>
    %17 = vector.broadcast %4 : vector<1x128xf32> to vector<8x128xf32>
    %18 = arith.mulf %16, %17 : vector<8x128xf32>
    %19 = arith.mulf %18, %18 : vector<8x128xf32>
    %cst_10 = arith.constant dense<0.000000e+00> : vector<8xf32>
    %20 = vector.multi_reduction <add>, %19, %cst_10 [1] : vector<8x128xf32> to vector<8xf32>
    %21 = vector.shape_cast %20 : vector<8xf32> to vector<8x1xf32>
    %cst_11 = arith.constant 3.125000e-02 : f32
    %22 = vector.broadcast %cst_11 : f32 to vector<8x1xf32>
    %23 = arith.mulf %21, %22 : vector<8x1xf32>
    %cst_12 = arith.constant 9.99999996E-13 : f32
    %24 = vector.broadcast %cst_12 : f32 to vector<8x1xf32>
    %25 = arith.addf %23, %24 : vector<8x1xf32>
    %26 = math.rsqrt %25 : vector<8x1xf32>
    %27 = vector.broadcast %26 : vector<8x1xf32> to vector<8x128xf32>
    %28 = arith.mulf %18, %27 : vector<8x128xf32>
    %29 = vector.broadcast %9 : vector<1x128xf32> to vector<8x128xf32>
    %30 = arith.mulf %28, %29 : vector<8x128xf32>
    %31 = vector.broadcast %10 : vector<1x128xf32> to vector<8x128xf32>
    %32 = arith.addf %30, %31 : vector<8x128xf32>
    %33 = arith.truncf %32 : vector<8x128xf32> to vector<8x128xbf16>
    %c0_13 = arith.constant 0 : index
    %c0_14 = arith.constant 0 : index
    %c0_15 = arith.constant 0 : index
    %34 = vector.load %arg5[%c0_13, %c0_14, %c0_15] : memref<2x128x96xbf16, #tpu.memory_space<vmem>>, vector<1x128x96xbf16>
    %35 = vector.shape_cast %34 : vector<1x128x96xbf16> to vector<128x96xbf16>
    %cst_16 = arith.constant dense<0.000000e+00> : vector<8x96xf32>
    %36 = tpu.matmul %33, %35, %cst_16 {dimension_numbers = #tpu.dot_dimension_numbers<[1], [0], [0], [1], [0, 0, 1, 1], [], []>} : vector<8x128xbf16>, vector<128x96xbf16>, vector<8x96xf32> -> vector<8x96xf32>
    %c0_17 = arith.constant 0 : index
    %c0_18 = arith.constant 0 : index
    %c0_19 = arith.constant 0 : index
    %37 = vector.load %arg6[%c0_17, %c0_18, %c0_19] : memref<2x1x96xf32, #tpu.memory_space<vmem>>, vector<1x1x96xf32>
    %38 = vector.shape_cast %37 : vector<1x1x96xf32> to vector<1x96xf32>
    %39 = vector.broadcast %38 : vector<1x96xf32> to vector<8x96xf32>
    %40 = arith.addf %36, %39 : vector<8x96xf32>
    %41 = vector.extract_strided_slice %40 {offsets = [0, 0], sizes = [8, 8], strides = [1, 1]} : vector<8x96xf32> to vector<8x8xf32>
    %42 = vector.extract_strided_slice %40 {offsets = [0, 32], sizes = [8, 8], strides = [1, 1]} : vector<8x96xf32> to vector<8x8xf32>
    %43 = vector.extract_strided_slice %40 {offsets = [0, 64], sizes = [8, 8], strides = [1, 1]} : vector<8x96xf32> to vector<8x8xf32>
    %cst_20 = arith.constant dense<0.000000e+00> : vector<8x8xf32>
    %44 = tpu.matmul %41, %42, %cst_20 {dimension_numbers = #tpu.dot_dimension_numbers<[1], [1], [0], [0], [0, 0, 1, 0], [], []>} : vector<8x8xf32>, vector<8x8xf32>, vector<8x8xf32> -> vector<8x8xf32>
    %cst_21 = arith.constant 0.353553385 : f32
    %45 = vector.broadcast %cst_21 : f32 to vector<8x8xf32>
    %46 = arith.mulf %44, %45 : vector<8x8xf32>
    %47 = vector.broadcast %6 : vector<1x8xf32> to vector<8x8xf32>
    %48 = arith.addf %46, %47 : vector<8x8xf32>
    %cst_22 = arith.constant dense<0xFF800000> : vector<8xf32>
    %49 = vector.multi_reduction <maximumf>, %48, %cst_22 [1] : vector<8x8xf32> to vector<8xf32>
    %50 = vector.shape_cast %49 : vector<8xf32> to vector<8x1xf32>
    %51 = vector.broadcast %50 : vector<8x1xf32> to vector<8x8xf32>
    %52 = arith.subf %48, %51 : vector<8x8xf32>
    %53 = math.exp %52 : vector<8x8xf32>
    %cst_23 = arith.constant dense<0.000000e+00> : vector<8xf32>
    %54 = vector.multi_reduction <add>, %53, %cst_23 [1] : vector<8x8xf32> to vector<8xf32>
    %55 = vector.shape_cast %54 : vector<8xf32> to vector<8x1xf32>
    %56 = tpu.reciprocal %55 {approx = true} : vector<8x1xf32> -> vector<8x1xf32>
    %57 = vector.broadcast %56 : vector<8x1xf32> to vector<8x8xf32>
    %58 = arith.mulf %53, %57 : vector<8x8xf32>
    %cst_24 = arith.constant dense<0.000000e+00> : vector<8x8xf32>
    %59 = tpu.matmul %58, %43, %cst_24 {dimension_numbers = #tpu.dot_dimension_numbers<[1], [0], [0], [1], [0, 0, 1, 1], [], []>} : vector<8x8xf32>, vector<8x8xf32>, vector<8x8xf32> -> vector<8x8xf32>
    %60 = vector.extract_strided_slice %40 {offsets = [0, 8], sizes = [8, 8], strides = [1, 1]} : vector<8x96xf32> to vector<8x8xf32>
    %61 = vector.extract_strided_slice %40 {offsets = [0, 40], sizes = [8, 8], strides = [1, 1]} : vector<8x96xf32> to vector<8x8xf32>
    %62 = vector.extract_strided_slice %40 {offsets = [0, 72], sizes = [8, 8], strides = [1, 1]} : vector<8x96xf32> to vector<8x8xf32>
    %cst_25 = arith.constant dense<0.000000e+00> : vector<8x8xf32>
    %63 = tpu.matmul %60, %61, %cst_25 {dimension_numbers = #tpu.dot_dimension_numbers<[1], [1], [0], [0], [0, 0, 1, 0], [], []>} : vector<8x8xf32>, vector<8x8xf32>, vector<8x8xf32> -> vector<8x8xf32>
    %cst_26 = arith.constant 0.353553385 : f32
    %64 = vector.broadcast %cst_26 : f32 to vector<8x8xf32>
    %65 = arith.mulf %63, %64 : vector<8x8xf32>
    %66 = vector.broadcast %6 : vector<1x8xf32> to vector<8x8xf32>
    %67 = arith.addf %65, %66 : vector<8x8xf32>
    %cst_27 = arith.constant dense<0xFF800000> : vector<8xf32>
    %68 = vector.multi_reduction <maximumf>, %67, %cst_27 [1] : vector<8x8xf32> to vector<8xf32>
    %69 = vector.shape_cast %68 : vector<8xf32> to vector<8x1xf32>
    %70 = vector.broadcast %69 : vector<8x1xf32> to vector<8x8xf32>
    %71 = arith.subf %67, %70 : vector<8x8xf32>
    %72 = math.exp %71 : vector<8x8xf32>
    %cst_28 = arith.constant dense<0.000000e+00> : vector<8xf32>
    %73 = vector.multi_reduction <add>, %72, %cst_28 [1] : vector<8x8xf32> to vector<8xf32>
    %74 = vector.shape_cast %73 : vector<8xf32> to vector<8x1xf32>
    %75 = tpu.reciprocal %74 {approx = true} : vector<8x1xf32> -> vector<8x1xf32>
    %76 = vector.broadcast %75 : vector<8x1xf32> to vector<8x8xf32>
    %77 = arith.mulf %72, %76 : vector<8x8xf32>
    %cst_29 = arith.constant dense<0.000000e+00> : vector<8x8xf32>
    %78 = tpu.matmul %77, %62, %cst_29 {dimension_numbers = #tpu.dot_dimension_numbers<[1], [0], [0], [1], [0, 0, 1, 1], [], []>} : vector<8x8xf32>, vector<8x8xf32>, vector<8x8xf32> -> vector<8x8xf32>
    %79 = vector.extract_strided_slice %40 {offsets = [0, 16], sizes = [8, 8], strides = [1, 1]} : vector<8x96xf32> to vector<8x8xf32>
    %80 = vector.extract_strided_slice %40 {offsets = [0, 48], sizes = [8, 8], strides = [1, 1]} : vector<8x96xf32> to vector<8x8xf32>
    %81 = vector.extract_strided_slice %40 {offsets = [0, 80], sizes = [8, 8], strides = [1, 1]} : vector<8x96xf32> to vector<8x8xf32>
    %cst_30 = arith.constant dense<0.000000e+00> : vector<8x8xf32>
    %82 = tpu.matmul %79, %80, %cst_30 {dimension_numbers = #tpu.dot_dimension_numbers<[1], [1], [0], [0], [0, 0, 1, 0], [], []>} : vector<8x8xf32>, vector<8x8xf32>, vector<8x8xf32> -> vector<8x8xf32>
    %cst_31 = arith.constant 0.353553385 : f32
    %83 = vector.broadcast %cst_31 : f32 to vector<8x8xf32>
    %84 = arith.mulf %82, %83 : vector<8x8xf32>
    %85 = vector.broadcast %6 : vector<1x8xf32> to vector<8x8xf32>
    %86 = arith.addf %84, %85 : vector<8x8xf32>
    %cst_32 = arith.constant dense<0xFF800000> : vector<8xf32>
    %87 = vector.multi_reduction <maximumf>, %86, %cst_32 [1] : vector<8x8xf32> to vector<8xf32>
    %88 = vector.shape_cast %87 : vector<8xf32> to vector<8x1xf32>
    %89 = vector.broadcast %88 : vector<8x1xf32> to vector<8x8xf32>
    %90 = arith.subf %86, %89 : vector<8x8xf32>
    %91 = math.exp %90 : vector<8x8xf32>
    %cst_33 = arith.constant dense<0.000000e+00> : vector<8xf32>
    %92 = vector.multi_reduction <add>, %91, %cst_33 [1] : vector<8x8xf32> to vector<8xf32>
    %93 = vector.shape_cast %92 : vector<8xf32> to vector<8x1xf32>
    %94 = tpu.reciprocal %93 {approx = true} : vector<8x1xf32> -> vector<8x1xf32>
    %95 = vector.broadcast %94 : vector<8x1xf32> to vector<8x8xf32>
    %96 = arith.mulf %91, %95 : vector<8x8xf32>
    %cst_34 = arith.constant dense<0.000000e+00> : vector<8x8xf32>
    %97 = tpu.matmul %96, %81, %cst_34 {dimension_numbers = #tpu.dot_dimension_numbers<[1], [0], [0], [1], [0, 0, 1, 1], [], []>} : vector<8x8xf32>, vector<8x8xf32>, vector<8x8xf32> -> vector<8x8xf32>
    %98 = vector.extract_strided_slice %40 {offsets = [0, 24], sizes = [8, 8], strides = [1, 1]} : vector<8x96xf32> to vector<8x8xf32>
    %99 = vector.extract_strided_slice %40 {offsets = [0, 56], sizes = [8, 8], strides = [1, 1]} : vector<8x96xf32> to vector<8x8xf32>
    %100 = vector.extract_strided_slice %40 {offsets = [0, 88], sizes = [8, 8], strides = [1, 1]} : vector<8x96xf32> to vector<8x8xf32>
    %cst_35 = arith.constant dense<0.000000e+00> : vector<8x8xf32>
    %101 = tpu.matmul %98, %99, %cst_35 {dimension_numbers = #tpu.dot_dimension_numbers<[1], [1], [0], [0], [0, 0, 1, 0], [], []>} : vector<8x8xf32>, vector<8x8xf32>, vector<8x8xf32> -> vector<8x8xf32>
    %cst_36 = arith.constant 0.353553385 : f32
    %102 = vector.broadcast %cst_36 : f32 to vector<8x8xf32>
    %103 = arith.mulf %101, %102 : vector<8x8xf32>
    %104 = vector.broadcast %6 : vector<1x8xf32> to vector<8x8xf32>
    %105 = arith.addf %103, %104 : vector<8x8xf32>
    %cst_37 = arith.constant dense<0xFF800000> : vector<8xf32>
    %106 = vector.multi_reduction <maximumf>, %105, %cst_37 [1] : vector<8x8xf32> to vector<8xf32>
    %107 = vector.shape_cast %106 : vector<8xf32> to vector<8x1xf32>
    %108 = vector.broadcast %107 : vector<8x1xf32> to vector<8x8xf32>
    %109 = arith.subf %105, %108 : vector<8x8xf32>
    %110 = math.exp %109 : vector<8x8xf32>
    %cst_38 = arith.constant dense<0.000000e+00> : vector<8xf32>
    %111 = vector.multi_reduction <add>, %110, %cst_38 [1] : vector<8x8xf32> to vector<8xf32>
    %112 = vector.shape_cast %111 : vector<8xf32> to vector<8x1xf32>
    %113 = tpu.reciprocal %112 {approx = true} : vector<8x1xf32> -> vector<8x1xf32>
    %114 = vector.broadcast %113 : vector<8x1xf32> to vector<8x8xf32>
    %115 = arith.mulf %110, %114 : vector<8x8xf32>
    %cst_39 = arith.constant dense<0.000000e+00> : vector<8x8xf32>
    %116 = tpu.matmul %115, %100, %cst_39 {dimension_numbers = #tpu.dot_dimension_numbers<[1], [0], [0], [1], [0, 0, 1, 1], [], []>} : vector<8x8xf32>, vector<8x8xf32>, vector<8x8xf32> -> vector<8x8xf32>
    %117 = tpu.concatenate %59, %78, %97, %116 in 1 : vector<8x8xf32>, vector<8x8xf32>, vector<8x8xf32>, vector<8x8xf32> -> vector<8x32xf32>
    %118 = arith.truncf %117 : vector<8x32xf32> to vector<8x32xbf16>
    %c0_40 = arith.constant 0 : index
    %c0_41 = arith.constant 0 : index
    %c0_42 = arith.constant 0 : index
    %119 = vector.load %arg7[%c0_40, %c0_41, %c0_42] : memref<2x32x128xbf16, #tpu.memory_space<vmem>>, vector<1x32x128xbf16>
    %120 = vector.shape_cast %119 : vector<1x32x128xbf16> to vector<32x128xbf16>
    %cst_43 = arith.constant dense<0.000000e+00> : vector<8x128xf32>
    %121 = tpu.matmul %118, %120, %cst_43 {dimension_numbers = #tpu.dot_dimension_numbers<[1], [0], [0], [1], [0, 0, 1, 1], [], []>} : vector<8x32xbf16>, vector<32x128xbf16>, vector<8x128xf32> -> vector<8x128xf32>
    %c0_44 = arith.constant 0 : index
    %c0_45 = arith.constant 0 : index
    %c0_46 = arith.constant 0 : index
    %122 = vector.load %arg8[%c0_44, %c0_45, %c0_46] : memref<2x1x128xf32, #tpu.memory_space<vmem>>, vector<1x1x128xf32>
    %123 = vector.shape_cast %122 : vector<1x1x128xf32> to vector<1x128xf32>
    %124 = vector.broadcast %123 : vector<1x128xf32> to vector<8x128xf32>
    %125 = arith.addf %121, %124 : vector<8x128xf32>
    %126 = arith.addf %32, %125 : vector<8x128xf32>
    %c0_47 = arith.constant 0 : index
    %c0_48 = arith.constant 0 : index
    %c0_49 = arith.constant 0 : index
    %127 = vector.load %arg9[%c0_47, %c0_48, %c0_49] : memref<2x1x128xf32, #tpu.memory_space<vmem>>, vector<1x1x128xf32>
    %128 = vector.shape_cast %127 : vector<1x1x128xf32> to vector<1x128xf32>
    %c0_50 = arith.constant 0 : index
    %c0_51 = arith.constant 0 : index
    %c0_52 = arith.constant 0 : index
    %129 = vector.load %arg10[%c0_50, %c0_51, %c0_52] : memref<2x1x128xf32, #tpu.memory_space<vmem>>, vector<1x1x128xf32>
    %130 = vector.shape_cast %129 : vector<1x1x128xf32> to vector<1x128xf32>
    %cst_53 = arith.constant dense<0.000000e+00> : vector<8xf32>
    %131 = vector.multi_reduction <add>, %126, %cst_53 [1] : vector<8x128xf32> to vector<8xf32>
    %132 = vector.shape_cast %131 : vector<8xf32> to vector<8x1xf32>
    %cst_54 = arith.constant 3.125000e-02 : f32
    %133 = vector.broadcast %cst_54 : f32 to vector<8x1xf32>
    %134 = arith.mulf %132, %133 : vector<8x1xf32>
    %135 = vector.broadcast %134 : vector<8x1xf32> to vector<8x128xf32>
    %136 = arith.subf %126, %135 : vector<8x128xf32>
    %137 = vector.broadcast %4 : vector<1x128xf32> to vector<8x128xf32>
    %138 = arith.mulf %136, %137 : vector<8x128xf32>
    %139 = arith.mulf %138, %138 : vector<8x128xf32>
    %cst_55 = arith.constant dense<0.000000e+00> : vector<8xf32>
    %140 = vector.multi_reduction <add>, %139, %cst_55 [1] : vector<8x128xf32> to vector<8xf32>
    %141 = vector.shape_cast %140 : vector<8xf32> to vector<8x1xf32>
    %cst_56 = arith.constant 3.125000e-02 : f32
    %142 = vector.broadcast %cst_56 : f32 to vector<8x1xf32>
    %143 = arith.mulf %141, %142 : vector<8x1xf32>
    %cst_57 = arith.constant 9.99999996E-13 : f32
    %144 = vector.broadcast %cst_57 : f32 to vector<8x1xf32>
    %145 = arith.addf %143, %144 : vector<8x1xf32>
    %146 = math.rsqrt %145 : vector<8x1xf32>
    %147 = vector.broadcast %146 : vector<8x1xf32> to vector<8x128xf32>
    %148 = arith.mulf %138, %147 : vector<8x128xf32>
    %149 = vector.broadcast %128 : vector<1x128xf32> to vector<8x128xf32>
    %150 = arith.mulf %148, %149 : vector<8x128xf32>
    %151 = vector.broadcast %130 : vector<1x128xf32> to vector<8x128xf32>
    %152 = arith.addf %150, %151 : vector<8x128xf32>
    %153 = arith.truncf %152 : vector<8x128xf32> to vector<8x128xbf16>
    %c0_58 = arith.constant 0 : index
    %c0_59 = arith.constant 0 : index
    %c0_60 = arith.constant 0 : index
    %154 = vector.load %arg11[%c0_58, %c0_59, %c0_60] : memref<2x128x128xbf16, #tpu.memory_space<vmem>>, vector<1x128x128xbf16>
    %155 = vector.shape_cast %154 : vector<1x128x128xbf16> to vector<128x128xbf16>
    %cst_61 = arith.constant dense<0.000000e+00> : vector<8x128xf32>
    %156 = tpu.matmul %153, %155, %cst_61 {dimension_numbers = #tpu.dot_dimension_numbers<[1], [0], [0], [1], [0, 0, 1, 1], [], []>} : vector<8x128xbf16>, vector<128x128xbf16>, vector<8x128xf32> -> vector<8x128xf32>
    %c0_62 = arith.constant 0 : index
    %c0_63 = arith.constant 0 : index
    %c0_64 = arith.constant 0 : index
    %157 = vector.load %arg12[%c0_62, %c0_63, %c0_64] : memref<2x1x128xf32, #tpu.memory_space<vmem>>, vector<1x1x128xf32>
    %158 = vector.shape_cast %157 : vector<1x1x128xf32> to vector<1x128xf32>
    %159 = vector.broadcast %158 : vector<1x128xf32> to vector<8x128xf32>
    %160 = arith.addf %156, %159 : vector<8x128xf32>
    %cst_65 = arith.constant 5.000000e-01 : f32
    %161 = vector.broadcast %cst_65 : f32 to vector<8x128xf32>
    %162 = arith.mulf %161, %160 : vector<8x128xf32>
    %cst_66 = arith.constant 4.471500e-02 : f32
    %163 = vector.broadcast %cst_66 : f32 to vector<8x128xf32>
    %164 = arith.mulf %163, %160 : vector<8x128xf32>
    %165 = arith.mulf %164, %160 : vector<8x128xf32>
    %166 = arith.mulf %165, %160 : vector<8x128xf32>
    %167 = arith.addf %160, %166 : vector<8x128xf32>
    %cst_67 = arith.constant 0.797884583 : f32
    %168 = vector.broadcast %cst_67 : f32 to vector<8x128xf32>
    %169 = arith.mulf %168, %167 : vector<8x128xf32>
    %170 = math.tanh %169 : vector<8x128xf32>
    %cst_68 = arith.constant 1.000000e+00 : f32
    %171 = vector.broadcast %cst_68 : f32 to vector<8x128xf32>
    %172 = arith.addf %171, %170 : vector<8x128xf32>
    %173 = arith.mulf %162, %172 : vector<8x128xf32>
    %174 = arith.truncf %173 : vector<8x128xf32> to vector<8x128xbf16>
    %c0_69 = arith.constant 0 : index
    %c0_70 = arith.constant 0 : index
    %c0_71 = arith.constant 0 : index
    %175 = vector.load %arg13[%c0_69, %c0_70, %c0_71] : memref<2x128x128xbf16, #tpu.memory_space<vmem>>, vector<1x128x128xbf16>
    %176 = vector.shape_cast %175 : vector<1x128x128xbf16> to vector<128x128xbf16>
    %cst_72 = arith.constant dense<0.000000e+00> : vector<8x128xf32>
    %177 = tpu.matmul %174, %176, %cst_72 {dimension_numbers = #tpu.dot_dimension_numbers<[1], [0], [0], [1], [0, 0, 1, 1], [], []>} : vector<8x128xbf16>, vector<128x128xbf16>, vector<8x128xf32> -> vector<8x128xf32>
    %c0_73 = arith.constant 0 : index
    %c0_74 = arith.constant 0 : index
    %c0_75 = arith.constant 0 : index
    %178 = vector.load %arg14[%c0_73, %c0_74, %c0_75] : memref<2x1x128xf32, #tpu.memory_space<vmem>>, vector<1x1x128xf32>
    %179 = vector.shape_cast %178 : vector<1x1x128xf32> to vector<1x128xf32>
    %180 = vector.broadcast %179 : vector<1x128xf32> to vector<8x128xf32>
    %181 = arith.addf %177, %180 : vector<8x128xf32>
    %182 = arith.addf %152, %181 : vector<8x128xf32>
    %c0_76 = arith.constant 0 : index
    %c0_77 = arith.constant 0 : index
    %c0_78 = arith.constant 0 : index
    %183 = vector.load %arg15[%c0_76, %c0_77, %c0_78] : memref<2x1x128xf32, #tpu.memory_space<vmem>>, vector<1x1x128xf32>
    %184 = vector.shape_cast %183 : vector<1x1x128xf32> to vector<1x128xf32>
    %c0_79 = arith.constant 0 : index
    %c0_80 = arith.constant 0 : index
    %c0_81 = arith.constant 0 : index
    %185 = vector.load %arg16[%c0_79, %c0_80, %c0_81] : memref<2x1x128xf32, #tpu.memory_space<vmem>>, vector<1x1x128xf32>
    %186 = vector.shape_cast %185 : vector<1x1x128xf32> to vector<1x128xf32>
    %cst_82 = arith.constant dense<0.000000e+00> : vector<8xf32>
    %187 = vector.multi_reduction <add>, %182, %cst_82 [1] : vector<8x128xf32> to vector<8xf32>
    %188 = vector.shape_cast %187 : vector<8xf32> to vector<8x1xf32>
    %cst_83 = arith.constant 3.125000e-02 : f32
    %189 = vector.broadcast %cst_83 : f32 to vector<8x1xf32>
    %190 = arith.mulf %188, %189 : vector<8x1xf32>
    %191 = vector.broadcast %190 : vector<8x1xf32> to vector<8x128xf32>
    %192 = arith.subf %182, %191 : vector<8x128xf32>
    %193 = vector.broadcast %4 : vector<1x128xf32> to vector<8x128xf32>
    %194 = arith.mulf %192, %193 : vector<8x128xf32>
    %195 = arith.mulf %194, %194 : vector<8x128xf32>
    %cst_84 = arith.constant dense<0.000000e+00> : vector<8xf32>
    %196 = vector.multi_reduction <add>, %195, %cst_84 [1] : vector<8x128xf32> to vector<8xf32>
    %197 = vector.shape_cast %196 : vector<8xf32> to vector<8x1xf32>
    %cst_85 = arith.constant 3.125000e-02 : f32
    %198 = vector.broadcast %cst_85 : f32 to vector<8x1xf32>
    %199 = arith.mulf %197, %198 : vector<8x1xf32>
    %cst_86 = arith.constant 9.99999996E-13 : f32
    %200 = vector.broadcast %cst_86 : f32 to vector<8x1xf32>
    %201 = arith.addf %199, %200 : vector<8x1xf32>
    %202 = math.rsqrt %201 : vector<8x1xf32>
    %203 = vector.broadcast %202 : vector<8x1xf32> to vector<8x128xf32>
    %204 = arith.mulf %194, %203 : vector<8x128xf32>
    %205 = vector.broadcast %184 : vector<1x128xf32> to vector<8x128xf32>
    %206 = arith.mulf %204, %205 : vector<8x128xf32>
    %207 = vector.broadcast %186 : vector<1x128xf32> to vector<8x128xf32>
    %208 = arith.addf %206, %207 : vector<8x128xf32>
    %209 = arith.truncf %208 : vector<8x128xf32> to vector<8x128xbf16>
    %c1 = arith.constant 1 : index
    %c0_87 = arith.constant 0 : index
    %c0_88 = arith.constant 0 : index
    %210 = vector.load %arg5[%c1, %c0_87, %c0_88] : memref<2x128x96xbf16, #tpu.memory_space<vmem>>, vector<1x128x96xbf16>
    %211 = vector.shape_cast %210 : vector<1x128x96xbf16> to vector<128x96xbf16>
    %cst_89 = arith.constant dense<0.000000e+00> : vector<8x96xf32>
    %212 = tpu.matmul %209, %211, %cst_89 {dimension_numbers = #tpu.dot_dimension_numbers<[1], [0], [0], [1], [0, 0, 1, 1], [], []>} : vector<8x128xbf16>, vector<128x96xbf16>, vector<8x96xf32> -> vector<8x96xf32>
    %c1_90 = arith.constant 1 : index
    %c0_91 = arith.constant 0 : index
    %c0_92 = arith.constant 0 : index
    %213 = vector.load %arg6[%c1_90, %c0_91, %c0_92] : memref<2x1x96xf32, #tpu.memory_space<vmem>>, vector<1x1x96xf32>
    %214 = vector.shape_cast %213 : vector<1x1x96xf32> to vector<1x96xf32>
    %215 = vector.broadcast %214 : vector<1x96xf32> to vector<8x96xf32>
    %216 = arith.addf %212, %215 : vector<8x96xf32>
    %217 = vector.extract_strided_slice %216 {offsets = [0, 0], sizes = [8, 8], strides = [1, 1]} : vector<8x96xf32> to vector<8x8xf32>
    %218 = vector.extract_strided_slice %216 {offsets = [0, 32], sizes = [8, 8], strides = [1, 1]} : vector<8x96xf32> to vector<8x8xf32>
    %219 = vector.extract_strided_slice %216 {offsets = [0, 64], sizes = [8, 8], strides = [1, 1]} : vector<8x96xf32> to vector<8x8xf32>
    %cst_93 = arith.constant dense<0.000000e+00> : vector<8x8xf32>
    %220 = tpu.matmul %217, %218, %cst_93 {dimension_numbers = #tpu.dot_dimension_numbers<[1], [1], [0], [0], [0, 0, 1, 0], [], []>} : vector<8x8xf32>, vector<8x8xf32>, vector<8x8xf32> -> vector<8x8xf32>
    %cst_94 = arith.constant 0.353553385 : f32
    %221 = vector.broadcast %cst_94 : f32 to vector<8x8xf32>
    %222 = arith.mulf %220, %221 : vector<8x8xf32>
    %223 = vector.broadcast %6 : vector<1x8xf32> to vector<8x8xf32>
    %224 = arith.addf %222, %223 : vector<8x8xf32>
    %cst_95 = arith.constant dense<0xFF800000> : vector<8xf32>
    %225 = vector.multi_reduction <maximumf>, %224, %cst_95 [1] : vector<8x8xf32> to vector<8xf32>
    %226 = vector.shape_cast %225 : vector<8xf32> to vector<8x1xf32>
    %227 = vector.broadcast %226 : vector<8x1xf32> to vector<8x8xf32>
    %228 = arith.subf %224, %227 : vector<8x8xf32>
    %229 = math.exp %228 : vector<8x8xf32>
    %cst_96 = arith.constant dense<0.000000e+00> : vector<8xf32>
    %230 = vector.multi_reduction <add>, %229, %cst_96 [1] : vector<8x8xf32> to vector<8xf32>
    %231 = vector.shape_cast %230 : vector<8xf32> to vector<8x1xf32>
    %232 = tpu.reciprocal %231 {approx = true} : vector<8x1xf32> -> vector<8x1xf32>
    %233 = vector.broadcast %232 : vector<8x1xf32> to vector<8x8xf32>
    %234 = arith.mulf %229, %233 : vector<8x8xf32>
    %cst_97 = arith.constant dense<0.000000e+00> : vector<8x8xf32>
    %235 = tpu.matmul %234, %219, %cst_97 {dimension_numbers = #tpu.dot_dimension_numbers<[1], [0], [0], [1], [0, 0, 1, 1], [], []>} : vector<8x8xf32>, vector<8x8xf32>, vector<8x8xf32> -> vector<8x8xf32>
    %236 = vector.extract_strided_slice %216 {offsets = [0, 8], sizes = [8, 8], strides = [1, 1]} : vector<8x96xf32> to vector<8x8xf32>
    %237 = vector.extract_strided_slice %216 {offsets = [0, 40], sizes = [8, 8], strides = [1, 1]} : vector<8x96xf32> to vector<8x8xf32>
    %238 = vector.extract_strided_slice %216 {offsets = [0, 72], sizes = [8, 8], strides = [1, 1]} : vector<8x96xf32> to vector<8x8xf32>
    %cst_98 = arith.constant dense<0.000000e+00> : vector<8x8xf32>
    %239 = tpu.matmul %236, %237, %cst_98 {dimension_numbers = #tpu.dot_dimension_numbers<[1], [1], [0], [0], [0, 0, 1, 0], [], []>} : vector<8x8xf32>, vector<8x8xf32>, vector<8x8xf32> -> vector<8x8xf32>
    %cst_99 = arith.constant 0.353553385 : f32
    %240 = vector.broadcast %cst_99 : f32 to vector<8x8xf32>
    %241 = arith.mulf %239, %240 : vector<8x8xf32>
    %242 = vector.broadcast %6 : vector<1x8xf32> to vector<8x8xf32>
    %243 = arith.addf %241, %242 : vector<8x8xf32>
    %cst_100 = arith.constant dense<0xFF800000> : vector<8xf32>
    %244 = vector.multi_reduction <maximumf>, %243, %cst_100 [1] : vector<8x8xf32> to vector<8xf32>
    %245 = vector.shape_cast %244 : vector<8xf32> to vector<8x1xf32>
    %246 = vector.broadcast %245 : vector<8x1xf32> to vector<8x8xf32>
    %247 = arith.subf %243, %246 : vector<8x8xf32>
    %248 = math.exp %247 : vector<8x8xf32>
    %cst_101 = arith.constant dense<0.000000e+00> : vector<8xf32>
    %249 = vector.multi_reduction <add>, %248, %cst_101 [1] : vector<8x8xf32> to vector<8xf32>
    %250 = vector.shape_cast %249 : vector<8xf32> to vector<8x1xf32>
    %251 = tpu.reciprocal %250 {approx = true} : vector<8x1xf32> -> vector<8x1xf32>
    %252 = vector.broadcast %251 : vector<8x1xf32> to vector<8x8xf32>
    %253 = arith.mulf %248, %252 : vector<8x8xf32>
    %cst_102 = arith.constant dense<0.000000e+00> : vector<8x8xf32>
    %254 = tpu.matmul %253, %238, %cst_102 {dimension_numbers = #tpu.dot_dimension_numbers<[1], [0], [0], [1], [0, 0, 1, 1], [], []>} : vector<8x8xf32>, vector<8x8xf32>, vector<8x8xf32> -> vector<8x8xf32>
    %255 = vector.extract_strided_slice %216 {offsets = [0, 16], sizes = [8, 8], strides = [1, 1]} : vector<8x96xf32> to vector<8x8xf32>
    %256 = vector.extract_strided_slice %216 {offsets = [0, 48], sizes = [8, 8], strides = [1, 1]} : vector<8x96xf32> to vector<8x8xf32>
    %257 = vector.extract_strided_slice %216 {offsets = [0, 80], sizes = [8, 8], strides = [1, 1]} : vector<8x96xf32> to vector<8x8xf32>
    %cst_103 = arith.constant dense<0.000000e+00> : vector<8x8xf32>
    %258 = tpu.matmul %255, %256, %cst_103 {dimension_numbers = #tpu.dot_dimension_numbers<[1], [1], [0], [0], [0, 0, 1, 0], [], []>} : vector<8x8xf32>, vector<8x8xf32>, vector<8x8xf32> -> vector<8x8xf32>
    %cst_104 = arith.constant 0.353553385 : f32
    %259 = vector.broadcast %cst_104 : f32 to vector<8x8xf32>
    %260 = arith.mulf %258, %259 : vector<8x8xf32>
    %261 = vector.broadcast %6 : vector<1x8xf32> to vector<8x8xf32>
    %262 = arith.addf %260, %261 : vector<8x8xf32>
    %cst_105 = arith.constant dense<0xFF800000> : vector<8xf32>
    %263 = vector.multi_reduction <maximumf>, %262, %cst_105 [1] : vector<8x8xf32> to vector<8xf32>
    %264 = vector.shape_cast %263 : vector<8xf32> to vector<8x1xf32>
    %265 = vector.broadcast %264 : vector<8x1xf32> to vector<8x8xf32>
    %266 = arith.subf %262, %265 : vector<8x8xf32>
    %267 = math.exp %266 : vector<8x8xf32>
    %cst_106 = arith.constant dense<0.000000e+00> : vector<8xf32>
    %268 = vector.multi_reduction <add>, %267, %cst_106 [1] : vector<8x8xf32> to vector<8xf32>
    %269 = vector.shape_cast %268 : vector<8xf32> to vector<8x1xf32>
    %270 = tpu.reciprocal %269 {approx = true} : vector<8x1xf32> -> vector<8x1xf32>
    %271 = vector.broadcast %270 : vector<8x1xf32> to vector<8x8xf32>
    %272 = arith.mulf %267, %271 : vector<8x8xf32>
    %cst_107 = arith.constant dense<0.000000e+00> : vector<8x8xf32>
    %273 = tpu.matmul %272, %257, %cst_107 {dimension_numbers = #tpu.dot_dimension_numbers<[1], [0], [0], [1], [0, 0, 1, 1], [], []>} : vector<8x8xf32>, vector<8x8xf32>, vector<8x8xf32> -> vector<8x8xf32>
    %274 = vector.extract_strided_slice %216 {offsets = [0, 24], sizes = [8, 8], strides = [1, 1]} : vector<8x96xf32> to vector<8x8xf32>
    %275 = vector.extract_strided_slice %216 {offsets = [0, 56], sizes = [8, 8], strides = [1, 1]} : vector<8x96xf32> to vector<8x8xf32>
    %276 = vector.extract_strided_slice %216 {offsets = [0, 88], sizes = [8, 8], strides = [1, 1]} : vector<8x96xf32> to vector<8x8xf32>
    %cst_108 = arith.constant dense<0.000000e+00> : vector<8x8xf32>
    %277 = tpu.matmul %274, %275, %cst_108 {dimension_numbers = #tpu.dot_dimension_numbers<[1], [1], [0], [0], [0, 0, 1, 0], [], []>} : vector<8x8xf32>, vector<8x8xf32>, vector<8x8xf32> -> vector<8x8xf32>
    %cst_109 = arith.constant 0.353553385 : f32
    %278 = vector.broadcast %cst_109 : f32 to vector<8x8xf32>
    %279 = arith.mulf %277, %278 : vector<8x8xf32>
    %280 = vector.broadcast %6 : vector<1x8xf32> to vector<8x8xf32>
    %281 = arith.addf %279, %280 : vector<8x8xf32>
    %cst_110 = arith.constant dense<0xFF800000> : vector<8xf32>
    %282 = vector.multi_reduction <maximumf>, %281, %cst_110 [1] : vector<8x8xf32> to vector<8xf32>
    %283 = vector.shape_cast %282 : vector<8xf32> to vector<8x1xf32>
    %284 = vector.broadcast %283 : vector<8x1xf32> to vector<8x8xf32>
    %285 = arith.subf %281, %284 : vector<8x8xf32>
    %286 = math.exp %285 : vector<8x8xf32>
    %cst_111 = arith.constant dense<0.000000e+00> : vector<8xf32>
    %287 = vector.multi_reduction <add>, %286, %cst_111 [1] : vector<8x8xf32> to vector<8xf32>
    %288 = vector.shape_cast %287 : vector<8xf32> to vector<8x1xf32>
    %289 = tpu.reciprocal %288 {approx = true} : vector<8x1xf32> -> vector<8x1xf32>
    %290 = vector.broadcast %289 : vector<8x1xf32> to vector<8x8xf32>
    %291 = arith.mulf %286, %290 : vector<8x8xf32>
    %cst_112 = arith.constant dense<0.000000e+00> : vector<8x8xf32>
    %292 = tpu.matmul %291, %276, %cst_112 {dimension_numbers = #tpu.dot_dimension_numbers<[1], [0], [0], [1], [0, 0, 1, 1], [], []>} : vector<8x8xf32>, vector<8x8xf32>, vector<8x8xf32> -> vector<8x8xf32>
    %293 = tpu.concatenate %235, %254, %273, %292 in 1 : vector<8x8xf32>, vector<8x8xf32>, vector<8x8xf32>, vector<8x8xf32> -> vector<8x32xf32>
    %294 = arith.truncf %293 : vector<8x32xf32> to vector<8x32xbf16>
    %c1_113 = arith.constant 1 : index
    %c0_114 = arith.constant 0 : index
    %c0_115 = arith.constant 0 : index
    %295 = vector.load %arg7[%c1_113, %c0_114, %c0_115] : memref<2x32x128xbf16, #tpu.memory_space<vmem>>, vector<1x32x128xbf16>
    %296 = vector.shape_cast %295 : vector<1x32x128xbf16> to vector<32x128xbf16>
    %cst_116 = arith.constant dense<0.000000e+00> : vector<8x128xf32>
    %297 = tpu.matmul %294, %296, %cst_116 {dimension_numbers = #tpu.dot_dimension_numbers<[1], [0], [0], [1], [0, 0, 1, 1], [], []>} : vector<8x32xbf16>, vector<32x128xbf16>, vector<8x128xf32> -> vector<8x128xf32>
    %c1_117 = arith.constant 1 : index
    %c0_118 = arith.constant 0 : index
    %c0_119 = arith.constant 0 : index
    %298 = vector.load %arg8[%c1_117, %c0_118, %c0_119] : memref<2x1x128xf32, #tpu.memory_space<vmem>>, vector<1x1x128xf32>
    %299 = vector.shape_cast %298 : vector<1x1x128xf32> to vector<1x128xf32>
    %300 = vector.broadcast %299 : vector<1x128xf32> to vector<8x128xf32>
    %301 = arith.addf %297, %300 : vector<8x128xf32>
    %302 = arith.addf %208, %301 : vector<8x128xf32>
    %c1_120 = arith.constant 1 : index
    %c0_121 = arith.constant 0 : index
    %c0_122 = arith.constant 0 : index
    %303 = vector.load %arg9[%c1_120, %c0_121, %c0_122] : memref<2x1x128xf32, #tpu.memory_space<vmem>>, vector<1x1x128xf32>
    %304 = vector.shape_cast %303 : vector<1x1x128xf32> to vector<1x128xf32>
    %c1_123 = arith.constant 1 : index
    %c0_124 = arith.constant 0 : index
    %c0_125 = arith.constant 0 : index
    %305 = vector.load %arg10[%c1_123, %c0_124, %c0_125] : memref<2x1x128xf32, #tpu.memory_space<vmem>>, vector<1x1x128xf32>
    %306 = vector.shape_cast %305 : vector<1x1x128xf32> to vector<1x128xf32>
    %cst_126 = arith.constant dense<0.000000e+00> : vector<8xf32>
    %307 = vector.multi_reduction <add>, %302, %cst_126 [1] : vector<8x128xf32> to vector<8xf32>
    %308 = vector.shape_cast %307 : vector<8xf32> to vector<8x1xf32>
    %cst_127 = arith.constant 3.125000e-02 : f32
    %309 = vector.broadcast %cst_127 : f32 to vector<8x1xf32>
    %310 = arith.mulf %308, %309 : vector<8x1xf32>
    %311 = vector.broadcast %310 : vector<8x1xf32> to vector<8x128xf32>
    %312 = arith.subf %302, %311 : vector<8x128xf32>
    %313 = vector.broadcast %4 : vector<1x128xf32> to vector<8x128xf32>
    %314 = arith.mulf %312, %313 : vector<8x128xf32>
    %315 = arith.mulf %314, %314 : vector<8x128xf32>
    %cst_128 = arith.constant dense<0.000000e+00> : vector<8xf32>
    %316 = vector.multi_reduction <add>, %315, %cst_128 [1] : vector<8x128xf32> to vector<8xf32>
    %317 = vector.shape_cast %316 : vector<8xf32> to vector<8x1xf32>
    %cst_129 = arith.constant 3.125000e-02 : f32
    %318 = vector.broadcast %cst_129 : f32 to vector<8x1xf32>
    %319 = arith.mulf %317, %318 : vector<8x1xf32>
    %cst_130 = arith.constant 9.99999996E-13 : f32
    %320 = vector.broadcast %cst_130 : f32 to vector<8x1xf32>
    %321 = arith.addf %319, %320 : vector<8x1xf32>
    %322 = math.rsqrt %321 : vector<8x1xf32>
    %323 = vector.broadcast %322 : vector<8x1xf32> to vector<8x128xf32>
    %324 = arith.mulf %314, %323 : vector<8x128xf32>
    %325 = vector.broadcast %304 : vector<1x128xf32> to vector<8x128xf32>
    %326 = arith.mulf %324, %325 : vector<8x128xf32>
    %327 = vector.broadcast %306 : vector<1x128xf32> to vector<8x128xf32>
    %328 = arith.addf %326, %327 : vector<8x128xf32>
    %329 = arith.truncf %328 : vector<8x128xf32> to vector<8x128xbf16>
    %c1_131 = arith.constant 1 : index
    %c0_132 = arith.constant 0 : index
    %c0_133 = arith.constant 0 : index
    %330 = vector.load %arg11[%c1_131, %c0_132, %c0_133] : memref<2x128x128xbf16, #tpu.memory_space<vmem>>, vector<1x128x128xbf16>
    %331 = vector.shape_cast %330 : vector<1x128x128xbf16> to vector<128x128xbf16>
    %cst_134 = arith.constant dense<0.000000e+00> : vector<8x128xf32>
    %332 = tpu.matmul %329, %331, %cst_134 {dimension_numbers = #tpu.dot_dimension_numbers<[1], [0], [0], [1], [0, 0, 1, 1], [], []>} : vector<8x128xbf16>, vector<128x128xbf16>, vector<8x128xf32> -> vector<8x128xf32>
    %c1_135 = arith.constant 1 : index
    %c0_136 = arith.constant 0 : index
    %c0_137 = arith.constant 0 : index
    %333 = vector.load %arg12[%c1_135, %c0_136, %c0_137] : memref<2x1x128xf32, #tpu.memory_space<vmem>>, vector<1x1x128xf32>
    %334 = vector.shape_cast %333 : vector<1x1x128xf32> to vector<1x128xf32>
    %335 = vector.broadcast %334 : vector<1x128xf32> to vector<8x128xf32>
    %336 = arith.addf %332, %335 : vector<8x128xf32>
    %cst_138 = arith.constant 5.000000e-01 : f32
    %337 = vector.broadcast %cst_138 : f32 to vector<8x128xf32>
    %338 = arith.mulf %337, %336 : vector<8x128xf32>
    %cst_139 = arith.constant 4.471500e-02 : f32
    %339 = vector.broadcast %cst_139 : f32 to vector<8x128xf32>
    %340 = arith.mulf %339, %336 : vector<8x128xf32>
    %341 = arith.mulf %340, %336 : vector<8x128xf32>
    %342 = arith.mulf %341, %336 : vector<8x128xf32>
    %343 = arith.addf %336, %342 : vector<8x128xf32>
    %cst_140 = arith.constant 0.797884583 : f32
    %344 = vector.broadcast %cst_140 : f32 to vector<8x128xf32>
    %345 = arith.mulf %344, %343 : vector<8x128xf32>
    %346 = math.tanh %345 : vector<8x128xf32>
    %cst_141 = arith.constant 1.000000e+00 : f32
    %347 = vector.broadcast %cst_141 : f32 to vector<8x128xf32>
    %348 = arith.addf %347, %346 : vector<8x128xf32>
    %349 = arith.mulf %338, %348 : vector<8x128xf32>
    %350 = arith.truncf %349 : vector<8x128xf32> to vector<8x128xbf16>
    %c1_142 = arith.constant 1 : index
    %c0_143 = arith.constant 0 : index
    %c0_144 = arith.constant 0 : index
    %351 = vector.load %arg13[%c1_142, %c0_143, %c0_144] : memref<2x128x128xbf16, #tpu.memory_space<vmem>>, vector<1x128x128xbf16>
    %352 = vector.shape_cast %351 : vector<1x128x128xbf16> to vector<128x128xbf16>
    %cst_145 = arith.constant dense<0.000000e+00> : vector<8x128xf32>
    %353 = tpu.matmul %350, %352, %cst_145 {dimension_numbers = #tpu.dot_dimension_numbers<[1], [0], [0], [1], [0, 0, 1, 1], [], []>} : vector<8x128xbf16>, vector<128x128xbf16>, vector<8x128xf32> -> vector<8x128xf32>
    %c1_146 = arith.constant 1 : index
    %c0_147 = arith.constant 0 : index
    %c0_148 = arith.constant 0 : index
    %354 = vector.load %arg14[%c1_146, %c0_147, %c0_148] : memref<2x1x128xf32, #tpu.memory_space<vmem>>, vector<1x1x128xf32>
    %355 = vector.shape_cast %354 : vector<1x1x128xf32> to vector<1x128xf32>
    %356 = vector.broadcast %355 : vector<1x128xf32> to vector<8x128xf32>
    %357 = arith.addf %353, %356 : vector<8x128xf32>
    %358 = arith.addf %328, %357 : vector<8x128xf32>
    %c1_149 = arith.constant 1 : index
    %c0_150 = arith.constant 0 : index
    %c0_151 = arith.constant 0 : index
    %359 = vector.load %arg15[%c1_149, %c0_150, %c0_151] : memref<2x1x128xf32, #tpu.memory_space<vmem>>, vector<1x1x128xf32>
    %360 = vector.shape_cast %359 : vector<1x1x128xf32> to vector<1x128xf32>
    %c1_152 = arith.constant 1 : index
    %c0_153 = arith.constant 0 : index
    %c0_154 = arith.constant 0 : index
    %361 = vector.load %arg16[%c1_152, %c0_153, %c0_154] : memref<2x1x128xf32, #tpu.memory_space<vmem>>, vector<1x1x128xf32>
    %362 = vector.shape_cast %361 : vector<1x1x128xf32> to vector<1x128xf32>
    %cst_155 = arith.constant dense<0.000000e+00> : vector<8xf32>
    %363 = vector.multi_reduction <add>, %358, %cst_155 [1] : vector<8x128xf32> to vector<8xf32>
    %364 = vector.shape_cast %363 : vector<8xf32> to vector<8x1xf32>
    %cst_156 = arith.constant 3.125000e-02 : f32
    %365 = vector.broadcast %cst_156 : f32 to vector<8x1xf32>
    %366 = arith.mulf %364, %365 : vector<8x1xf32>
    %367 = vector.broadcast %366 : vector<8x1xf32> to vector<8x128xf32>
    %368 = arith.subf %358, %367 : vector<8x128xf32>
    %369 = vector.broadcast %4 : vector<1x128xf32> to vector<8x128xf32>
    %370 = arith.mulf %368, %369 : vector<8x128xf32>
    %371 = arith.mulf %370, %370 : vector<8x128xf32>
    %cst_157 = arith.constant dense<0.000000e+00> : vector<8xf32>
    %372 = vector.multi_reduction <add>, %371, %cst_157 [1] : vector<8x128xf32> to vector<8xf32>
    %373 = vector.shape_cast %372 : vector<8xf32> to vector<8x1xf32>
    %cst_158 = arith.constant 3.125000e-02 : f32
    %374 = vector.broadcast %cst_158 : f32 to vector<8x1xf32>
    %375 = arith.mulf %373, %374 : vector<8x1xf32>
    %cst_159 = arith.constant 9.99999996E-13 : f32
    %376 = vector.broadcast %cst_159 : f32 to vector<8x1xf32>
    %377 = arith.addf %375, %376 : vector<8x1xf32>
    %378 = math.rsqrt %377 : vector<8x1xf32>
    %379 = vector.broadcast %378 : vector<8x1xf32> to vector<8x128xf32>
    %380 = arith.mulf %370, %379 : vector<8x128xf32>
    %381 = vector.broadcast %360 : vector<1x128xf32> to vector<8x128xf32>
    %382 = arith.mulf %380, %381 : vector<8x128xf32>
    %383 = vector.broadcast %362 : vector<1x128xf32> to vector<8x128xf32>
    %384 = arith.addf %382, %383 : vector<8x128xf32>
    %c0_160 = arith.constant 0 : index
    %c0_161 = arith.constant 0 : index
    %c0_162 = arith.constant 0 : index
    %385 = vector.load %arg17[%c0_160, %c0_161, %c0_162] : memref<1x8x128xf32, #tpu.memory_space<vmem>>, vector<1x8x128xf32>
    %386 = vector.shape_cast %385 : vector<1x8x128xf32> to vector<8x128xf32>
    %387 = vector.shape_cast %384 : vector<8x128xf32> to vector<1x8x128xf32>
    tpu.vector_store %arg17[%c0_160, %c0_161, %c0_162], %387 {strides = array<i32>} : memref<1x8x128xf32, #tpu.memory_space<vmem>>, vector<1x8x128xf32>,
    return
  }
  func.func @transform_0(%arg0: i32) -> (i32, i32, i32) {
    %c0_i32 = arith.constant 0 : i32
    %c0_i32_0 = arith.constant 0 : i32
    %c0_i32_1 = arith.constant 0 : i32
    return %arg0, %c0_i32, %c0_i32_0 : i32, i32, i32
  }
  func.func @transform_1(%arg0: i32) -> (i32, i32, i32) {
    %c0_i32 = arith.constant 0 : i32
    %c0_i32_0 = arith.constant 0 : i32
    %c0_i32_1 = arith.constant 0 : i32
    return %arg0, %c0_i32, %c0_i32_0 : i32, i32, i32
  }
  func.func @transform_2(%arg0: i32) -> (i32, i32) {
    %c0_i32 = arith.constant 0 : i32
    %c0_i32_0 = arith.constant 0 : i32
    %c0_i32_1 = arith.constant 0 : i32
    return %c0_i32, %c0_i32_0 : i32, i32
  }
  func.func @transform_3(%arg0: i32) -> (i32, i32) {
    %c0_i32 = arith.constant 0 : i32
    %c0_i32_0 = arith.constant 0 : i32
    %c0_i32_1 = arith.constant 0 : i32
    return %c0_i32, %c0_i32_0 : i32, i32
  }
  func.func @transform_4(%arg0: i32) -> (i32, i32, i32) {
    %c0_i32 = arith.constant 0 : i32
    %c0_i32_0 = arith.constant 0 : i32
    %c0_i32_1 = arith.constant 0 : i32
    %c0_i32_2 = arith.constant 0 : i32
    return %c0_i32, %c0_i32_0, %c0_i32_1 : i32, i32, i32
  }
  func.func @transform_5(%arg0: i32) -> (i32, i32, i32) {
    %c0_i32 = arith.constant 0 : i32
    %c0_i32_0 = arith.constant 0 : i32
    %c0_i32_1 = arith.constant 0 : i32
    %c0_i32_2 = arith.constant 0 : i32
    return %c0_i32, %c0_i32_0, %c0_i32_1 : i32, i32, i32
  }
  func.func @transform_6(%arg0: i32) -> (i32, i32, i32) {
    %c0_i32 = arith.constant 0 : i32
    %c0_i32_0 = arith.constant 0 : i32
    %c0_i32_1 = arith.constant 0 : i32
    %c0_i32_2 = arith.constant 0 : i32
    return %c0_i32, %c0_i32_0, %c0_i32_1 : i32, i32, i32
  }
  func.func @transform_7(%arg0: i32) -> (i32, i32, i32) {
    %c0_i32 = arith.constant 0 : i32
    %c0_i32_0 = arith.constant 0 : i32
    %c0_i32_1 = arith.constant 0 : i32
    %c0_i32_2 = arith.constant 0 : i32
    return %c0_i32, %c0_i32_0, %c0_i32_1 : i32, i32, i32
  }
  func.func @transform_8(%arg0: i32) -> (i32, i32, i32) {
    %c0_i32 = arith.constant 0 : i32
    %c0_i32_0 = arith.constant 0 : i32
    %c0_i32_1 = arith.constant 0 : i32
    %c0_i32_2 = arith.constant 0 : i32
    return %c0_i32, %c0_i32_0, %c0_i32_1 : i32, i32, i32
  }
  func.func @transform_9(%arg0: i32) -> (i32, i32, i32) {
    %c0_i32 = arith.constant 0 : i32
    %c0_i32_0 = arith.constant 0 : i32
    %c0_i32_1 = arith.constant 0 : i32
    %c0_i32_2 = arith.constant 0 : i32
    return %c0_i32, %c0_i32_0, %c0_i32_1 : i32, i32, i32
  }
  func.func @transform_10(%arg0: i32) -> (i32, i32, i32) {
    %c0_i32 = arith.constant 0 : i32
    %c0_i32_0 = arith.constant 0 : i32
    %c0_i32_1 = arith.constant 0 : i32
    %c0_i32_2 = arith.constant 0 : i32
    return %c0_i32, %c0_i32_0, %c0_i32_1 : i32, i32, i32
  }
  func.func @transform_11(%arg0: i32) -> (i32, i32, i32) {
    %c0_i32 = arith.constant 0 : i32
    %c0_i32_0 = arith.constant 0 : i32
    %c0_i32_1 = arith.constant 0 : i32
    %c0_i32_2 = arith.constant 0 : i32
    return %c0_i32, %c0_i32_0, %c0_i32_1 : i32, i32, i32
  }
  func.func @transform_12(%arg0: i32) -> (i32, i32, i32) {
    %c0_i32 = arith.constant 0 : i32
    %c0_i32_0 = arith.constant 0 : i32
    %c0_i32_1 = arith.constant 0 : i32
    %c0_i32_2 = arith.constant 0 : i32
    return %c0_i32, %c0_i32_0, %c0_i32_1 : i32, i32, i32
  }
  func.func @transform_13(%arg0: i32) -> (i32, i32, i32) {
    %c0_i32 = arith.constant 0 : i32
    %c0_i32_0 = arith.constant 0 : i32
    %c0_i32_1 = arith.constant 0 : i32
    %c0_i32_2 = arith.constant 0 : i32
    return %c0_i32, %c0_i32_0, %c0_i32_1 : i32, i32, i32
  }
  func.func @transform_14(%arg0: i32) -> (i32, i32, i32) {
    %c0_i32 = arith.constant 0 : i32
    %c0_i32_0 = arith.constant 0 : i32
    %c0_i32_1 = arith.constant 0 : i32
    %c0_i32_2 = arith.constant 0 : i32
    return %c0_i32, %c0_i32_0, %c0_i32_1 : i32, i32, i32
  }
  func.func @transform_15(%arg0: i32) -> (i32, i32, i32) {
    %c0_i32 = arith.constant 0 : i32
    %c0_i32_0 = arith.constant 0 : i32
    %c0_i32_1 = arith.constant 0 : i32
    %c0_i32_2 = arith.constant 0 : i32
    return %c0_i32, %c0_i32_0, %c0_i32_1 : i32, i32, i32
  }
  func.func @transform_16(%arg0: i32) -> (i32, i32, i32) {
    %c0_i32 = arith.constant 0 : i32
    %c0_i32_0 = arith.constant 0 : i32
    %c0_i32_1 = arith.constant 0 : i32
    return %arg0, %c0_i32, %c0_i32_0 : i32, i32, i32
  }
}

</mosaic_0001>

<llo_original>
// kernel: bert_tower_forward.1
$region0: #{bert_tower_forward.1}
  #allocation0 [shape = 'u32[]', space=smem, size = 0x4, offset = 0x4, fixed_abs, tag = 'smem constant byte address 0x4 - core index']
  #allocation1 [shape = 'u32[144,128]{1,0:T(1,128)}', space=vmem, size = 0x12000, scoped, tag = 'internal scratch']
  %s0 = inlined_call_operand.vmem [shape: f32[2,8,128], index: 0, kind: input, shape index: {}]
  %s1 = inlined_call_operand.vmem [shape: f32[2,1,8], index: 1, kind: input, shape index: {}]
  %s2 = inlined_call_operand.vmem [shape: f32[1,128], index: 2, kind: input, shape index: {}]
  %s3 = inlined_call_operand.vmem [shape: f32[1,128], index: 3, kind: input, shape index: {}]
  %s4 = inlined_call_operand.vmem [shape: bf16[2,128,96], index: 4, kind: input, shape index: {}]
  %s5 = inlined_call_operand.vmem [shape: f32[2,1,96], index: 5, kind: input, shape index: {}]
  %s6 = inlined_call_operand.vmem [shape: bf16[2,32,128], index: 6, kind: input, shape index: {}]
  %s7 = inlined_call_operand.vmem [shape: f32[2,1,128], index: 7, kind: input, shape index: {}]
  %s8 = inlined_call_operand.vmem [shape: f32[2,1,128], index: 8, kind: input, shape index: {}]
  %s9 = inlined_call_operand.vmem [shape: f32[2,1,128], index: 9, kind: input, shape index: {}]
  %s10 = inlined_call_operand.vmem [shape: bf16[2,128,128], index: 10, kind: input, shape index: {}]
  %s11 = inlined_call_operand.vmem [shape: f32[2,1,128], index: 11, kind: input, shape index: {}]
  %s12 = inlined_call_operand.vmem [shape: bf16[2,128,128], index: 12, kind: input, shape index: {}]
  %s13 = inlined_call_operand.vmem [shape: f32[2,1,128], index: 13, kind: input, shape index: {}]
  %s14 = inlined_call_operand.vmem [shape: f32[2,1,128], index: 14, kind: input, shape index: {}]
  %s15 = inlined_call_operand.vmem [shape: f32[2,1,128], index: 15, kind: input, shape index: {}]
  %s16 = inlined_call_operand.hbm [shape: f32[2,8,128], index: 16, kind: output, shape index: {}]
  %s17 = sld [smem:[#allocation0]]
  $region97: #{bert_tower_forward.1} parent=0
    _
  %s19 = ssub.s32 1, %s17
  %s20 = scalar_select 0, %s19, %s17
  $region1: #{bert_tower_forward.1} parent=0
    #allocation2 [shape = 'u8[8192]{0}', space=vmem, size = 0x2000, scoped, tag = 'output window, operand 0']
    #allocation3 [shape = 's32[2]{0}', space=sflag, size = 0x8, scoped, tag = 'scoped memory for bert_tower_forward.1']
    %21 = vsyncpa [#allocation3], 0
    %s22 = scalar_lea.sflag [#allocation3], 1
    %23 = vsyncpa %s22, 0
    loop: start=0, step=1, limit=4
    $region2: #{bert_tower_forward.1} parent=1 // loop_pre_header
      _
    $region3: #{bert_tower_forward.1} parent=1 // loop_header
      %s25 = sphi 0, %s29
      %p26 = scmp.ge.s32.totalorder %s25, 4
      %s35 = sphi 0, %s37
      %s38 = sphi 0, %s35
      %s39 = sphi 0, %s38
      %s55 = sphi 0, %s39
      %s61 = sphi 0, %s63
      %s64 = sphi 0, %s61
      %s65 = sphi 0, %s64
      %s81 = sphi 0, %s65
      %s85 = sphi 0, %s85
      %s87 = sphi 0, %s85
      %s88 = sphi 0, %s87
      %s102 = sphi 0, %s88
      %s106 = sphi 0, %s106
      %s108 = sphi 0, %s106
      %s109 = sphi 0, %s108
      %s123 = sphi 0, %s109
      %s127 = sphi 0, %s127
      %s129 = sphi 0, %s127
      %s130 = sphi 0, %s129
      %s144 = sphi 0, %s130
      %s148 = sphi 0, %s148
      %s150 = sphi 0, %s148
      %s151 = sphi 0, %s150
      %s165 = sphi 0, %s151
      %s169 = sphi 0, %s169
      %s171 = sphi 0, %s169
      %s172 = sphi 0, %s171
      %s186 = sphi 0, %s172
      %s190 = sphi 0, %s190
      %s192 = sphi 0, %s190
      %s193 = sphi 0, %s192
      %s207 = sphi 0, %s193
      %s211 = sphi 0, %s211
      %s213 = sphi 0, %s211
      %s214 = sphi 0, %s213
      %s228 = sphi 0, %s214
      %s232 = sphi 0, %s232
      %s234 = sphi 0, %s232
      %s235 = sphi 0, %s234
      %s249 = sphi 0, %s235
      %s253 = sphi 0, %s253
      %s255 = sphi 0, %s253
      %s256 = sphi 0, %s255
      %s270 = sphi 0, %s256
      %s274 = sphi 0, %s274
      %s276 = sphi 0, %s274
      %s277 = sphi 0, %s276
      %s291 = sphi 0, %s277
      %s295 = sphi 0, %s295
      %s297 = sphi 0, %s295
      %s298 = sphi 0, %s297
      %s312 = sphi 0, %s298
      %s316 = sphi 0, %s316
      %s318 = sphi 0, %s316
      %s319 = sphi 0, %s318
      %s333 = sphi 0, %s319
      %s337 = sphi 0, %s337
      %s339 = sphi 0, %s337
      %s340 = sphi 0, %s339
      %s354 = sphi 0, %s340
      %s358 = sphi 0, %s358
      %s360 = sphi 0, %s358
      %s361 = sphi 0, %s360
      %s375 = sphi 0, %s361
      %s381 = sphi 0, %s383
      %s384 = sphi 0, %s381
      %s385 = sphi 0, %s384
      %s401 = sphi 0, %s385
    $region4: #{bert_tower_forward.1} parent=1 // loop_header_branch
      %28 = sbr.rel (%p26) target = $region8
    $region5: #{bert_tower_forward.1} parent=1 // loop_body
      %s30 = ssub.s32 %s25, 1
      %s31 = ssub.s32 %s25, 2
      %s32 = sadd.s32 %s25, 1
      %s33 = ssub.s32 %s25, %s32
      %p34 = scmp.eq.s32.totalorder %s33, 0
      %s36 = sadd.s32 %s35, 1
      %s37 = scalar_select %p34, %s35, %s36
      %p40 = pneg %p34
      %p41 = scmp.eq.s32.totalorder %s25, 1
      %p42 = por %p40, %p41
      %p43 = scmp.ne.s32.totalorder %s35, %s38
      %p44 = scmp.eq.s32.totalorder %s25, 0
      %p45 = por %p43, %p44
      %p46 = scmp.ne.s32.totalorder %s35, %s38
      %p47 = scmp.eq.s32.totalorder %s30, 1
      %p48 = por %p46, %p47
      %p49 = scmp.ne.s32.totalorder %s38, %s39
      %p50 = scmp.eq.s32.totalorder %s30, 0
      %p51 = por %p49, %p50
      %p52 = scmp.ne.s32.totalorder %s38, %s39
      %p53 = scmp.eq.s32.totalorder %s31, 1
      %p54 = por %p52, %p53
      %p56 = scmp.ne.s32.totalorder %s39, %s55
      %p57 = scmp.eq.s32.totalorder %s31, 0
      %p58 = por %p56, %p57
      %s59 = ssub.s32 %s25, %s32
      %p60 = scmp.eq.s32.totalorder %s59, 0
      %s62 = sadd.s32 %s61, 1
      %s63 = scalar_select %p60, %s61, %s62
      %p66 = pneg %p60
      %p67 = scmp.eq.s32.totalorder %s25, 1
      %p68 = por %p66, %p67
      %p69 = scmp.ne.s32.totalorder %s61, %s64
      %p70 = scmp.eq.s32.totalorder %s25, 0
      %p71 = por %p69, %p70
      %p72 = scmp.ne.s32.totalorder %s61, %s64
      %p73 = scmp.eq.s32.totalorder %s30, 1
      %p74 = por %p72, %p73
      %p75 = scmp.ne.s32.totalorder %s64, %s65
      %p76 = scmp.eq.s32.totalorder %s30, 0
      %p77 = por %p75, %p76
      %p78 = scmp.ne.s32.totalorder %s64, %s65
      %p79 = scmp.eq.s32.totalorder %s31, 1
      %p80 = por %p78, %p79
      %p82 = scmp.ne.s32.totalorder %s65, %s81
      %p83 = scmp.eq.s32.totalorder %s31, 0
      %p84 = por %p82, %p83
      %s86 = sadd.s32 %s85, 1
      %p89 = scmp.eq.s32.totalorder %s25, 1
      %p90 = scmp.ne.s32.totalorder %s85, %s87
      %p91 = scmp.eq.s32.totalorder %s25, 0
      %p92 = por %p90, %p91
      %p93 = scmp.ne.s32.totalorder %s85, %s87
      %p94 = scmp.eq.s32.totalorder %s30, 1
      %p95 = por %p93, %p94
      %p96 = scmp.ne.s32.totalorder %s87, %s88
      %p97 = scmp.eq.s32.totalorder %s30, 0
      %p98 = por %p96, %p97
      %p99 = scmp.ne.s32.totalorder %s87, %s88
      %p100 = scmp.eq.s32.totalorder %s31, 1
      %p101 = por %p99, %p100
      %p103 = scmp.ne.s32.totalorder %s88, %s102
      %p104 = scmp.eq.s32.totalorder %s31, 0
      %p105 = por %p103, %p104
      %s107 = sadd.s32 %s106, 1
      %p110 = scmp.eq.s32.totalorder %s25, 1
      %p111 = scmp.ne.s32.totalorder %s106, %s108
      %p112 = scmp.eq.s32.totalorder %s25, 0
      %p113 = por %p111, %p112
      %p114 = scmp.ne.s32.totalorder %s106, %s108
      %p115 = scmp.eq.s32.totalorder %s30, 1
      %p116 = por %p114, %p115
      %p117 = scmp.ne.s32.totalorder %s108, %s109
      %p118 = scmp.eq.s32.totalorder %s30, 0
      %p119 = por %p117, %p118
      %p120 = scmp.ne.s32.totalorder %s108, %s109
      %p121 = scmp.eq.s32.totalorder %s31, 1
      %p122 = por %p120, %p121
      %p124 = scmp.ne.s32.totalorder %s109, %s123
      %p125 = scmp.eq.s32.totalorder %s31, 0
      %p126 = por %p124, %p125
      %s128 = sadd.s32 %s127, 1
      %p131 = scmp.eq.s32.totalorder %s25, 1
      %p132 = scmp.ne.s32.totalorder %s127, %s129
      %p133 = scmp.eq.s32.totalorder %s25, 0
      %p134 = por %p132, %p133
      %p135 = scmp.ne.s32.totalorder %s127, %s129
      %p136 = scmp.eq.s32.totalorder %s30, 1
      %p137 = por %p135, %p136
      %p138 = scmp.ne.s32.totalorder %s129, %s130
      %p139 = scmp.eq.s32.totalorder %s30, 0
      %p140 = por %p138, %p139
      %p141 = scmp.ne.s32.totalorder %s129, %s130
      %p142 = scmp.eq.s32.totalorder %s31, 1
      %p143 = por %p141, %p142
      %p145 = scmp.ne.s32.totalorder %s130, %s144
      %p146 = scmp.eq.s32.totalorder %s31, 0
      %p147 = por %p145, %p146
      %s149 = sadd.s32 %s148, 1
      %p152 = scmp.eq.s32.totalorder %s25, 1
      %p153 = scmp.ne.s32.totalorder %s148, %s150
      %p154 = scmp.eq.s32.totalorder %s25, 0
      %p155 = por %p153, %p154
      %p156 = scmp.ne.s32.totalorder %s148, %s150
      %p157 = scmp.eq.s32.totalorder %s30, 1
      %p158 = por %p156, %p157
      %p159 = scmp.ne.s32.totalorder %s150, %s151
      %p160 = scmp.eq.s32.totalorder %s30, 0
      %p161 = por %p159, %p160
      %p162 = scmp.ne.s32.totalorder %s150, %s151
      %p163 = scmp.eq.s32.totalorder %s31, 1
      %p164 = por %p162, %p163
      %p166 = scmp.ne.s32.totalorder %s151, %s165
      %p167 = scmp.eq.s32.totalorder %s31, 0
      %p168 = por %p166, %p167
      %s170 = sadd.s32 %s169, 1
      %p173 = scmp.eq.s32.totalorder %s25, 1
      %p174 = scmp.ne.s32.totalorder %s169, %s171
      %p175 = scmp.eq.s32.totalorder %s25, 0
      %p176 = por %p174, %p175
      %p177 = scmp.ne.s32.totalorder %s169, %s171
      %p178 = scmp.eq.s32.totalorder %s30, 1
      %p179 = por %p177, %p178
      %p180 = scmp.ne.s32.totalorder %s171, %s172
      %p181 = scmp.eq.s32.totalorder %s30, 0
      %p182 = por %p180, %p181
      %p183 = scmp.ne.s32.totalorder %s171, %s172
      %p184 = scmp.eq.s32.totalorder %s31, 1
      %p185 = por %p183, %p184
      %p187 = scmp.ne.s32.totalorder %s172, %s186
      %p188 = scmp.eq.s32.totalorder %s31, 0
      %p189 = por %p187, %p188
      %s191 = sadd.s32 %s190, 1
      %p194 = scmp.eq.s32.totalorder %s25, 1
      %p195 = scmp.ne.s32.totalorder %s190, %s192
      %p196 = scmp.eq.s32.totalorder %s25, 0
      %p197 = por %p195, %p196
      %p198 = scmp.ne.s32.totalorder %s190, %s192
      %p199 = scmp.eq.s32.totalorder %s30, 1
      %p200 = por %p198, %p199
      %p201 = scmp.ne.s32.totalorder %s192, %s193
      %p202 = scmp.eq.s32.totalorder %s30, 0
      %p203 = por %p201, %p202
      %p204 = scmp.ne.s32.totalorder %s192, %s193
      %p205 = scmp.eq.s32.totalorder %s31, 1
      %p206 = por %p204, %p205
      %p208 = scmp.ne.s32.totalorder %s193, %s207
      %p209 = scmp.eq.s32.totalorder %s31, 0
      %p210 = por %p208, %p209
      %s212 = sadd.s32 %s211, 1
      %p215 = scmp.eq.s32.totalorder %s25, 1
      %p216 = scmp.ne.s32.totalorder %s211, %s213
      %p217 = scmp.eq.s32.totalorder %s25, 0
      %p218 = por %p216, %p217
      %p219 = scmp.ne.s32.totalorder %s211, %s213
      %p220 = scmp.eq.s32.totalorder %s30, 1
      %p221 = por %p219, %p220
      %p222 = scmp.ne.s32.totalorder %s213, %s214
      %p223 = scmp.eq.s32.totalorder %s30, 0
      %p224 = por %p222, %p223
      %p225 = scmp.ne.s32.totalorder %s213, %s214
      %p226 = scmp.eq.s32.totalorder %s31, 1
      %p227 = por %p225, %p226
      %p229 = scmp.ne.s32.totalorder %s214, %s228
      %p230 = scmp.eq.s32.totalorder %s31, 0
      %p231 = por %p229, %p230
      %s233 = sadd.s32 %s232, 1
      %p236 = scmp.eq.s32.totalorder %s25, 1
      %p237 = scmp.ne.s32.totalorder %s232, %s234
      %p238 = scmp.eq.s32.totalorder %s25, 0
      %p239 = por %p237, %p238
      %p240 = scmp.ne.s32.totalorder %s232, %s234
      %p241 = scmp.eq.s32.totalorder %s30, 1
      %p242 = por %p240, %p241
      %p243 = scmp.ne.s32.totalorder %s234, %s235
      %p244 = scmp.eq.s32.totalorder %s30, 0
      %p245 = por %p243, %p244
      %p246 = scmp.ne.s32.totalorder %s234, %s235
      %p247 = scmp.eq.s32.totalorder %s31, 1
      %p248 = por %p246, %p247
      %p250 = scmp.ne.s32.totalorder %s235, %s249
      %p251 = scmp.eq.s32.totalorder %s31, 0
      %p252 = por %p250, %p251
      %s254 = sadd.s32 %s253, 1
      %p257 = scmp.eq.s32.totalorder %s25, 1
      %p258 = scmp.ne.s32.totalorder %s253, %s255
      %p259 = scmp.eq.s32.totalorder %s25, 0
      %p260 = por %p258, %p259
      %p261 = scmp.ne.s32.totalorder %s253, %s255
      %p262 = scmp.eq.s32.totalorder %s30, 1
      %p263 = por %p261, %p262
      %p264 = scmp.ne.s32.totalorder %s255, %s256
      %p265 = scmp.eq.s32.totalorder %s30, 0
      %p266 = por %p264, %p265
      %p267 = scmp.ne.s32.totalorder %s255, %s256
      %p268 = scmp.eq.s32.totalorder %s31, 1
      %p269 = por %p267, %p268
      %p271 = scmp.ne.s32.totalorder %s256, %s270
      %p272 = scmp.eq.s32.totalorder %s31, 0
      %p273 = por %p271, %p272
      %s275 = sadd.s32 %s274, 1
      %p278 = scmp.eq.s32.totalorder %s25, 1
      %p279 = scmp.ne.s32.totalorder %s274, %s276
      %p280 = scmp.eq.s32.totalorder %s25, 0
      %p281 = por %p279, %p280
      %p282 = scmp.ne.s32.totalorder %s274, %s276
      %p283 = scmp.eq.s32.totalorder %s30, 1
      %p284 = por %p282, %p283
      %p285 = scmp.ne.s32.totalorder %s276, %s277
      %p286 = scmp.eq.s32.totalorder %s30, 0
      %p287 = por %p285, %p286
      %p288 = scmp.ne.s32.totalorder %s276, %s277
      %p289 = scmp.eq.s32.totalorder %s31, 1
      %p290 = por %p288, %p289
      %p292 = scmp.ne.s32.totalorder %s277, %s291
      %p293 = scmp.eq.s32.totalorder %s31, 0
      %p294 = por %p292, %p293
      %s296 = sadd.s32 %s295, 1
      %p299 = scmp.eq.s32.totalorder %s25, 1
      %p300 = scmp.ne.s32.totalorder %s295, %s297
      %p301 = scmp.eq.s32.totalorder %s25, 0
      %p302 = por %p300, %p301
      %p303 = scmp.ne.s32.totalorder %s295, %s297
      %p304 = scmp.eq.s32.totalorder %s30, 1
      %p305 = por %p303, %p304
      %p306 = scmp.ne.s32.totalorder %s297, %s298
      %p307 = scmp.eq.s32.totalorder %s30, 0
      %p308 = por %p306, %p307
      %p309 = scmp.ne.s32.totalorder %s297, %s298
      %p310 = scmp.eq.s32.totalorder %s31, 1
      %p311 = por %p309, %p310
      %p313 = scmp.ne.s32.totalorder %s298, %s312
      %p314 = scmp.eq.s32.totalorder %s31, 0
      %p315 = por %p313, %p314
      %s317 = sadd.s32 %s316, 1
      %p320 = scmp.eq.s32.totalorder %s25, 1
      %p321 = scmp.ne.s32.totalorder %s316, %s318
      %p322 = scmp.eq.s32.totalorder %s25, 0
      %p323 = por %p321, %p322
      %p324 = scmp.ne.s32.totalorder %s316, %s318
      %p325 = scmp.eq.s32.totalorder %s30, 1
      %p326 = por %p324, %p325
      %p327 = scmp.ne.s32.totalorder %s318, %s319
      %p328 = scmp.eq.s32.totalorder %s30, 0
      %p329 = por %p327, %p328
      %p330 = scmp.ne.s32.totalorder %s318, %s319
      %p331 = scmp.eq.s32.totalorder %s31, 1
      %p332 = por %p330, %p331
      %p334 = scmp.ne.s32.totalorder %s319, %s333
      %p335 = scmp.eq.s32.totalorder %s31, 0
      %p336 = por %p334, %p335
      %s338 = sadd.s32 %s337, 1
      %p341 = scmp.eq.s32.totalorder %s25, 1
      %p342 = scmp.ne.s32.totalorder %s337, %s339
      %p343 = scmp.eq.s32.totalorder %s25, 0
      %p344 = por %p342, %p343
      %p345 = scmp.ne.s32.totalorder %s337, %s339
      %p346 = scmp.eq.s32.totalorder %s30, 1
      %p347 = por %p345, %p346
      %p348 = scmp.ne.s32.totalorder %s339, %s340
      %p349 = scmp.eq.s32.totalorder %s30, 0
      %p350 = por %p348, %p349
      %p351 = scmp.ne.s32.totalorder %s339, %s340
      %p352 = scmp.eq.s32.totalorder %s31, 1
      %p353 = por %p351, %p352
      %p355 = scmp.ne.s32.totalorder %s340, %s354
      %p356 = scmp.eq.s32.totalorder %s31, 0
      %p357 = por %p355, %p356
      %s359 = sadd.s32 %s358, 1
      %p362 = scmp.eq.s32.totalorder %s25, 1
      %p363 = scmp.ne.s32.totalorder %s358, %s360
      %p364 = scmp.eq.s32.totalorder %s25, 0
      %p365 = por %p363, %p364
      %p366 = scmp.ne.s32.totalorder %s358, %s360
      %p367 = scmp.eq.s32.totalorder %s30, 1
      %p368 = por %p366, %p367
      %p369 = scmp.ne.s32.totalorder %s360, %s361
      %p370 = scmp.eq.s32.totalorder %s30, 0
      %p371 = por %p369, %p370
      %p372 = scmp.ne.s32.totalorder %s360, %s361
      %p373 = scmp.eq.s32.totalorder %s31, 1
      %p374 = por %p372, %p373
      %p376 = scmp.ne.s32.totalorder %s361, %s375
      %p377 = scmp.eq.s32.totalorder %s31, 0
      %p378 = por %p376, %p377
      %s379 = ssub.s32 %s25, %s32
      %p380 = scmp.eq.s32.totalorder %s379, 0
      %s382 = sadd.s32 %s381, 1
      %s383 = scalar_select %p380, %s381, %s382
      %p386 = pneg %p380
      %p387 = scmp.eq.s32.totalorder %s25, 1
      %p388 = por %p386, %p387
      %p389 = scmp.ne.s32.totalorder %s381, %s384
      %p390 = scmp.eq.s32.totalorder %s25, 0
      %p391 = por %p389, %p390
      %p392 = scmp.ne.s32.totalorder %s381, %s384
      %p393 = scmp.eq.s32.totalorder %s30, 1
      %p394 = por %p392, %p393
      %p395 = scmp.ne.s32.totalorder %s384, %s385
      %p396 = scmp.eq.s32.totalorder %s30, 0
      %p397 = por %p395, %p396
      %p398 = scmp.ne.s32.totalorder %s384, %s385
      %p399 = scmp.eq.s32.totalorder %s31, 1
      %p400 = por %p398, %p399
      %p402 = scmp.ne.s32.totalorder %s385, %s401
      %p403 = scmp.eq.s32.totalorder %s31, 0
      %p404 = por %p402, %p403
      %p405 = scmp.le.s32.totalorder 1, %s25
      %p406 = scmp.lt.s32.totalorder %s25, 3
      %p407 = pnand %p405, %p406
      %p408 = pneg %p407
      // Predicated region
      $region9: #{bert_tower_forward.1} parent=5 // pred_check
        _
      $region10: #{bert_tower_forward.1} parent=5 // pred_check_branch
        %410 = sbr.rel (%p407) target = $region12
      $region11: #{bert_tower_forward.1} parent=5 // pred_region
        %s411 = ssub.s32 %s25, 1
        // Predicated region
        $region13: #{bert_tower_forward.1} parent=11 // pred_check
          %p412 = pneg %p98
        $region14: #{bert_tower_forward.1} parent=11 // pred_check_branch
          %414 = sbr.rel (%p412) target = $region16
        $region15: #{bert_tower_forward.1} parent=11 // pred_region
          _
        $region16: #{bert_tower_forward.1} parent=11 // pred_fallthru
          _
        // Predicated region
        $region17: #{bert_tower_forward.1} parent=11 // pred_check
          %p415 = pneg %p119
        $region18: #{bert_tower_forward.1} parent=11 // pred_check_branch
          %417 = sbr.rel (%p415) target = $region20
        $region19: #{bert_tower_forward.1} parent=11 // pred_region
          _
        $region20: #{bert_tower_forward.1} parent=11 // pred_fallthru
          _
        // Predicated region
        $region21: #{bert_tower_forward.1} parent=11 // pred_check
          %p418 = pneg %p140
        $region22: #{bert_tower_forward.1} parent=11 // pred_check_branch
          %420 = sbr.rel (%p418) target = $region24
        $region23: #{bert_tower_forward.1} parent=11 // pred_region
          _
        $region24: #{bert_tower_forward.1} parent=11 // pred_fallthru
          _
        // Predicated region
        $region25: #{bert_tower_forward.1} parent=11 // pred_check
          %p421 = pneg %p161
        $region26: #{bert_tower_forward.1} parent=11 // pred_check_branch
          %423 = sbr.rel (%p421) target = $region28
        $region27: #{bert_tower_forward.1} parent=11 // pred_region
          _
        $region28: #{bert_tower_forward.1} parent=11 // pred_fallthru
          _
        // Predicated region
        $region29: #{bert_tower_forward.1} parent=11 // pred_check
          %p424 = pneg %p182
        $region30: #{bert_tower_forward.1} parent=11 // pred_check_branch
          %426 = sbr.rel (%p424) target = $region32
        $region31: #{bert_tower_forward.1} parent=11 // pred_region
          _
        $region32: #{bert_tower_forward.1} parent=11 // pred_fallthru
          _
        // Predicated region
        $region33: #{bert_tower_forward.1} parent=11 // pred_check
          %p427 = pneg %p203
        $region34: #{bert_tower_forward.1} parent=11 // pred_check_branch
          %429 = sbr.rel (%p427) target = $region36
        $region35: #{bert_tower_forward.1} parent=11 // pred_region
          _
        $region36: #{bert_tower_forward.1} parent=11 // pred_fallthru
          _
        // Predicated region
        $region37: #{bert_tower_forward.1} parent=11 // pred_check
          %p430 = pneg %p224
        $region38: #{bert_tower_forward.1} parent=11 // pred_check_branch
          %432 = sbr.rel (%p430) target = $region40
        $region39: #{bert_tower_forward.1} parent=11 // pred_region
          _
        $region40: #{bert_tower_forward.1} parent=11 // pred_fallthru
          _
        // Predicated region
        $region41: #{bert_tower_forward.1} parent=11 // pred_check
          %p433 = pneg %p245
        $region42: #{bert_tower_forward.1} parent=11 // pred_check_branch
          %435 = sbr.rel (%p433) target = $region44
        $region43: #{bert_tower_forward.1} parent=11 // pred_region
          _
        $region44: #{bert_tower_forward.1} parent=11 // pred_fallthru
          _
        // Predicated region
        $region45: #{bert_tower_forward.1} parent=11 // pred_check
          %p436 = pneg %p266
        $region46: #{bert_tower_forward.1} parent=11 // pred_check_branch
          %438 = sbr.rel (%p436) target = $region48
        $region47: #{bert_tower_forward.1} parent=11 // pred_region
          _
        $region48: #{bert_tower_forward.1} parent=11 // pred_fallthru
          _
        // Predicated region
        $region49: #{bert_tower_forward.1} parent=11 // pred_check
          %p439 = pneg %p287
        $region50: #{bert_tower_forward.1} parent=11 // pred_check_branch
          %441 = sbr.rel (%p439) target = $region52
        $region51: #{bert_tower_forward.1} parent=11 // pred_region
          _
        $region52: #{bert_tower_forward.1} parent=11 // pred_fallthru
          _
        // Predicated region
        $region53: #{bert_tower_forward.1} parent=11 // pred_check
          %p442 = pneg %p308
        $region54: #{bert_tower_forward.1} parent=11 // pred_check_branch
          %444 = sbr.rel (%p442) target = $region56
        $region55: #{bert_tower_forward.1} parent=11 // pred_region
          _
        $region56: #{bert_tower_forward.1} parent=11 // pred_fallthru
          _
        // Predicated region
        $region57: #{bert_tower_forward.1} parent=11 // pred_check
          %p445 = pneg %p329
        $region58: #{bert_tower_forward.1} parent=11 // pred_check_branch
          %447 = sbr.rel (%p445) target = $region60
        $region59: #{bert_tower_forward.1} parent=11 // pred_region
          _
        $region60: #{bert_tower_forward.1} parent=11 // pred_fallthru
          _
        // Predicated region
        $region61: #{bert_tower_forward.1} parent=11 // pred_check
          %p448 = pneg %p350
        $region62: #{bert_tower_forward.1} parent=11 // pred_check_branch
          %450 = sbr.rel (%p448) target = $region64
        $region63: #{bert_tower_forward.1} parent=11 // pred_region
          _
        $region64: #{bert_tower_forward.1} parent=11 // pred_fallthru
          _
        // Predicated region
        $region65: #{bert_tower_forward.1} parent=11 // pred_check
          %p451 = pneg %p371
        $region66: #{bert_tower_forward.1} parent=11 // pred_check_branch
          %453 = sbr.rel (%p451) target = $region68
        $region67: #{bert_tower_forward.1} parent=11 // pred_region
          _
        $region68: #{bert_tower_forward.1} parent=11 // pred_fallthru
          _
      $region12: #{bert_tower_forward.1} parent=5 // pred_fallthru
        _
      %p454 = scmp.lt.s32.totalorder %s25, 2
      // Predicated region
      $region69: #{bert_tower_forward.1} parent=5 // pred_check
        %p455 = pneg %p454
      $region70: #{bert_tower_forward.1} parent=5 // pred_check_branch
        %457 = sbr.rel (%p455) target = $region72
      $region71: #{bert_tower_forward.1} parent=5 // pred_region
        // Predicated region
        $region73: #{bert_tower_forward.1} parent=71 // pred_check
          %p458 = pneg %p45
        $region74: #{bert_tower_forward.1} parent=71 // pred_check_branch
          %460 = sbr.rel (%p458) target = $region76
        $region75: #{bert_tower_forward.1} parent=71 // pred_region
          %p461 = scmp.lt.s32.totalorder %s25, 1
          %s462 = scalar_select %p461, %s25, 1
          %s463 = smul.addr %s462, 8
          %s464 = scalar_lea.vmem %s0, %s463
        $region76: #{bert_tower_forward.1} parent=71 // pred_fallthru
          _
        // Predicated region
        $region77: #{bert_tower_forward.1} parent=71 // pred_check
          %p465 = pneg %p71
        $region78: #{bert_tower_forward.1} parent=71 // pred_check_branch
          %467 = sbr.rel (%p465) target = $region80
        $region79: #{bert_tower_forward.1} parent=71 // pred_region
          %p468 = scmp.lt.s32.totalorder %s25, 1
          %s469 = scalar_select %p468, %s25, 1
          %s470 = scalar_lea.vmem %s1, %s469
        $region80: #{bert_tower_forward.1} parent=71 // pred_fallthru
          _
      $region72: #{bert_tower_forward.1} parent=5 // pred_fallthru
        _
      %p471 = scmp.le.s32.totalorder 1, %s25
      %p472 = scmp.lt.s32.totalorder %s25, 3
      %p473 = pnand %p471, %p472
      %p474 = pneg %p473
      // Predicated region
      $region81: #{bert_tower_forward.1} parent=5 // pred_check
        _
      $region82: #{bert_tower_forward.1} parent=5 // pred_check_branch
        %476 = sbr.rel (%p473) target = $region84
      $region83: #{bert_tower_forward.1} parent=5 // pred_region
        %s477 = ssub.s32 %s25, 1
        %p478 = scmp.lt.s32.totalorder %s30, 1
        %s479 = scalar_select %p478, %s30, 1
        %s480 = smul.addr %s479, 8
        %s481 = scalar_lea.vmem %s0, %s480
        %p482 = pneg %p51
        %p483 = pneg %p48
        %p484 = scmp.lt.s32.totalorder %s30, 1
        %s485 = scalar_select %p484, %s30, 1
        %s486 = scalar_lea.vmem %s1, %s485
        %p487 = pneg %p77
        %p488 = pneg %p74
        %p489 = pneg %p98
        %p490 = pneg %p95
        %p491 = pneg %p119
        %p492 = pneg %p116
        %p493 = pneg %p140
        %p494 = pneg %p137
        %p495 = pneg %p161
        %p496 = pneg %p158
        %p497 = pneg %p182
        %p498 = pneg %p179
        %p499 = pneg %p203
        %p500 = pneg %p200
        %p501 = pneg %p224
        %p502 = pneg %p221
        %p503 = pneg %p245
        %p504 = pneg %p242
        %p505 = pneg %p266
        %p506 = pneg %p263
        %p507 = pneg %p287
        %p508 = pneg %p284
        %p509 = pneg %p308
        %p510 = pneg %p305
        %p511 = pneg %p329
        %p512 = pneg %p326
        %p513 = pneg %p350
        %p514 = pneg %p347
        %p515 = pneg %p371
        %p516 = pneg %p368
        %p517 = pneg %p397
        %p518 = pneg %p394
        %s519 = sand.u32 %s384, 1
        %s520 = scalar_lea.sflag [#allocation3], %s519
        %s521 = sand.u32 %s384, 1
        %s522 = smul.addr %s521, 8
        %s523 = scalar_lea.vmem [#allocation2], %s522
        %p524 = scmp.lt.s32.totalorder %s30, 1
        %s525 = scalar_select %p524, %s30, 1
        %s526 = smul.addr %s525, 8
        %s527 = scalar_lea.vmem %s0, %s526
        %p528 = scmp.lt.s32.totalorder %s30, 1
        %s529 = scalar_select %p528, %s30, 1
        %s530 = scalar_lea.vmem %s1, %s529
        %v532 = vlaneseq
        %v533 = vand.u32 %v532, 127
        %vm534 = vcmp.lt.s32.totalorder %v533, 32
        %v535 = vsel %vm534, 1, 0
        %v536 = vcvt.s32.f32 %v535
        %v537 = vld [vmem:[%s530] sm:$0x1]
        %v538 = vld [vmem:[%s527] sm:$0xff]
        %v539 = vld [vmem:[%s2] sm:$0x1]
        %v540 = vld [vmem:[%s3] sm:$0x1]
        %541 = vadd.xlane.f32.xlu0 %v538
        %v542 = vpop.xlane.xlu0 %541
        %v543 = vmul.f32 %v542, 0.03125
        %v544 = vsub.f32 %v538, %v543
        %v545 = vmul.f32 %v544, %v536
        %v546 = vmul.f32 %v545, %v545
        %547 = vadd.xlane.f32.xlu0 %v546
        %v548 = vpop.xlane.xlu0 %547
        %v549 = vmul.f32 %v548, 0.03125
        %v550 = vadd.f32 %v549, 1e-12
        %v551 = vrsqrt.pop %v550
        %v552 = vmul.f32 %v545, %v551
        %v554 = vlaneseq
        %v555 = vshrl.u32 %v554, 7
        %v556 = vsub.s32 0, %v555
        %v557 = vrot.slane %v539, %v556
        %v559 = vmul.f32 %v552, %v557
        %v561 = vlaneseq
        %v562 = vshrl.u32 %v561, 7
        %v563 = vsub.s32 0, %v562
        %v564 = vrot.slane %v540, %v563
        %v566 = vadd.f32 %v559, %v564
        %v567 = vpack.c.bf16 %v566, %v566
        %v568 = vld [vmem:[%s4] sm:$0xf]
        %v569 = vld [vmem:[%s4 + $0x4] sm:$0xf]
        %v570 = vld [vmem:[%s4 + $0x8] sm:$0xf]
        %v571 = vld [vmem:[%s4 + $0xc] sm:$0xf]
        %v572 = vld [vmem:[%s4 + $0x10] sm:$0xf]
        %v573 = vld [vmem:[%s4 + $0x14] sm:$0xf]
        %v574 = vld [vmem:[%s4 + $0x18] sm:$0xf]
        %v575 = vld [vmem:[%s4 + $0x1c] sm:$0xf]
        %v576 = vld [vmem:[%s4 + $0x20] sm:$0xf]
        %v577 = vld [vmem:[%s4 + $0x24] sm:$0xf]
        %v578 = vld [vmem:[%s4 + $0x28] sm:$0xf]
        %v579 = vld [vmem:[%s4 + $0x2c] sm:$0xf]
        %v580 = vld [vmem:[%s4 + $0x30] sm:$0xf]
        %v581 = vld [vmem:[%s4 + $0x34] sm:$0xf]
        %v582 = vld [vmem:[%s4 + $0x38] sm:$0xf]
        %v583 = vld [vmem:[%s4 + $0x3c] sm:$0xf]
        %v584 = vld [vmem:[%s5] sm:$0x1]
        %v586 = vlaneseq
        %v587 = vshrl.u32 %v586, 7
        %v588 = vsub.s32 0, %v587
        %v589 = vrot.slane %v584, %v588
        %v607 = vunpack.c.l.b16 %v568
        %v608 = vunpack.c.l.b16 %v569
        %v609 = vunpack.c.l.b16 %v570
        %v610 = vunpack.c.l.b16 %v571
        %v611 = vunpack.c.l.b16 %v572
        %v612 = vunpack.c.l.b16 %v573
        %v613 = vunpack.c.l.b16 %v574
        %v614 = vunpack.c.l.b16 %v575
        %v615 = vunpack.c.l.b16 %v576
        %v616 = vunpack.c.l.b16 %v577
        %v617 = vunpack.c.l.b16 %v578
        %v618 = vunpack.c.l.b16 %v579
        %v619 = vunpack.c.l.b16 %v580
        %v620 = vunpack.c.l.b16 %v581
        %v621 = vunpack.c.l.b16 %v582
        %v622 = vunpack.c.l.b16 %v583
        %v623 = vpack.c.b16 %v608, %v607
        %v624 = vpack.c.b16 %v610, %v609
        %v625 = vpack.c.b16 %v612, %v611
        %v626 = vpack.c.b16 %v614, %v613
        %v627 = vpack.c.b16 %v616, %v615
        %v628 = vpack.c.b16 %v618, %v617
        %v629 = vpack.c.b16 %v620, %v619
        %v630 = vpack.c.b16 %v622, %v621
        %639 = vmatprep.subr.bf16.mxu0 0
        %640 = vmatpush1.bf16.msra.mxu0 %v623
        %641 = vmatprep.subr.bf16.mxu0 0
        %642 = vmatpush1.bf16.msra.mxu0 %v624
        %643 = vmatprep.subr.bf16.mxu0 0
        %644 = vmatpush1.bf16.msra.mxu0 %v625
        %645 = vmatprep.subr.bf16.mxu0 0
        %646 = vmatpush1.bf16.msra.mxu0 %v626
        %647 = vmatprep.subr.bf16.mxu0 0
        %648 = vmatpush1.bf16.msra.mxu0 %v627
        %649 = vmatprep.subr.bf16.mxu0 0
        %650 = vmatpush1.bf16.msra.mxu0 %v628
        %651 = vmatprep.subr.bf16.mxu0 0
        %652 = vmatpush1.bf16.msra.mxu0 %v629
        %653 = vmatprep.subr.bf16.mxu0 0
        %654 = vmatpush1.bf16.msra.mxu0 %v630
        %655 = vmatprep.subr.bf16.mxu0 0
        %656 = vmatpush1.bf16.msra.mxu0 0
        %657 = vmatprep.subr.bf16.mxu0 0
        %658 = vmatpush1.bf16.msra.mxu0 0
        %659 = vmatprep.subr.bf16.mxu0 0
        %660 = vmatpush1.bf16.msra.mxu0 0
        %661 = vmatprep.subr.bf16.mxu0 0
        %662 = vmatpush1.bf16.msra.mxu0 0
        %663 = vmatprep.subr.bf16.mxu0 0
        %664 = vmatpush1.bf16.msra.mxu0 0
        %665 = vmatprep.subr.bf16.mxu0 0
        %666 = vmatpush1.bf16.msra.mxu0 0
        %667 = vmatprep.subr.bf16.mxu0 0
        %668 = vmatpush1.bf16.msra.mxu0 0
        %669 = vmatprep.subr.bf16.mxu0 0
        %670 = vmatpush1.bf16.msra.mxu0 0
        %671 = vmatprep.mubr.bf16.mxu0 0
        %672 = vmatmul.mubr.bf16.gmra.mrb[0].mxu0 %v567
        %v673 = vpop.f32.mrb[0].mxu0
        %v674 = vadd.f32 %v589, %v673
        %v675 = vpop.f32.mrb[0].mxu0
        %v676 = vpop.f32.mrb[0].mxu0
        %v677 = vpop.f32.mrb[0].mxu0
        %678 = vdwg.mxu0
        %680 = vrot.lane.b32.xlu0 %v674, 96
        %v681 = vpop.permute.xlu0 %680
        %vm682 = vcmask 64512
        %v683 = vsel %vm682, %v674, 0
        %v685 = vsel %vm682, %v681, 0
        %687 = vmatprep.subr.mxu0 0.0
        %688 = vmatpush1.xpose.msra.mxu0 %v685
        %689 = vmatprep.subr.mxu0 0.0
        %690 = vmatpush1.xpose.msra.mxu0 0.0
        %691 = vmatprep.subr.mxu0 0.0
        %692 = vmatpush1.xpose.msra.mxu0 0.0
        %693 = vmatprep.subr.mxu0 0.0
        %694 = vmatpush1.xpose.msra.mxu0 0.0
        %695 = vmatprep.subr.mxu0 0.0
        %696 = vmatpush1.xpose.msra.mxu0 0.0
        %697 = vmatprep.subr.mxu0 0.0
        %698 = vmatpush1.xpose.msra.mxu0 0.0
        %699 = vmatprep.subr.mxu0 0.0
        %700 = vmatpush1.xpose.msra.mxu0 0.0
        %701 = vmatprep.subr.mxu0 0.0
        %702 = vmatpush1.xpose.msra.mxu0 0.0
        %703 = vmatprep.subr.mxu0 0.0
        %704 = vmatpush1.xpose.msra.mxu0 0.0
        %705 = vmatprep.subr.mxu0 0.0
        %706 = vmatpush1.xpose.msra.mxu0 0.0
        %707 = vmatprep.subr.mxu0 0.0
        %708 = vmatpush1.xpose.msra.mxu0 0.0
        %709 = vmatprep.subr.mxu0 0.0
        %710 = vmatpush1.xpose.msra.mxu0 0.0
        %711 = vmatprep.subr.mxu0 0.0
        %712 = vmatpush1.xpose.msra.mxu0 0.0
        %713 = vmatprep.subr.mxu0 0.0
        %714 = vmatpush1.xpose.msra.mxu0 0.0
        %715 = vmatprep.subr.mxu0 0.0
        %716 = vmatpush1.xpose.msra.mxu0 0.0
        %717 = vmatprep.subr.mxu0 0.0
        %718 = vmatpush1.xpose.msra.mxu0 0.0
        %719 = vmatprep.subr.mxu0 0.0
        %720 = vmatpush1.xpose.msra.mxu0 0.0
        %721 = vmatprep.subr.mxu0 0.0
        %722 = vmatpush1.xpose.msra.mxu0 0.0
        %723 = vmatprep.subr.mxu0 0.0
        %724 = vmatpush1.xpose.msra.mxu0 0.0
        %725 = vmatprep.subr.mxu0 0.0
        %726 = vmatpush1.xpose.msra.mxu0 0.0
        %727 = vmatprep.subr.mxu0 0.0
        %728 = vmatpush1.xpose.msra.mxu0 0.0
        %729 = vmatprep.subr.mxu0 0.0
        %730 = vmatpush1.xpose.msra.mxu0 0.0
        %731 = vmatprep.subr.mxu0 0.0
        %732 = vmatpush1.xpose.msra.mxu0 0.0
        %733 = vmatprep.subr.mxu0 0.0
        %734 = vmatpush1.xpose.msra.mxu0 0.0
        %735 = vmatprep.subr.mxu0 0.0
        %736 = vmatpush1.xpose.msra.mxu0 0.0
        %737 = vmatprep.subr.mxu0 0.0
        %738 = vmatpush1.xpose.msra.mxu0 0.0
        %739 = vmatprep.subr.mxu0 0.0
        %740 = vmatpush1.xpose.msra.mxu0 0.0
        %741 = vmatprep.subr.mxu0 0.0
        %742 = vmatpush1.xpose.msra.mxu0 0.0
        %743 = vmatprep.subr.mxu0 0.0
        %744 = vmatpush1.xpose.msra.mxu0 0.0
        %745 = vmatprep.subr.mxu0 0.0
        %746 = vmatpush1.xpose.msra.mxu0 0.0
        %747 = vmatprep.subr.mxu0 0.0
        %748 = vmatpush1.xpose.msra.mxu0 0.0
        %749 = vmatprep.subr.mxu0 0.0
        %750 = vmatpush1.xpose.msra.mxu0 0.0
        %751 = vmatprep.mubr.f32.mxu0 0.0
        %752 = vmatmul.mubr.f32.gmra.mrb[0].mxu0 %v683
        %v753 = vpop.f32.mrb[0].mxu0
        %v754 = vadd.f32 0.0, %v753
        %v755 = vpop.f32.mrb[0].mxu0
        %756 = vdwg.mxu0
        %v757 = vmul.f32 %v754, 0.35355338
        %v759 = vlaneseq
        %v760 = vshrl.u32 %v759, 7
        %v761 = vsub.s32 0, %v760
        %v762 = vrot.slane %v537, %v761
        %v764 = vadd.f32 %v757, %v762
        %v765 = vsel %vm682, %v764, -inf
        %766 = vmax.xlane.f32.xlu0 %v765
        %v767 = vpop.xlane.xlu0 %766
        %v768 = vsub.f32 %v764, %v767
        %v769 = vmul.f32 %v768, 1.442695
        %v770 = vpow.pop %v769
        %v771 = vsel %vm682, %v770, 0.0
        %772 = vadd.xlane.f32.xlu0 %v771
        %v773 = vpop.xlane.xlu0 %772
        %v774 = vrcp.pop %v773
        %v775 = vmul.f32 %v770, %v774
        %776 = vrot.lane.b32.xlu0 %v674, 64
        %v777 = vpop.permute.xlu0 %776
        %v780 = vsel %vm682, %v775, 0
        %782 = vmatprep.subr.mxu0 0.0
        %783 = vmatpush1.msra.mxu0 %v777
        %784 = vmatprep.subr.mxu0 0.0
        %785 = vmatpush1.msra.mxu0 0.0
        %786 = vmatprep.subr.mxu0 0.0
        %787 = vmatpush1.msra.mxu0 0.0
        %788 = vmatprep.subr.mxu0 0.0
        %789 = vmatpush1.msra.mxu0 0.0
        %790 = vmatprep.subr.mxu0 0.0
        %791 = vmatpush1.msra.mxu0 0.0
        %792 = vmatprep.subr.mxu0 0.0
        %793 = vmatpush1.msra.mxu0 0.0
        %794 = vmatprep.subr.mxu0 0.0
        %795 = vmatpush1.msra.mxu0 0.0
        %796 = vmatprep.subr.mxu0 0.0
        %797 = vmatpush1.msra.mxu0 0.0
        %798 = vmatprep.subr.mxu0 0.0
        %799 = vmatpush1.msra.mxu0 0.0
        %800 = vmatprep.subr.mxu0 0.0
        %801 = vmatpush1.msra.mxu0 0.0
        %802 = vmatprep.subr.mxu0 0.0
        %803 = vmatpush1.msra.mxu0 0.0
        %804 = vmatprep.subr.mxu0 0.0
        %805 = vmatpush1.msra.mxu0 0.0
        %806 = vmatprep.subr.mxu0 0.0
        %807 = vmatpush1.msra.mxu0 0.0
        %808 = vmatprep.subr.mxu0 0.0
        %809 = vmatpush1.msra.mxu0 0.0
        %810 = vmatprep.subr.mxu0 0.0
        %811 = vmatpush1.msra.mxu0 0.0
        %812 = vmatprep.subr.mxu0 0.0
        %813 = vmatpush1.msra.mxu0 0.0
        %814 = vmatprep.subr.mxu0 0.0
        %815 = vmatpush1.msra.mxu0 0.0
        %816 = vmatprep.subr.mxu0 0.0
        %817 = vmatpush1.msra.mxu0 0.0
        %818 = vmatprep.subr.mxu0 0.0
        %819 = vmatpush1.msra.mxu0 0.0
        %820 = vmatprep.subr.mxu0 0.0
        %821 = vmatpush1.msra.mxu0 0.0
        %822 = vmatprep.subr.mxu0 0.0
        %823 = vmatpush1.msra.mxu0 0.0
        %824 = vmatprep.subr.mxu0 0.0
        %825 = vmatpush1.msra.mxu0 0.0
        %826 = vmatprep.subr.mxu0 0.0
        %827 = vmatpush1.msra.mxu0 0.0
        %828 = vmatprep.subr.mxu0 0.0
        %829 = vmatpush1.msra.mxu0 0.0
        %830 = vmatprep.subr.mxu0 0.0
        %831 = vmatpush1.msra.mxu0 0.0
        %832 = vmatprep.subr.mxu0 0.0
        %833 = vmatpush1.msra.mxu0 0.0
        %834 = vmatprep.subr.mxu0 0.0
        %835 = vmatpush1.msra.mxu0 0.0
        %836 = vmatprep.subr.mxu0 0.0
        %837 = vmatpush1.msra.mxu0 0.0
        %838 = vmatprep.subr.mxu0 0.0
        %839 = vmatpush1.msra.mxu0 0.0
        %840 = vmatprep.subr.mxu0 0.0
        %841 = vmatpush1.msra.mxu0 0.0
        %842 = vmatprep.subr.mxu0 0.0
        %843 = vmatpush1.msra.mxu0 0.0
        %844 = vmatprep.subr.mxu0 0.0
        %845 = vmatpush1.msra.mxu0 0.0
        %846 = vmatprep.mubr.f32.mxu0 0.0
        %847 = vmatmul.mubr.f32.gmra.mrb[0].mxu0 %v780
        %v848 = vpop.f32.mrb[0].mxu0
        %v849 = vadd.f32 0.0, %v848
        %v850 = vpop.f32.mrb[0].mxu0
        %851 = vdwg.mxu0
        %852 = vrot.lane.b32.xlu0 %v674, 120
        %v853 = vpop.permute.xlu0 %852
        %854 = vrot.lane.b32.xlu0 %v674, 88
        %v855 = vpop.permute.xlu0 %854
        %v856 = vsel %vm682, %v853, 0
        %v858 = vsel %vm682, %v855, 0
        %860 = vmatprep.subr.mxu0 0.0
        %861 = vmatpush1.xpose.msra.mxu0 %v858
        %862 = vmatprep.subr.mxu0 0.0
        %863 = vmatpush1.xpose.msra.mxu0 0.0
        %864 = vmatprep.subr.mxu0 0.0
        %865 = vmatpush1.xpose.msra.mxu0 0.0
        %866 = vmatprep.subr.mxu0 0.0
        %867 = vmatpush1.xpose.msra.mxu0 0.0
        %868 = vmatprep.subr.mxu0 0.0
        %869 = vmatpush1.xpose.msra.mxu0 0.0
        %870 = vmatprep.subr.mxu0 0.0
        %871 = vmatpush1.xpose.msra.mxu0 0.0
        %872 = vmatprep.subr.mxu0 0.0
        %873 = vmatpush1.xpose.msra.mxu0 0.0
        %874 = vmatprep.subr.mxu0 0.0
        %875 = vmatpush1.xpose.msra.mxu0 0.0
        %876 = vmatprep.subr.mxu0 0.0
        %877 = vmatpush1.xpose.msra.mxu0 0.0
        %878 = vmatprep.subr.mxu0 0.0
        %879 = vmatpush1.xpose.msra.mxu0 0.0
        %880 = vmatprep.subr.mxu0 0.0
        %881 = vmatpush1.xpose.msra.mxu0 0.0
        %882 = vmatprep.subr.mxu0 0.0
        %883 = vmatpush1.xpose.msra.mxu0 0.0
        %884 = vmatprep.subr.mxu0 0.0
        %885 = vmatpush1.xpose.msra.mxu0 0.0
        %886 = vmatprep.subr.mxu0 0.0
        %887 = vmatpush1.xpose.msra.mxu0 0.0
        %888 = vmatprep.subr.mxu0 0.0
        %889 = vmatpush1.xpose.msra.mxu0 0.0
        %890 = vmatprep.subr.mxu0 0.0
        %891 = vmatpush1.xpose.msra.mxu0 0.0
        %892 = vmatprep.subr.mxu0 0.0
        %893 = vmatpush1.xpose.msra.mxu0 0.0
        %894 = vmatprep.subr.mxu0 0.0
        %895 = vmatpush1.xpose.msra.mxu0 0.0
        %896 = vmatprep.subr.mxu0 0.0
        %897 = vmatpush1.xpose.msra.mxu0 0.0
        %898 = vmatprep.subr.mxu0 0.0
        %899 = vmatpush1.xpose.msra.mxu0 0.0
        %900 = vmatprep.subr.mxu0 0.0
        %901 = vmatpush1.xpose.msra.mxu0 0.0
        %902 = vmatprep.subr.mxu0 0.0
        %903 = vmatpush1.xpose.msra.mxu0 0.0
        %904 = vmatprep.subr.mxu0 0.0
        %905 = vmatpush1.xpose.msra.mxu0 0.0
        %906 = vmatprep.subr.mxu0 0.0
        %907 = vmatpush1.xpose.msra.mxu0 0.0
        %908 = vmatprep.subr.mxu0 0.0
        %909 = vmatpush1.xpose.msra.mxu0 0.0
        %910 = vmatprep.subr.mxu0 0.0
        %911 = vmatpush1.xpose.msra.mxu0 0.0
        %912 = vmatprep.subr.mxu0 0.0
        %913 = vmatpush1.xpose.msra.mxu0 0.0
        %914 = vmatprep.subr.mxu0 0.0
        %915 = vmatpush1.xpose.msra.mxu0 0.0
        %916 = vmatprep.subr.mxu0 0.0
        %917 = vmatpush1.xpose.msra.mxu0 0.0
        %918 = vmatprep.subr.mxu0 0.0
        %919 = vmatpush1.xpose.msra.mxu0 0.0
        %920 = vmatprep.subr.mxu0 0.0
        %921 = vmatpush1.xpose.msra.mxu0 0.0
        %922 = vmatprep.subr.mxu0 0.0
        %923 = vmatpush1.xpose.msra.mxu0 0.0
        %924 = vmatprep.mubr.f32.mxu0 0.0
        %925 = vmatmul.mubr.f32.gmra.mrb[0].mxu0 %v856
        %v926 = vpop.f32.mrb[0].mxu0
        %v927 = vadd.f32 0.0, %v926
        %v928 = vpop.f32.mrb[0].mxu0
        %929 = vdwg.mxu0
        %v930 = vmul.f32 %v927, 0.35355338
        %v931 = vadd.f32 %v930, %v762
        %v932 = vsel %vm682, %v931, -inf
        %933 = vmax.xlane.f32.xlu0 %v932
        %v934 = vpop.xlane.xlu0 %933
        %v935 = vsub.f32 %v931, %v934
        %v936 = vmul.f32 %v935, 1.442695
        %v937 = vpow.pop %v936
        %v938 = vsel %vm682, %v937, 0.0
        %939 = vadd.xlane.f32.xlu0 %v938
        %v940 = vpop.xlane.xlu0 %939
        %v941 = vrcp.pop %v940
        %v942 = vmul.f32 %v937, %v941
        %943 = vrot.lane.b32.xlu0 %v674, 56
        %v944 = vpop.permute.xlu0 %943
        %v947 = vsel %vm682, %v942, 0
        %949 = vmatprep.subr.mxu0 0.0
        %950 = vmatpush1.msra.mxu0 %v944
        %951 = vmatprep.subr.mxu0 0.0
        %952 = vmatpush1.msra.mxu0 0.0
        %953 = vmatprep.subr.mxu0 0.0
        %954 = vmatpush1.msra.mxu0 0.0
        %955 = vmatprep.subr.mxu0 0.0
        %956 = vmatpush1.msra.mxu0 0.0
        %957 = vmatprep.subr.mxu0 0.0
        %958 = vmatpush1.msra.mxu0 0.0
        %959 = vmatprep.subr.mxu0 0.0
        %960 = vmatpush1.msra.mxu0 0.0
        %961 = vmatprep.subr.mxu0 0.0
        %962 = vmatpush1.msra.mxu0 0.0
        %963 = vmatprep.subr.mxu0 0.0
        %964 = vmatpush1.msra.mxu0 0.0
        %965 = vmatprep.subr.mxu0 0.0
        %966 = vmatpush1.msra.mxu0 0.0
        %967 = vmatprep.subr.mxu0 0.0
        %968 = vmatpush1.msra.mxu0 0.0
        %969 = vmatprep.subr.mxu0 0.0
        %970 = vmatpush1.msra.mxu0 0.0
        %971 = vmatprep.subr.mxu0 0.0
        %972 = vmatpush1.msra.mxu0 0.0
        %973 = vmatprep.subr.mxu0 0.0
        %974 = vmatpush1.msra.mxu0 0.0
        %975 = vmatprep.subr.mxu0 0.0
        %976 = vmatpush1.msra.mxu0 0.0
        %977 = vmatprep.subr.mxu0 0.0
        %978 = vmatpush1.msra.mxu0 0.0
        %979 = vmatprep.subr.mxu0 0.0
        %980 = vmatpush1.msra.mxu0 0.0
        %981 = vmatprep.subr.mxu0 0.0
        %982 = vmatpush1.msra.mxu0 0.0
        %983 = vmatprep.subr.mxu0 0.0
        %984 = vmatpush1.msra.mxu0 0.0
        %985 = vmatprep.subr.mxu0 0.0
        %986 = vmatpush1.msra.mxu0 0.0
        %987 = vmatprep.subr.mxu0 0.0
        %988 = vmatpush1.msra.mxu0 0.0
        %989 = vmatprep.subr.mxu0 0.0
        %990 = vmatpush1.msra.mxu0 0.0
        %991 = vmatprep.subr.mxu0 0.0
        %992 = vmatpush1.msra.mxu0 0.0
        %993 = vmatprep.subr.mxu0 0.0
        %994 = vmatpush1.msra.mxu0 0.0
        %995 = vmatprep.subr.mxu0 0.0
        %996 = vmatpush1.msra.mxu0 0.0
        %997 = vmatprep.subr.mxu0 0.0
        %998 = vmatpush1.msra.mxu0 0.0
        %999 = vmatprep.subr.mxu0 0.0
        %1000 = vmatpush1.msra.mxu0 0.0
        %1001 = vmatprep.subr.mxu0 0.0
        %1002 = vmatpush1.msra.mxu0 0.0
        %1003 = vmatprep.subr.mxu0 0.0
        %1004 = vmatpush1.msra.mxu0 0.0
        %1005 = vmatprep.subr.mxu0 0.0
        %1006 = vmatpush1.msra.mxu0 0.0
        %1007 = vmatprep.subr.mxu0 0.0
        %1008 = vmatpush1.msra.mxu0 0.0
        %1009 = vmatprep.subr.mxu0 0.0
        %1010 = vmatpush1.msra.mxu0 0.0
        %1011 = vmatprep.subr.mxu0 0.0
        %1012 = vmatpush1.msra.mxu0 0.0
        %1013 = vmatprep.mubr.f32.mxu0 0.0
        %1014 = vmatmul.mubr.f32.gmra.mrb[0].mxu0 %v947
        %v1015 = vpop.f32.mrb[0].mxu0
        %v1016 = vadd.f32 0.0, %v1015
        %v1017 = vpop.f32.mrb[0].mxu0
        %1018 = vdwg.mxu0
        %1019 = vrot.lane.b32.xlu0 %v674, 112
        %v1020 = vpop.permute.xlu0 %1019
        %1021 = vrot.lane.b32.xlu0 %v674, 80
        %v1022 = vpop.permute.xlu0 %1021
        %v1023 = vsel %vm682, %v1020, 0
        %v1025 = vsel %vm682, %v1022, 0
        %1027 = vmatprep.subr.mxu0 0.0
        %1028 = vmatpush1.xpose.msra.mxu0 %v1025
        %1029 = vmatprep.subr.mxu0 0.0
        %1030 = vmatpush1.xpose.msra.mxu0 0.0
        %1031 = vmatprep.subr.mxu0 0.0
        %1032 = vmatpush1.xpose.msra.mxu0 0.0
        %1033 = vmatprep.subr.mxu0 0.0
        %1034 = vmatpush1.xpose.msra.mxu0 0.0
        %1035 = vmatprep.subr.mxu0 0.0
        %1036 = vmatpush1.xpose.msra.mxu0 0.0
        %1037 = vmatprep.subr.mxu0 0.0
        %1038 = vmatpush1.xpose.msra.mxu0 0.0
        %1039 = vmatprep.subr.mxu0 0.0
        %1040 = vmatpush1.xpose.msra.mxu0 0.0
        %1041 = vmatprep.subr.mxu0 0.0
        %1042 = vmatpush1.xpose.msra.mxu0 0.0
        %1043 = vmatprep.subr.mxu0 0.0
        %1044 = vmatpush1.xpose.msra.mxu0 0.0
        %1045 = vmatprep.subr.mxu0 0.0
        %1046 = vmatpush1.xpose.msra.mxu0 0.0
        %1047 = vmatprep.subr.mxu0 0.0
        %1048 = vmatpush1.xpose.msra.mxu0 0.0
        %1049 = vmatprep.subr.mxu0 0.0
        %1050 = vmatpush1.xpose.msra.mxu0 0.0
        %1051 = vmatprep.subr.mxu0 0.0
        %1052 = vmatpush1.xpose.msra.mxu0 0.0
        %1053 = vmatprep.subr.mxu0 0.0
        %1054 = vmatpush1.xpose.msra.mxu0 0.0
        %1055 = vmatprep.subr.mxu0 0.0
        %1056 = vmatpush1.xpose.msra.mxu0 0.0
        %1057 = vmatprep.subr.mxu0 0.0
        %1058 = vmatpush1.xpose.msra.mxu0 0.0
        %1059 = vmatprep.subr.mxu0 0.0
        %1060 = vmatpush1.xpose.msra.mxu0 0.0
        %1061 = vmatprep.subr.mxu0 0.0
        %1062 = vmatpush1.xpose.msra.mxu0 0.0
        %1063 = vmatprep.subr.mxu0 0.0
        %1064 = vmatpush1.xpose.msra.mxu0 0.0
        %1065 = vmatprep.subr.mxu0 0.0
        %1066 = vmatpush1.xpose.msra.mxu0 0.0
        %1067 = vmatprep.subr.mxu0 0.0
        %1068 = vmatpush1.xpose.msra.mxu0 0.0
        %1069 = vmatprep.subr.mxu0 0.0
        %1070 = vmatpush1.xpose.msra.mxu0 0.0
        %1071 = vmatprep.subr.mxu0 0.0
        %1072 = vmatpush1.xpose.msra.mxu0 0.0
        %1073 = vmatprep.subr.mxu0 0.0
        %1074 = vmatpush1.xpose.msra.mxu0 0.0
        %1075 = vmatprep.subr.mxu0 0.0
        %1076 = vmatpush1.xpose.msra.mxu0 0.0
        %1077 = vmatprep.subr.mxu0 0.0
        %1078 = vmatpush1.xpose.msra.mxu0 0.0
        %1079 = vmatprep.subr.mxu0 0.0
        %1080 = vmatpush1.xpose.msra.mxu0 0.0
        %1081 = vmatprep.subr.mxu0 0.0
        %1082 = vmatpush1.xpose.msra.mxu0 0.0
        %1083 = vmatprep.subr.mxu0 0.0
        %1084 = vmatpush1.xpose.msra.mxu0 0.0
        %1085 = vmatprep.subr.mxu0 0.0
        %1086 = vmatpush1.xpose.msra.mxu0 0.0
        %1087 = vmatprep.subr.mxu0 0.0
        %1088 = vmatpush1.xpose.msra.mxu0 0.0
        %1089 = vmatprep.subr.mxu0 0.0
        %1090 = vmatpush1.xpose.msra.mxu0 0.0
        %1091 = vmatprep.mubr.f32.mxu0 0.0
        %1092 = vmatmul.mubr.f32.gmra.mrb[0].mxu0 %v1023
        %v1093 = vpop.f32.mrb[0].mxu0
        %v1094 = vadd.f32 0.0, %v1093
        %v1095 = vpop.f32.mrb[0].mxu0
        %1096 = vdwg.mxu0
        %v1097 = vmul.f32 %v1094, 0.35355338
        %v1098 = vadd.f32 %v1097, %v762
        %v1099 = vsel %vm682, %v1098, -inf
        %1100 = vmax.xlane.f32.xlu0 %v1099
        %v1101 = vpop.xlane.xlu0 %1100
        %v1102 = vsub.f32 %v1098, %v1101
        %v1103 = vmul.f32 %v1102, 1.442695
        %v1104 = vpow.pop %v1103
        %v1105 = vsel %vm682, %v1104, 0.0
        %1106 = vadd.xlane.f32.xlu0 %v1105
        %v1107 = vpop.xlane.xlu0 %1106
        %v1108 = vrcp.pop %v1107
        %v1109 = vmul.f32 %v1104, %v1108
        %1110 = vrot.lane.b32.xlu0 %v674, 48
        %v1111 = vpop.permute.xlu0 %1110
        %v1114 = vsel %vm682, %v1109, 0
        %1116 = vmatprep.subr.mxu0 0.0
        %1117 = vmatpush1.msra.mxu0 %v1111
        %1118 = vmatprep.subr.mxu0 0.0
        %1119 = vmatpush1.msra.mxu0 0.0
        %1120 = vmatprep.subr.mxu0 0.0
        %1121 = vmatpush1.msra.mxu0 0.0
        %1122 = vmatprep.subr.mxu0 0.0
        %1123 = vmatpush1.msra.mxu0 0.0
        %1124 = vmatprep.subr.mxu0 0.0
        %1125 = vmatpush1.msra.mxu0 0.0
        %1126 = vmatprep.subr.mxu0 0.0
        %1127 = vmatpush1.msra.mxu0 0.0
        %1128 = vmatprep.subr.mxu0 0.0
        %1129 = vmatpush1.msra.mxu0 0.0
        %1130 = vmatprep.subr.mxu0 0.0
        %1131 = vmatpush1.msra.mxu0 0.0
        %1132 = vmatprep.subr.mxu0 0.0
        %1133 = vmatpush1.msra.mxu0 0.0
        %1134 = vmatprep.subr.mxu0 0.0
        %1135 = vmatpush1.msra.mxu0 0.0
        %1136 = vmatprep.subr.mxu0 0.0
        %1137 = vmatpush1.msra.mxu0 0.0
        %1138 = vmatprep.subr.mxu0 0.0
        %1139 = vmatpush1.msra.mxu0 0.0
        %1140 = vmatprep.subr.mxu0 0.0
        %1141 = vmatpush1.msra.mxu0 0.0
        %1142 = vmatprep.subr.mxu0 0.0
        %1143 = vmatpush1.msra.mxu0 0.0
        %1144 = vmatprep.subr.mxu0 0.0
        %1145 = vmatpush1.msra.mxu0 0.0
        %1146 = vmatprep.subr.mxu0 0.0
        %1147 = vmatpush1.msra.mxu0 0.0
        %1148 = vmatprep.subr.mxu0 0.0
        %1149 = vmatpush1.msra.mxu0 0.0
        %1150 = vmatprep.subr.mxu0 0.0
        %1151 = vmatpush1.msra.mxu0 0.0
        %1152 = vmatprep.subr.mxu0 0.0
        %1153 = vmatpush1.msra.mxu0 0.0
        %1154 = vmatprep.subr.mxu0 0.0
        %1155 = vmatpush1.msra.mxu0 0.0
        %1156 = vmatprep.subr.mxu0 0.0
        %1157 = vmatpush1.msra.mxu0 0.0
        %1158 = vmatprep.subr.mxu0 0.0
        %1159 = vmatpush1.msra.mxu0 0.0
        %1160 = vmatprep.subr.mxu0 0.0
        %1161 = vmatpush1.msra.mxu0 0.0
        %1162 = vmatprep.subr.mxu0 0.0
        %1163 = vmatpush1.msra.mxu0 0.0
        %1164 = vmatprep.subr.mxu0 0.0
        %1165 = vmatpush1.msra.mxu0 0.0
        %1166 = vmatprep.subr.mxu0 0.0
        %1167 = vmatpush1.msra.mxu0 0.0
        %1168 = vmatprep.subr.mxu0 0.0
        %1169 = vmatpush1.msra.mxu0 0.0
        %1170 = vmatprep.subr.mxu0 0.0
        %1171 = vmatpush1.msra.mxu0 0.0
        %1172 = vmatprep.subr.mxu0 0.0
        %1173 = vmatpush1.msra.mxu0 0.0
        %1174 = vmatprep.subr.mxu0 0.0
        %1175 = vmatpush1.msra.mxu0 0.0
        %1176 = vmatprep.subr.mxu0 0.0
        %1177 = vmatpush1.msra.mxu0 0.0
        %1178 = vmatprep.subr.mxu0 0.0
        %1179 = vmatpush1.msra.mxu0 0.0
        %1180 = vmatprep.mubr.f32.mxu0 0.0
        %1181 = vmatmul.mubr.f32.gmra.mrb[0].mxu0 %v1114
        %v1182 = vpop.f32.mrb[0].mxu0
        %v1183 = vadd.f32 0.0, %v1182
        %v1184 = vpop.f32.mrb[0].mxu0
        %1185 = vdwg.mxu0
        %1186 = vrot.lane.b32.xlu0 %v674, 104
        %v1187 = vpop.permute.xlu0 %1186
        %1188 = vrot.lane.b32.xlu0 %v674, 72
        %v1189 = vpop.permute.xlu0 %1188
        %v1190 = vsel %vm682, %v1187, 0
        %v1192 = vsel %vm682, %v1189, 0
        %1194 = vmatprep.subr.mxu0 0.0
        %1195 = vmatpush1.xpose.msra.mxu0 %v1192
        %1196 = vmatprep.subr.mxu0 0.0
        %1197 = vmatpush1.xpose.msra.mxu0 0.0
        %1198 = vmatprep.subr.mxu0 0.0
        %1199 = vmatpush1.xpose.msra.mxu0 0.0
        %1200 = vmatprep.subr.mxu0 0.0
        %1201 = vmatpush1.xpose.msra.mxu0 0.0
        %1202 = vmatprep.subr.mxu0 0.0
        %1203 = vmatpush1.xpose.msra.mxu0 0.0
        %1204 = vmatprep.subr.mxu0 0.0
        %1205 = vmatpush1.xpose.msra.mxu0 0.0
        %1206 = vmatprep.subr.mxu0 0.0
        %1207 = vmatpush1.xpose.msra.mxu0 0.0
        %1208 = vmatprep.subr.mxu0 0.0
        %1209 = vmatpush1.xpose.msra.mxu0 0.0
        %1210 = vmatprep.subr.mxu0 0.0
        %1211 = vmatpush1.xpose.msra.mxu0 0.0
        %1212 = vmatprep.subr.mxu0 0.0
        %1213 = vmatpush1.xpose.msra.mxu0 0.0
        %1214 = vmatprep.subr.mxu0 0.0
        %1215 = vmatpush1.xpose.msra.mxu0 0.0
        %1216 = vmatprep.subr.mxu0 0.0
        %1217 = vmatpush1.xpose.msra.mxu0 0.0
        %1218 = vmatprep.subr.mxu0 0.0
        %1219 = vmatpush1.xpose.msra.mxu0 0.0
        %1220 = vmatprep.subr.mxu0 0.0
        %1221 = vmatpush1.xpose.msra.mxu0 0.0
        %1222 = vmatprep.subr.mxu0 0.0
        %1223 = vmatpush1.xpose.msra.mxu0 0.0
        %1224 = vmatprep.subr.mxu0 0.0
        %1225 = vmatpush1.xpose.msra.mxu0 0.0
        %1226 = vmatprep.subr.mxu0 0.0
        %1227 = vmatpush1.xpose.msra.mxu0 0.0
        %1228 = vmatprep.subr.mxu0 0.0
        %1229 = vmatpush1.xpose.msra.mxu0 0.0
        %1230 = vmatprep.subr.mxu0 0.0
        %1231 = vmatpush1.xpose.msra.mxu0 0.0
        %1232 = vmatprep.subr.mxu0 0.0
        %1233 = vmatpush1.xpose.msra.mxu0 0.0
        %1234 = vmatprep.subr.mxu0 0.0
        %1235 = vmatpush1.xpose.msra.mxu0 0.0
        %1236 = vmatprep.subr.mxu0 0.0
        %1237 = vmatpush1.xpose.msra.mxu0 0.0
        %1238 = vmatprep.subr.mxu0 0.0
        %1239 = vmatpush1.xpose.msra.mxu0 0.0
        %1240 = vmatprep.subr.mxu0 0.0
        %1241 = vmatpush1.xpose.msra.mxu0 0.0
        %1242 = vmatprep.subr.mxu0 0.0
        %1243 = vmatpush1.xpose.msra.mxu0 0.0
        %1244 = vmatprep.subr.mxu0 0.0
        %1245 = vmatpush1.xpose.msra.mxu0 0.0
        %1246 = vmatprep.subr.mxu0 0.0
        %1247 = vmatpush1.xpose.msra.mxu0 0.0
        %1248 = vmatprep.subr.mxu0 0.0
        %1249 = vmatpush1.xpose.msra.mxu0 0.0
        %1250 = vmatprep.subr.mxu0 0.0
        %1251 = vmatpush1.xpose.msra.mxu0 0.0
        %1252 = vmatprep.subr.mxu0 0.0
        %1253 = vmatpush1.xpose.msra.mxu0 0.0
        %1254 = vmatprep.subr.mxu0 0.0
        %1255 = vmatpush1.xpose.msra.mxu0 0.0
        %1256 = vmatprep.subr.mxu0 0.0
        %1257 = vmatpush1.xpose.msra.mxu0 0.0
        %1258 = vmatprep.mubr.f32.mxu0 0.0
        %1259 = vmatmul.mubr.f32.gmra.mrb[0].mxu0 %v1190
        %v1260 = vpop.f32.mrb[0].mxu0
        %v1261 = vadd.f32 0.0, %v1260
        %v1262 = vpop.f32.mrb[0].mxu0
        %1263 = vdwg.mxu0
        %v1264 = vmul.f32 %v1261, 0.35355338
        %v1265 = vadd.f32 %v1264, %v762
        %v1266 = vsel %vm682, %v1265, -inf
        %1267 = vmax.xlane.f32.xlu0 %v1266
        %v1268 = vpop.xlane.xlu0 %1267
        %v1269 = vsub.f32 %v1265, %v1268
        %v1270 = vmul.f32 %v1269, 1.442695
        %v1271 = vpow.pop %v1270
        %v1272 = vsel %vm682, %v1271, 0.0
        %1273 = vadd.xlane.f32.xlu0 %v1272
        %v1274 = vpop.xlane.xlu0 %1273
        %v1275 = vrcp.pop %v1274
        %v1276 = vmul.f32 %v1271, %v1275
        %1277 = vrot.lane.b32.xlu0 %v674, 40
        %v1278 = vpop.permute.xlu0 %1277
        %v1281 = vsel %vm682, %v1276, 0
        %1283 = vmatprep.subr.mxu0 0.0
        %1284 = vmatpush1.msra.mxu0 %v1278
        %1285 = vmatprep.subr.mxu0 0.0
        %1286 = vmatpush1.msra.mxu0 0.0
        %1287 = vmatprep.subr.mxu0 0.0
        %1288 = vmatpush1.msra.mxu0 0.0
        %1289 = vmatprep.subr.mxu0 0.0
        %1290 = vmatpush1.msra.mxu0 0.0
        %1291 = vmatprep.subr.mxu0 0.0
        %1292 = vmatpush1.msra.mxu0 0.0
        %1293 = vmatprep.subr.mxu0 0.0
        %1294 = vmatpush1.msra.mxu0 0.0
        %1295 = vmatprep.subr.mxu0 0.0
        %1296 = vmatpush1.msra.mxu0 0.0
        %1297 = vmatprep.subr.mxu0 0.0
        %1298 = vmatpush1.msra.mxu0 0.0
        %1299 = vmatprep.subr.mxu0 0.0
        %1300 = vmatpush1.msra.mxu0 0.0
        %1301 = vmatprep.subr.mxu0 0.0
        %1302 = vmatpush1.msra.mxu0 0.0
        %1303 = vmatprep.subr.mxu0 0.0
        %1304 = vmatpush1.msra.mxu0 0.0
        %1305 = vmatprep.subr.mxu0 0.0
        %1306 = vmatpush1.msra.mxu0 0.0
        %1307 = vmatprep.subr.mxu0 0.0
        %1308 = vmatpush1.msra.mxu0 0.0
        %1309 = vmatprep.subr.mxu0 0.0
        %1310 = vmatpush1.msra.mxu0 0.0
        %1311 = vmatprep.subr.mxu0 0.0
        %1312 = vmatpush1.msra.mxu0 0.0
        %1313 = vmatprep.subr.mxu0 0.0
        %1314 = vmatpush1.msra.mxu0 0.0
        %1315 = vmatprep.subr.mxu0 0.0
        %1316 = vmatpush1.msra.mxu0 0.0
        %1317 = vmatprep.subr.mxu0 0.0
        %1318 = vmatpush1.msra.mxu0 0.0
        %1319 = vmatprep.subr.mxu0 0.0
        %1320 = vmatpush1.msra.mxu0 0.0
        %1321 = vmatprep.subr.mxu0 0.0
        %1322 = vmatpush1.msra.mxu0 0.0
        %1323 = vmatprep.subr.mxu0 0.0
        %1324 = vmatpush1.msra.mxu0 0.0
        %1325 = vmatprep.subr.mxu0 0.0
        %1326 = vmatpush1.msra.mxu0 0.0
        %1327 = vmatprep.subr.mxu0 0.0
        %1328 = vmatpush1.msra.mxu0 0.0
        %1329 = vmatprep.subr.mxu0 0.0
        %1330 = vmatpush1.msra.mxu0 0.0
        %1331 = vmatprep.subr.mxu0 0.0
        %1332 = vmatpush1.msra.mxu0 0.0
        %1333 = vmatprep.subr.mxu0 0.0
        %1334 = vmatpush1.msra.mxu0 0.0
        %1335 = vmatprep.subr.mxu0 0.0
        %1336 = vmatpush1.msra.mxu0 0.0
        %1337 = vmatprep.subr.mxu0 0.0
        %1338 = vmatpush1.msra.mxu0 0.0
        %1339 = vmatprep.subr.mxu0 0.0
        %1340 = vmatpush1.msra.mxu0 0.0
        %1341 = vmatprep.subr.mxu0 0.0
        %1342 = vmatpush1.msra.mxu0 0.0
        %1343 = vmatprep.subr.mxu0 0.0
        %1344 = vmatpush1.msra.mxu0 0.0
        %1345 = vmatprep.subr.mxu0 0.0
        %1346 = vmatpush1.msra.mxu0 0.0
        %1347 = vmatprep.mubr.f32.mxu0 0.0
        %1348 = vmatmul.mubr.f32.gmra.mrb[0].mxu0 %v1281
        %v1349 = vpop.f32.mrb[0].mxu0
        %v1350 = vadd.f32 0.0, %v1349
        %v1351 = vpop.f32.mrb[0].mxu0
        %1352 = vdwg.mxu0
        %1354 = vrot.lane.b32.xlu0 %v1016, 8
        %v1355 = vpop.permute.xlu0 %1354
        %1358 = vrot.lane.b32.xlu0 %v1183, 16
        %v1359 = vpop.permute.xlu0 %1358
        %1362 = vrot.lane.b32.xlu0 %v1350, 24
        %v1363 = vpop.permute.xlu0 %1362
        %v1365 = vsel %vm682, %v849, %v1355
        %vm1366 = vcmask 130048
        %v1367 = vsel %vm1366, %v1365, %v1359
        %vm1368 = vcmask 195584
        %v1369 = vsel %vm1368, %v1367, %v1363
        %v1370 = vpack.c.bf16 %v1369, %v1369
        %v1371 = vld [vmem:[%s6] sm:$0xf]
        %v1372 = vld [vmem:[%s6 + $0x4] sm:$0xf]
        %v1373 = vld [vmem:[%s6 + $0x8] sm:$0xf]
        %v1374 = vld [vmem:[%s6 + $0xc] sm:$0xf]
        %v1375 = vld [vmem:[%s7] sm:$0x1]
        %v1377 = vlaneseq
        %v1378 = vshrl.u32 %v1377, 7
        %v1379 = vsub.s32 0, %v1378
        %v1380 = vrot.slane %v1375, %v1379
        %v1386 = vunpack.c.l.b16 %v1371
        %v1387 = vunpack.c.l.b16 %v1372
        %v1388 = vunpack.c.l.b16 %v1373
        %v1389 = vunpack.c.l.b16 %v1374
        %v1390 = vpack.c.b16 %v1387, %v1386
        %v1391 = vpack.c.b16 %v1389, %v1388
        %vm1394 = vcmask 261120
        %v1396 = vsel %vm1394, %v1370, 0
        %1398 = vmatprep.subr.bf16.mxu0 0
        %1399 = vmatpush1.bf16.msra.mxu0 %v1390
        %1400 = vmatprep.subr.bf16.mxu0 0
        %1401 = vmatpush1.bf16.msra.mxu0 %v1391
        %1402 = vmatprep.subr.bf16.mxu0 0
        %1403 = vmatpush1.bf16.msra.mxu0 0
        %1404 = vmatprep.subr.bf16.mxu0 0
        %1405 = vmatpush1.bf16.msra.mxu0 0
        %1406 = vmatprep.subr.bf16.mxu0 0
        %1407 = vmatpush1.bf16.msra.mxu0 0
        %1408 = vmatprep.subr.bf16.mxu0 0
        %1409 = vmatpush1.bf16.msra.mxu0 0
        %1410 = vmatprep.subr.bf16.mxu0 0
        %1411 = vmatpush1.bf16.msra.mxu0 0
        %1412 = vmatprep.subr.bf16.mxu0 0
        %1413 = vmatpush1.bf16.msra.mxu0 0
        %1414 = vmatprep.subr.bf16.mxu0 0
        %1415 = vmatpush1.bf16.msra.mxu0 0
        %1416 = vmatprep.subr.bf16.mxu0 0
        %1417 = vmatpush1.bf16.msra.mxu0 0
        %1418 = vmatprep.subr.bf16.mxu0 0
        %1419 = vmatpush1.bf16.msra.mxu0 0
        %1420 = vmatprep.subr.bf16.mxu0 0
        %1421 = vmatpush1.bf16.msra.mxu0 0
        %1422 = vmatprep.subr.bf16.mxu0 0
        %1423 = vmatpush1.bf16.msra.mxu0 0
        %1424 = vmatprep.subr.bf16.mxu0 0
        %1425 = vmatpush1.bf16.msra.mxu0 0
        %1426 = vmatprep.subr.bf16.mxu0 0
        %1427 = vmatpush1.bf16.msra.mxu0 0
        %1428 = vmatprep.subr.bf16.mxu0 0
        %1429 = vmatpush1.bf16.msra.mxu0 0
        %1430 = vmatprep.mubr.bf16.mxu0 0
        %1431 = vmatmul.mubr.bf16.gmra.mrb[0].mxu0 %v1396
        %v1432 = vpop.f32.mrb[0].mxu0
        %v1433 = vadd.f32 %v1380, %v1432
        %v1434 = vpop.f32.mrb[0].mxu0
        %v1435 = vpop.f32.mrb[0].mxu0
        %v1436 = vpop.f32.mrb[0].mxu0
        %1437 = vdwg.mxu0
        %v1438 = vadd.f32 %v566, %v1433
        %v1439 = vld [vmem:[%s8] sm:$0x1]
        %v1440 = vld [vmem:[%s9] sm:$0x1]
        %1441 = vadd.xlane.f32.xlu0 %v1438
        %v1442 = vpop.xlane.xlu0 %1441
        %v1443 = vmul.f32 %v1442, 0.03125
        %v1444 = vsub.f32 %v1438, %v1443
        %v1445 = vmul.f32 %v1444, %v536
        %v1446 = vmul.f32 %v1445, %v1445
        %1447 = vadd.xlane.f32.xlu0 %v1446
        %v1448 = vpop.xlane.xlu0 %1447
        %v1449 = vmul.f32 %v1448, 0.03125
        %v1450 = vadd.f32 %v1449, 1e-12
        %v1451 = vrsqrt.pop %v1450
        %v1452 = vmul.f32 %v1445, %v1451
        %v1454 = vlaneseq
        %v1455 = vshrl.u32 %v1454, 7
        %v1456 = vsub.s32 0, %v1455
        %v1457 = vrot.slane %v1439, %v1456
        %v1459 = vmul.f32 %v1452, %v1457
        %v1461 = vlaneseq
        %v1462 = vshrl.u32 %v1461, 7
        %v1463 = vsub.s32 0, %v1462
        %v1464 = vrot.slane %v1440, %v1463
        %v1466 = vadd.f32 %v1459, %v1464
        %v1467 = vpack.c.bf16 %v1466, %v1466
        %v1468 = vld [vmem:[%s10] sm:$0xf]
        %v1469 = vld [vmem:[%s10 + $0x4] sm:$0xf]
        %v1470 = vld [vmem:[%s10 + $0x8] sm:$0xf]
        %v1471 = vld [vmem:[%s10 + $0xc] sm:$0xf]
        %v1472 = vld [vmem:[%s10 + $0x10] sm:$0xf]
        %v1473 = vld [vmem:[%s10 + $0x14] sm:$0xf]
        %v1474 = vld [vmem:[%s10 + $0x18] sm:$0xf]
        %v1475 = vld [vmem:[%s10 + $0x1c] sm:$0xf]
        %v1476 = vld [vmem:[%s10 + $0x20] sm:$0xf]
        %v1477 = vld [vmem:[%s10 + $0x24] sm:$0xf]
        %v1478 = vld [vmem:[%s10 + $0x28] sm:$0xf]
        %v1479 = vld [vmem:[%s10 + $0x2c] sm:$0xf]
        %v1480 = vld [vmem:[%s10 + $0x30] sm:$0xf]
        %v1481 = vld [vmem:[%s10 + $0x34] sm:$0xf]
        %v1482 = vld [vmem:[%s10 + $0x38] sm:$0xf]
        %v1483 = vld [vmem:[%s10 + $0x3c] sm:$0xf]
        %v1484 = vld [vmem:[%s11] sm:$0x1]
        %v1486 = vlaneseq
        %v1487 = vshrl.u32 %v1486, 7
        %v1488 = vsub.s32 0, %v1487
        %v1489 = vrot.slane %v1484, %v1488
        %v1507 = vunpack.c.l.b16 %v1468
        %v1508 = vunpack.c.l.b16 %v1469
        %v1509 = vunpack.c.l.b16 %v1470
        %v1510 = vunpack.c.l.b16 %v1471
        %v1511 = vunpack.c.l.b16 %v1472
        %v1512 = vunpack.c.l.b16 %v1473
        %v1513 = vunpack.c.l.b16 %v1474
        %v1514 = vunpack.c.l.b16 %v1475
        %v1515 = vunpack.c.l.b16 %v1476
        %v1516 = vunpack.c.l.b16 %v1477
        %v1517 = vunpack.c.l.b16 %v1478
        %v1518 = vunpack.c.l.b16 %v1479
        %v1519 = vunpack.c.l.b16 %v1480
        %v1520 = vunpack.c.l.b16 %v1481
        %v1521 = vunpack.c.l.b16 %v1482
        %v1522 = vunpack.c.l.b16 %v1483
        %v1523 = vpack.c.b16 %v1508, %v1507
        %v1524 = vpack.c.b16 %v1510, %v1509
        %v1525 = vpack.c.b16 %v1512, %v1511
        %v1526 = vpack.c.b16 %v1514, %v1513
        %v1527 = vpack.c.b16 %v1516, %v1515
        %v1528 = vpack.c.b16 %v1518, %v1517
        %v1529 = vpack.c.b16 %v1520, %v1519
        %v1530 = vpack.c.b16 %v1522, %v1521
        %1539 = vmatprep.subr.bf16.mxu0 0
        %1540 = vmatpush1.bf16.msra.mxu0 %v1523
        %1541 = vmatprep.subr.bf16.mxu0 0
        %1542 = vmatpush1.bf16.msra.mxu0 %v1524
        %1543 = vmatprep.subr.bf16.mxu0 0
        %1544 = vmatpush1.bf16.msra.mxu0 %v1525
        %1545 = vmatprep.subr.bf16.mxu0 0
        %1546 = vmatpush1.bf16.msra.mxu0 %v1526
        %1547 = vmatprep.subr.bf16.mxu0 0
        %1548 = vmatpush1.bf16.msra.mxu0 %v1527
        %1549 = vmatprep.subr.bf16.mxu0 0
        %1550 = vmatpush1.bf16.msra.mxu0 %v1528
        %1551 = vmatprep.subr.bf16.mxu0 0
        %1552 = vmatpush1.bf16.msra.mxu0 %v1529
        %1553 = vmatprep.subr.bf16.mxu0 0
        %1554 = vmatpush1.bf16.msra.mxu0 %v1530
        %1555 = vmatprep.subr.bf16.mxu0 0
        %1556 = vmatpush1.bf16.msra.mxu0 0
        %1557 = vmatprep.subr.bf16.mxu0 0
        %1558 = vmatpush1.bf16.msra.mxu0 0
        %1559 = vmatprep.subr.bf16.mxu0 0
        %1560 = vmatpush1.bf16.msra.mxu0 0
        %1561 = vmatprep.subr.bf16.mxu0 0
        %1562 = vmatpush1.bf16.msra.mxu0 0
        %1563 = vmatprep.subr.bf16.mxu0 0
        %1564 = vmatpush1.bf16.msra.mxu0 0
        %1565 = vmatprep.subr.bf16.mxu0 0
        %1566 = vmatpush1.bf16.msra.mxu0 0
        %1567 = vmatprep.subr.bf16.mxu0 0
        %1568 = vmatpush1.bf16.msra.mxu0 0
        %1569 = vmatprep.subr.bf16.mxu0 0
        %1570 = vmatpush1.bf16.msra.mxu0 0
        %1571 = vmatprep.mubr.bf16.mxu0 0
        %1572 = vmatmul.mubr.bf16.gmra.mrb[0].mxu0 %v1467
        %v1573 = vpop.f32.mrb[0].mxu0
        %v1574 = vadd.f32 %v1489, %v1573
        %v1575 = vpop.f32.mrb[0].mxu0
        %v1576 = vpop.f32.mrb[0].mxu0
        %v1577 = vpop.f32.mrb[0].mxu0
        %1578 = vdwg.mxu0
        %v1579 = vmul.f32 %v1574, 0.5
        %v1580 = vmul.f32 %v1574, 0.044715
        %v1581 = vmul.f32 %v1580, %v1574
        %v1582 = vmul.f32 %v1581, %v1574
        %v1583 = vadd.f32 %v1574, %v1582
        %v1584 = vmul.f32 %v1583, 0.7978846
        %v1585 = vtanh.pop %v1584
        %v1586 = vadd.f32 %v1585, 1.0
        %v1587 = vmul.f32 %v1579, %v1586
        %v1588 = vpack.c.bf16 %v1587, %v1587
        %v1589 = vld [vmem:[%s12] sm:$0xf]
        %v1590 = vld [vmem:[%s12 + $0x4] sm:$0xf]
        %v1591 = vld [vmem:[%s12 + $0x8] sm:$0xf]
        %v1592 = vld [vmem:[%s12 + $0xc] sm:$0xf]
        %v1593 = vld [vmem:[%s12 + $0x10] sm:$0xf]
        %v1594 = vld [vmem:[%s12 + $0x14] sm:$0xf]
        %v1595 = vld [vmem:[%s12 + $0x18] sm:$0xf]
        %v1596 = vld [vmem:[%s12 + $0x1c] sm:$0xf]
        %v1597 = vld [vmem:[%s12 + $0x20] sm:$0xf]
        %v1598 = vld [vmem:[%s12 + $0x24] sm:$0xf]
        %v1599 = vld [vmem:[%s12 + $0x28] sm:$0xf]
        %v1600 = vld [vmem:[%s12 + $0x2c] sm:$0xf]
        %v1601 = vld [vmem:[%s12 + $0x30] sm:$0xf]
        %v1602 = vld [vmem:[%s12 + $0x34] sm:$0xf]
        %v1603 = vld [vmem:[%s12 + $0x38] sm:$0xf]
        %v1604 = vld [vmem:[%s12 + $0x3c] sm:$0xf]
        %v1605 = vld [vmem:[%s13] sm:$0x1]
        %v1607 = vlaneseq
        %v1608 = vshrl.u32 %v1607, 7
        %v1609 = vsub.s32 0, %v1608
        %v1610 = vrot.slane %v1605, %v1609
        %v1628 = vunpack.c.l.b16 %v1589
        %v1629 = vunpack.c.l.b16 %v1590
        %v1630 = vunpack.c.l.b16 %v1591
        %v1631 = vunpack.c.l.b16 %v1592
        %v1632 = vunpack.c.l.b16 %v1593
        %v1633 = vunpack.c.l.b16 %v1594
        %v1634 = vunpack.c.l.b16 %v1595
        %v1635 = vunpack.c.l.b16 %v1596
        %v1636 = vunpack.c.l.b16 %v1597
        %v1637 = vunpack.c.l.b16 %v1598
        %v1638 = vunpack.c.l.b16 %v1599
        %v1639 = vunpack.c.l.b16 %v1600
        %v1640 = vunpack.c.l.b16 %v1601
        %v1641 = vunpack.c.l.b16 %v1602
        %v1642 = vunpack.c.l.b16 %v1603
        %v1643 = vunpack.c.l.b16 %v1604
        %v1644 = vpack.c.b16 %v1629, %v1628
        %v1645 = vpack.c.b16 %v1631, %v1630
        %v1646 = vpack.c.b16 %v1633, %v1632
        %v1647 = vpack.c.b16 %v1635, %v1634
        %v1648 = vpack.c.b16 %v1637, %v1636
        %v1649 = vpack.c.b16 %v1639, %v1638
        %v1650 = vpack.c.b16 %v1641, %v1640
        %v1651 = vpack.c.b16 %v1643, %v1642
        %1660 = vmatprep.subr.bf16.mxu0 0
        %1661 = vmatpush1.bf16.msra.mxu0 %v1644
        %1662 = vmatprep.subr.bf16.mxu0 0
        %1663 = vmatpush1.bf16.msra.mxu0 %v1645
        %1664 = vmatprep.subr.bf16.mxu0 0
        %1665 = vmatpush1.bf16.msra.mxu0 %v1646
        %1666 = vmatprep.subr.bf16.mxu0 0
        %1667 = vmatpush1.bf16.msra.mxu0 %v1647
        %1668 = vmatprep.subr.bf16.mxu0 0
        %1669 = vmatpush1.bf16.msra.mxu0 %v1648
        %1670 = vmatprep.subr.bf16.mxu0 0
        %1671 = vmatpush1.bf16.msra.mxu0 %v1649
        %1672 = vmatprep.subr.bf16.mxu0 0
        %1673 = vmatpush1.bf16.msra.mxu0 %v1650
        %1674 = vmatprep.subr.bf16.mxu0 0
        %1675 = vmatpush1.bf16.msra.mxu0 %v1651
        %1676 = vmatprep.subr.bf16.mxu0 0
        %1677 = vmatpush1.bf16.msra.mxu0 0
        %1678 = vmatprep.subr.bf16.mxu0 0
        %1679 = vmatpush1.bf16.msra.mxu0 0
        %1680 = vmatprep.subr.bf16.mxu0 0
        %1681 = vmatpush1.bf16.msra.mxu0 0
        %1682 = vmatprep.subr.bf16.mxu0 0
        %1683 = vmatpush1.bf16.msra.mxu0 0
        %1684 = vmatprep.subr.bf16.mxu0 0
        %1685 = vmatpush1.bf16.msra.mxu0 0
        %1686 = vmatprep.subr.bf16.mxu0 0
        %1687 = vmatpush1.bf16.msra.mxu0 0
        %1688 = vmatprep.subr.bf16.mxu0 0
        %1689 = vmatpush1.bf16.msra.mxu0 0
        %1690 = vmatprep.subr.bf16.mxu0 0
        %1691 = vmatpush1.bf16.msra.mxu0 0
        %1692 = vmatprep.mubr.bf16.mxu0 0
        %1693 = vmatmul.mubr.bf16.gmra.mrb[0].mxu0 %v1588
        %v1694 = vpop.f32.mrb[0].mxu0
        %v1695 = vadd.f32 %v1610, %v1694
        %v1696 = vpop.f32.mrb[0].mxu0
        %v1697 = vpop.f32.mrb[0].mxu0
        %v1698 = vpop.f32.mrb[0].mxu0
        %1699 = vdwg.mxu0
        %v1700 = vadd.f32 %v1466, %v1695
        %v1701 = vld [vmem:[%s14] sm:$0x1]
        %v1702 = vld [vmem:[%s15] sm:$0x1]
        %1703 = vadd.xlane.f32.xlu0 %v1700
        %v1704 = vpop.xlane.xlu0 %1703
        %v1705 = vmul.f32 %v1704, 0.03125
        %v1706 = vsub.f32 %v1700, %v1705
        %v1707 = vmul.f32 %v1706, %v536
        %v1708 = vmul.f32 %v1707, %v1707
        %1709 = vadd.xlane.f32.xlu0 %v1708
        %v1710 = vpop.xlane.xlu0 %1709
        %v1711 = vmul.f32 %v1710, 0.03125
        %v1712 = vadd.f32 %v1711, 1e-12
        %v1713 = vrsqrt.pop %v1712
        %v1714 = vmul.f32 %v1707, %v1713
        %v1716 = vlaneseq
        %v1717 = vshrl.u32 %v1716, 7
        %v1718 = vsub.s32 0, %v1717
        %v1719 = vrot.slane %v1701, %v1718
        %v1721 = vmul.f32 %v1714, %v1719
        %v1723 = vlaneseq
        %v1724 = vshrl.u32 %v1723, 7
        %v1725 = vsub.s32 0, %v1724
        %v1726 = vrot.slane %v1702, %v1725
        %v1728 = vadd.f32 %v1721, %v1726
        %v1729 = vpack.c.bf16 %v1728, %v1728
        %s1730 = scalar_lea.vmem %s4, 64
        %v1731 = vld [vmem:[%s1730] sm:$0xf]
        %v1732 = vld [vmem:[%s1730 + $0x4] sm:$0xf]
        %v1733 = vld [vmem:[%s1730 + $0x8] sm:$0xf]
        %v1734 = vld [vmem:[%s1730 + $0xc] sm:$0xf]
        %v1735 = vld [vmem:[%s1730 + $0x10] sm:$0xf]
        %v1736 = vld [vmem:[%s1730 + $0x14] sm:$0xf]
        %v1737 = vld [vmem:[%s1730 + $0x18] sm:$0xf]
        %v1738 = vld [vmem:[%s1730 + $0x1c] sm:$0xf]
        %v1739 = vld [vmem:[%s1730 + $0x20] sm:$0xf]
        %v1740 = vld [vmem:[%s1730 + $0x24] sm:$0xf]
        %v1741 = vld [vmem:[%s1730 + $0x28] sm:$0xf]
        %v1742 = vld [vmem:[%s1730 + $0x2c] sm:$0xf]
        %v1743 = vld [vmem:[%s1730 + $0x30] sm:$0xf]
        %v1744 = vld [vmem:[%s1730 + $0x34] sm:$0xf]
        %v1745 = vld [vmem:[%s1730 + $0x38] sm:$0xf]
        %v1746 = vld [vmem:[%s1730 + $0x3c] sm:$0xf]
        %s1747 = scalar_lea.vmem %s5, 1
        %v1748 = vld [vmem:[%s1747] sm:$0x1]
        %v1750 = vlaneseq
        %v1751 = vshrl.u32 %v1750, 7
        %v1752 = vsub.s32 0, %v1751
        %v1753 = vrot.slane %v1748, %v1752
        %v1771 = vunpack.c.l.b16 %v1731
        %v1772 = vunpack.c.l.b16 %v1732
        %v1773 = vunpack.c.l.b16 %v1733
        %v1774 = vunpack.c.l.b16 %v1734
        %v1775 = vunpack.c.l.b16 %v1735
        %v1776 = vunpack.c.l.b16 %v1736
        %v1777 = vunpack.c.l.b16 %v1737
        %v1778 = vunpack.c.l.b16 %v1738
        %v1779 = vunpack.c.l.b16 %v1739
        %v1780 = vunpack.c.l.b16 %v1740
        %v1781 = vunpack.c.l.b16 %v1741
        %v1782 = vunpack.c.l.b16 %v1742
        %v1783 = vunpack.c.l.b16 %v1743
        %v1784 = vunpack.c.l.b16 %v1744
        %v1785 = vunpack.c.l.b16 %v1745
        %v1786 = vunpack.c.l.b16 %v1746
        %v1787 = vpack.c.b16 %v1772, %v1771
        %v1788 = vpack.c.b16 %v1774, %v1773
        %v1789 = vpack.c.b16 %v1776, %v1775
        %v1790 = vpack.c.b16 %v1778, %v1777
        %v1791 = vpack.c.b16 %v1780, %v1779
        %v1792 = vpack.c.b16 %v1782, %v1781
        %v1793 = vpack.c.b16 %v1784, %v1783
        %v1794 = vpack.c.b16 %v1786, %v1785
        %1803 = vmatprep.subr.bf16.mxu0 0
        %1804 = vmatpush1.bf16.msra.mxu0 %v1787
        %1805 = vmatprep.subr.bf16.mxu0 0
        %1806 = vmatpush1.bf16.msra.mxu0 %v1788
        %1807 = vmatprep.subr.bf16.mxu0 0
        %1808 = vmatpush1.bf16.msra.mxu0 %v1789
        %1809 = vmatprep.subr.bf16.mxu0 0
        %1810 = vmatpush1.bf16.msra.mxu0 %v1790
        %1811 = vmatprep.subr.bf16.mxu0 0
        %1812 = vmatpush1.bf16.msra.mxu0 %v1791
        %1813 = vmatprep.subr.bf16.mxu0 0
        %1814 = vmatpush1.bf16.msra.mxu0 %v1792
        %1815 = vmatprep.subr.bf16.mxu0 0
        %1816 = vmatpush1.bf16.msra.mxu0 %v1793
        %1817 = vmatprep.subr.bf16.mxu0 0
        %1818 = vmatpush1.bf16.msra.mxu0 %v1794
        %1819 = vmatprep.subr.bf16.mxu0 0
        %1820 = vmatpush1.bf16.msra.mxu0 0
        %1821 = vmatprep.subr.bf16.mxu0 0
        %1822 = vmatpush1.bf16.msra.mxu0 0
        %1823 = vmatprep.subr.bf16.mxu0 0
        %1824 = vmatpush1.bf16.msra.mxu0 0
        %1825 = vmatprep.subr.bf16.mxu0 0
        %1826 = vmatpush1.bf16.msra.mxu0 0
        %1827 = vmatprep.subr.bf16.mxu0 0
        %1828 = vmatpush1.bf16.msra.mxu0 0
        %1829 = vmatprep.subr.bf16.mxu0 0
        %1830 = vmatpush1.bf16.msra.mxu0 0
        %1831 = vmatprep.subr.bf16.mxu0 0
        %1832 = vmatpush1.bf16.msra.mxu0 0
        %1833 = vmatprep.subr.bf16.mxu0 0
        %1834 = vmatpush1.bf16.msra.mxu0 0
        %1835 = vmatprep.mubr.bf16.mxu0 0
        %1836 = vmatmul.mubr.bf16.gmra.mrb[0].mxu0 %v1729
        %v1837 = vpop.f32.mrb[0].mxu0
        %v1838 = vadd.f32 %v1753, %v1837
        %v1839 = vpop.f32.mrb[0].mxu0
        %v1840 = vpop.f32.mrb[0].mxu0
        %v1841 = vpop.f32.mrb[0].mxu0
        %1842 = vdwg.mxu0
        %1844 = vrot.lane.b32.xlu0 %v1838, 96
        %v1845 = vpop.permute.xlu0 %1844
        %v1846 = vsel %vm682, %v1838, 0
        %v1848 = vsel %vm682, %v1845, 0
        %1850 = vmatprep.subr.mxu0 0.0
        %1851 = vmatpush1.xpose.msra.mxu0 %v1848
        %1852 = vmatprep.subr.mxu0 0.0
        %1853 = vmatpush1.xpose.msra.mxu0 0.0
        %1854 = vmatprep.subr.mxu0 0.0
        %1855 = vmatpush1.xpose.msra.mxu0 0.0
        %1856 = vmatprep.subr.mxu0 0.0
        %1857 = vmatpush1.xpose.msra.mxu0 0.0
        %1858 = vmatprep.subr.mxu0 0.0
        %1859 = vmatpush1.xpose.msra.mxu0 0.0
        %1860 = vmatprep.subr.mxu0 0.0
        %1861 = vmatpush1.xpose.msra.mxu0 0.0
        %1862 = vmatprep.subr.mxu0 0.0
        %1863 = vmatpush1.xpose.msra.mxu0 0.0
        %1864 = vmatprep.subr.mxu0 0.0
        %1865 = vmatpush1.xpose.msra.mxu0 0.0
        %1866 = vmatprep.subr.mxu0 0.0
        %1867 = vmatpush1.xpose.msra.mxu0 0.0
        %1868 = vmatprep.subr.mxu0 0.0
        %1869 = vmatpush1.xpose.msra.mxu0 0.0
        %1870 = vmatprep.subr.mxu0 0.0
        %1871 = vmatpush1.xpose.msra.mxu0 0.0
        %1872 = vmatprep.subr.mxu0 0.0
        %1873 = vmatpush1.xpose.msra.mxu0 0.0
        %1874 = vmatprep.subr.mxu0 0.0
        %1875 = vmatpush1.xpose.msra.mxu0 0.0
        %1876 = vmatprep.subr.mxu0 0.0
        %1877 = vmatpush1.xpose.msra.mxu0 0.0
        %1878 = vmatprep.subr.mxu0 0.0
        %1879 = vmatpush1.xpose.msra.mxu0 0.0
        %1880 = vmatprep.subr.mxu0 0.0
        %1881 = vmatpush1.xpose.msra.mxu0 0.0
        %1882 = vmatprep.subr.mxu0 0.0
        %1883 = vmatpush1.xpose.msra.mxu0 0.0
        %1884 = vmatprep.subr.mxu0 0.0
        %1885 = vmatpush1.xpose.msra.mxu0 0.0
        %1886 = vmatprep.subr.mxu0 0.0
        %1887 = vmatpush1.xpose.msra.mxu0 0.0
        %1888 = vmatprep.subr.mxu0 0.0
        %1889 = vmatpush1.xpose.msra.mxu0 0.0
        %1890 = vmatprep.subr.mxu0 0.0
        %1891 = vmatpush1.xpose.msra.mxu0 0.0
        %1892 = vmatprep.subr.mxu0 0.0
        %1893 = vmatpush1.xpose.msra.mxu0 0.0
        %1894 = vmatprep.subr.mxu0 0.0
        %1895 = vmatpush1.xpose.msra.mxu0 0.0
        %1896 = vmatprep.subr.mxu0 0.0
        %1897 = vmatpush1.xpose.msra.mxu0 0.0
        %1898 = vmatprep.subr.mxu0 0.0
        %1899 = vmatpush1.xpose.msra.mxu0 0.0
        %1900 = vmatprep.subr.mxu0 0.0
        %1901 = vmatpush1.xpose.msra.mxu0 0.0
        %1902 = vmatprep.subr.mxu0 0.0
        %1903 = vmatpush1.xpose.msra.mxu0 0.0
        %1904 = vmatprep.subr.mxu0 0.0
        %1905 = vmatpush1.xpose.msra.mxu0 0.0
        %1906 = vmatprep.subr.mxu0 0.0
        %1907 = vmatpush1.xpose.msra.mxu0 0.0
        %1908 = vmatprep.subr.mxu0 0.0
        %1909 = vmatpush1.xpose.msra.mxu0 0.0
        %1910 = vmatprep.subr.mxu0 0.0
        %1911 = vmatpush1.xpose.msra.mxu0 0.0
        %1912 = vmatprep.subr.mxu0 0.0
        %1913 = vmatpush1.xpose.msra.mxu0 0.0
        %1914 = vmatprep.mubr.f32.mxu0 0.0
        %1915 = vmatmul.mubr.f32.gmra.mrb[0].mxu0 %v1846
        %v1916 = vpop.f32.mrb[0].mxu0
        %v1917 = vadd.f32 0.0, %v1916
        %v1918 = vpop.f32.mrb[0].mxu0
        %1919 = vdwg.mxu0
        %v1920 = vmul.f32 %v1917, 0.35355338
        %v1921 = vadd.f32 %v1920, %v762
        %v1922 = vsel %vm682, %v1921, -inf
        %1923 = vmax.xlane.f32.xlu0 %v1922
        %v1924 = vpop.xlane.xlu0 %1923
        %v1925 = vsub.f32 %v1921, %v1924
        %v1926 = vmul.f32 %v1925, 1.442695
        %v1927 = vpow.pop %v1926
        %v1928 = vsel %vm682, %v1927, 0.0
        %1929 = vadd.xlane.f32.xlu0 %v1928
        %v1930 = vpop.xlane.xlu0 %1929
        %v1931 = vrcp.pop %v1930
        %v1932 = vmul.f32 %v1927, %v1931
        %1933 = vrot.lane.b32.xlu0 %v1838, 64
        %v1934 = vpop.permute.xlu0 %1933
        %v1937 = vsel %vm682, %v1932, 0
        %1939 = vmatprep.subr.mxu0 0.0
        %1940 = vmatpush1.msra.mxu0 %v1934
        %1941 = vmatprep.subr.mxu0 0.0
        %1942 = vmatpush1.msra.mxu0 0.0
        %1943 = vmatprep.subr.mxu0 0.0
        %1944 = vmatpush1.msra.mxu0 0.0
        %1945 = vmatprep.subr.mxu0 0.0
        %1946 = vmatpush1.msra.mxu0 0.0
        %1947 = vmatprep.subr.mxu0 0.0
        %1948 = vmatpush1.msra.mxu0 0.0
        %1949 = vmatprep.subr.mxu0 0.0
        %1950 = vmatpush1.msra.mxu0 0.0
        %1951 = vmatprep.subr.mxu0 0.0
        %1952 = vmatpush1.msra.mxu0 0.0
        %1953 = vmatprep.subr.mxu0 0.0
        %1954 = vmatpush1.msra.mxu0 0.0
        %1955 = vmatprep.subr.mxu0 0.0
        %1956 = vmatpush1.msra.mxu0 0.0
        %1957 = vmatprep.subr.mxu0 0.0
        %1958 = vmatpush1.msra.mxu0 0.0
        %1959 = vmatprep.subr.mxu0 0.0
        %1960 = vmatpush1.msra.mxu0 0.0
        %1961 = vmatprep.subr.mxu0 0.0
        %1962 = vmatpush1.msra.mxu0 0.0
        %1963 = vmatprep.subr.mxu0 0.0
        %1964 = vmatpush1.msra.mxu0 0.0
        %1965 = vmatprep.subr.mxu0 0.0
        %1966 = vmatpush1.msra.mxu0 0.0
        %1967 = vmatprep.subr.mxu0 0.0
        %1968 = vmatpush1.msra.mxu0 0.0
        %1969 = vmatprep.subr.mxu0 0.0
        %1970 = vmatpush1.msra.mxu0 0.0
        %1971 = vmatprep.subr.mxu0 0.0
        %1972 = vmatpush1.msra.mxu0 0.0
        %1973 = vmatprep.subr.mxu0 0.0
        %1974 = vmatpush1.msra.mxu0 0.0
        %1975 = vmatprep.subr.mxu0 0.0
        %1976 = vmatpush1.msra.mxu0 0.0
        %1977 = vmatprep.subr.mxu0 0.0
        %1978 = vmatpush1.msra.mxu0 0.0
        %1979 = vmatprep.subr.mxu0 0.0
        %1980 = vmatpush1.msra.mxu0 0.0
        %1981 = vmatprep.subr.mxu0 0.0
        %1982 = vmatpush1.msra.mxu0 0.0
        %1983 = vmatprep.subr.mxu0 0.0
        %1984 = vmatpush1.msra.mxu0 0.0
        %1985 = vmatprep.subr.mxu0 0.0
        %1986 = vmatpush1.msra.mxu0 0.0
        %1987 = vmatprep.subr.mxu0 0.0
        %1988 = vmatpush1.msra.mxu0 0.0
        %1989 = vmatprep.subr.mxu0 0.0
        %1990 = vmatpush1.msra.mxu0 0.0
        %1991 = vmatprep.subr.mxu0 0.0
        %1992 = vmatpush1.msra.mxu0 0.0
        %1993 = vmatprep.subr.mxu0 0.0
        %1994 = vmatpush1.msra.mxu0 0.0
        %1995 = vmatprep.subr.mxu0 0.0
        %1996 = vmatpush1.msra.mxu0 0.0
        %1997 = vmatprep.subr.mxu0 0.0
        %1998 = vmatpush1.msra.mxu0 0.0
        %1999 = vmatprep.subr.mxu0 0.0
        %2000 = vmatpush1.msra.mxu0 0.0
        %2001 = vmatprep.subr.mxu0 0.0
        %2002 = vmatpush1.msra.mxu0 0.0
        %2003 = vmatprep.mubr.f32.mxu0 0.0
        %2004 = vmatmul.mubr.f32.gmra.mrb[0].mxu0 %v1937
        %v2005 = vpop.f32.mrb[0].mxu0
        %v2006 = vadd.f32 0.0, %v2005
        %v2007 = vpop.f32.mrb[0].mxu0
        %2008 = vdwg.mxu0
        %2009 = vrot.lane.b32.xlu0 %v1838, 120
        %v2010 = vpop.permute.xlu0 %2009
        %2011 = vrot.lane.b32.xlu0 %v1838, 88
        %v2012 = vpop.permute.xlu0 %2011
        %v2013 = vsel %vm682, %v2010, 0
        %v2015 = vsel %vm682, %v2012, 0
        %2017 = vmatprep.subr.mxu0 0.0
        %2018 = vmatpush1.xpose.msra.mxu0 %v2015
        %2019 = vmatprep.subr.mxu0 0.0
        %2020 = vmatpush1.xpose.msra.mxu0 0.0
        %2021 = vmatprep.subr.mxu0 0.0
        %2022 = vmatpush1.xpose.msra.mxu0 0.0
        %2023 = vmatprep.subr.mxu0 0.0
        %2024 = vmatpush1.xpose.msra.mxu0 0.0
        %2025 = vmatprep.subr.mxu0 0.0
        %2026 = vmatpush1.xpose.msra.mxu0 0.0
        %2027 = vmatprep.subr.mxu0 0.0
        %2028 = vmatpush1.xpose.msra.mxu0 0.0
        %2029 = vmatprep.subr.mxu0 0.0
        %2030 = vmatpush1.xpose.msra.mxu0 0.0
        %2031 = vmatprep.subr.mxu0 0.0
        %2032 = vmatpush1.xpose.msra.mxu0 0.0
        %2033 = vmatprep.subr.mxu0 0.0
        %2034 = vmatpush1.xpose.msra.mxu0 0.0
        %2035 = vmatprep.subr.mxu0 0.0
        %2036 = vmatpush1.xpose.msra.mxu0 0.0
        %2037 = vmatprep.subr.mxu0 0.0
        %2038 = vmatpush1.xpose.msra.mxu0 0.0
        %2039 = vmatprep.subr.mxu0 0.0
        %2040 = vmatpush1.xpose.msra.mxu0 0.0
        %2041 = vmatprep.subr.mxu0 0.0
        %2042 = vmatpush1.xpose.msra.mxu0 0.0
        %2043 = vmatprep.subr.mxu0 0.0
        %2044 = vmatpush1.xpose.msra.mxu0 0.0
        %2045 = vmatprep.subr.mxu0 0.0
        %2046 = vmatpush1.xpose.msra.mxu0 0.0
        %2047 = vmatprep.subr.mxu0 0.0
        %2048 = vmatpush1.xpose.msra.mxu0 0.0
        %2049 = vmatprep.subr.mxu0 0.0
        %2050 = vmatpush1.xpose.msra.mxu0 0.0
        %2051 = vmatprep.subr.mxu0 0.0
        %2052 = vmatpush1.xpose.msra.mxu0 0.0
        %2053 = vmatprep.subr.mxu0 0.0
        %2054 = vmatpush1.xpose.msra.mxu0 0.0
        %2055 = vmatprep.subr.mxu0 0.0
        %2056 = vmatpush1.xpose.msra.mxu0 0.0
        %2057 = vmatprep.subr.mxu0 0.0
        %2058 = vmatpush1.xpose.msra.mxu0 0.0
        %2059 = vmatprep.subr.mxu0 0.0
        %2060 = vmatpush1.xpose.msra.mxu0 0.0
        %2061 = vmatprep.subr.mxu0 0.0
        %2062 = vmatpush1.xpose.msra.mxu0 0.0
        %2063 = vmatprep.subr.mxu0 0.0
        %2064 = vmatpush1.xpose.msra.mxu0 0.0
        %2065 = vmatprep.subr.mxu0 0.0
        %2066 = vmatpush1.xpose.msra.mxu0 0.0
        %2067 = vmatprep.subr.mxu0 0.0
        %2068 = vmatpush1.xpose.msra.mxu0 0.0
        %2069 = vmatprep.subr.mxu0 0.0
        %2070 = vmatpush1.xpose.msra.mxu0 0.0
        %2071 = vmatprep.subr.mxu0 0.0
        %2072 = vmatpush1.xpose.msra.mxu0 0.0
        %2073 = vmatprep.subr.mxu0 0.0
        %2074 = vmatpush1.xpose.msra.mxu0 0.0
        %2075 = vmatprep.subr.mxu0 0.0
        %2076 = vmatpush1.xpose.msra.mxu0 0.0
        %2077 = vmatprep.subr.mxu0 0.0
        %2078 = vmatpush1.xpose.msra.mxu0 0.0
        %2079 = vmatprep.subr.mxu0 0.0
        %2080 = vmatpush1.xpose.msra.mxu0 0.0
        %2081 = vmatprep.mubr.f32.mxu0 0.0
        %2082 = vmatmul.mubr.f32.gmra.mrb[0].mxu0 %v2013
        %v2083 = vpop.f32.mrb[0].mxu0
        %v2084 = vadd.f32 0.0, %v2083
        %v2085 = vpop.f32.mrb[0].mxu0
        %2086 = vdwg.mxu0
        %v2087 = vmul.f32 %v2084, 0.35355338
        %v2088 = vadd.f32 %v2087, %v762
        %v2089 = vsel %vm682, %v2088, -inf
        %2090 = vmax.xlane.f32.xlu0 %v2089
        %v2091 = vpop.xlane.xlu0 %2090
        %v2092 = vsub.f32 %v2088, %v2091
        %v2093 = vmul.f32 %v2092, 1.442695
        %v2094 = vpow.pop %v2093
        %v2095 = vsel %vm682, %v2094, 0.0
        %2096 = vadd.xlane.f32.xlu0 %v2095
        %v2097 = vpop.xlane.xlu0 %2096
        %v2098 = vrcp.pop %v2097
        %v2099 = vmul.f32 %v2094, %v2098
        %2100 = vrot.lane.b32.xlu0 %v1838, 56
        %v2101 = vpop.permute.xlu0 %2100
        %v2104 = vsel %vm682, %v2099, 0
        %2106 = vmatprep.subr.mxu0 0.0
        %2107 = vmatpush1.msra.mxu0 %v2101
        %2108 = vmatprep.subr.mxu0 0.0
        %2109 = vmatpush1.msra.mxu0 0.0
        %2110 = vmatprep.subr.mxu0 0.0
        %2111 = vmatpush1.msra.mxu0 0.0
        %2112 = vmatprep.subr.mxu0 0.0
        %2113 = vmatpush1.msra.mxu0 0.0
        %2114 = vmatprep.subr.mxu0 0.0
        %2115 = vmatpush1.msra.mxu0 0.0
        %2116 = vmatprep.subr.mxu0 0.0
        %2117 = vmatpush1.msra.mxu0 0.0
        %2118 = vmatprep.subr.mxu0 0.0
        %2119 = vmatpush1.msra.mxu0 0.0
        %2120 = vmatprep.subr.mxu0 0.0
        %2121 = vmatpush1.msra.mxu0 0.0
        %2122 = vmatprep.subr.mxu0 0.0
        %2123 = vmatpush1.msra.mxu0 0.0
        %2124 = vmatprep.subr.mxu0 0.0
        %2125 = vmatpush1.msra.mxu0 0.0
        %2126 = vmatprep.subr.mxu0 0.0
        %2127 = vmatpush1.msra.mxu0 0.0
        %2128 = vmatprep.subr.mxu0 0.0
        %2129 = vmatpush1.msra.mxu0 0.0
        %2130 = vmatprep.subr.mxu0 0.0
        %2131 = vmatpush1.msra.mxu0 0.0
        %2132 = vmatprep.subr.mxu0 0.0
        %2133 = vmatpush1.msra.mxu0 0.0
        %2134 = vmatprep.subr.mxu0 0.0
        %2135 = vmatpush1.msra.mxu0 0.0
        %2136 = vmatprep.subr.mxu0 0.0
        %2137 = vmatpush1.msra.mxu0 0.0
        %2138 = vmatprep.subr.mxu0 0.0
        %2139 = vmatpush1.msra.mxu0 0.0
        %2140 = vmatprep.subr.mxu0 0.0
        %2141 = vmatpush1.msra.mxu0 0.0
        %2142 = vmatprep.subr.mxu0 0.0
        %2143 = vmatpush1.msra.mxu0 0.0
        %2144 = vmatprep.subr.mxu0 0.0
        %2145 = vmatpush1.msra.mxu0 0.0
        %2146 = vmatprep.subr.mxu0 0.0
        %2147 = vmatpush1.msra.mxu0 0.0
        %2148 = vmatprep.subr.mxu0 0.0
        %2149 = vmatpush1.msra.mxu0 0.0
        %2150 = vmatprep.subr.mxu0 0.0
        %2151 = vmatpush1.msra.mxu0 0.0
        %2152 = vmatprep.subr.mxu0 0.0
        %2153 = vmatpush1.msra.mxu0 0.0
        %2154 = vmatprep.subr.mxu0 0.0
        %2155 = vmatpush1.msra.mxu0 0.0
        %2156 = vmatprep.subr.mxu0 0.0
        %2157 = vmatpush1.msra.mxu0 0.0
        %2158 = vmatprep.subr.mxu0 0.0
        %2159 = vmatpush1.msra.mxu0 0.0
        %2160 = vmatprep.subr.mxu0 0.0
        %2161 = vmatpush1.msra.mxu0 0.0
        %2162 = vmatprep.subr.mxu0 0.0
        %2163 = vmatpush1.msra.mxu0 0.0
        %2164 = vmatprep.subr.mxu0 0.0
        %2165 = vmatpush1.msra.mxu0 0.0
        %2166 = vmatprep.subr.mxu0 0.0
        %2167 = vmatpush1.msra.mxu0 0.0
        %2168 = vmatprep.subr.mxu0 0.0
        %2169 = vmatpush1.msra.mxu0 0.0
        %2170 = vmatprep.mubr.f32.mxu0 0.0
        %2171 = vmatmul.mubr.f32.gmra.mrb[0].mxu0 %v2104
        %v2172 = vpop.f32.mrb[0].mxu0
        %v2173 = vadd.f32 0.0, %v2172
        %v2174 = vpop.f32.mrb[0].mxu0
        %2175 = vdwg.mxu0
        %2176 = vrot.lane.b32.xlu0 %v1838, 112
        %v2177 = vpop.permute.xlu0 %2176
        %2178 = vrot.lane.b32.xlu0 %v1838, 80
        %v2179 = vpop.permute.xlu0 %2178
        %v2180 = vsel %vm682, %v2177, 0
        %v2182 = vsel %vm682, %v2179, 0
        %2184 = vmatprep.subr.mxu0 0.0
        %2185 = vmatpush1.xpose.msra.mxu0 %v2182
        %2186 = vmatprep.subr.mxu0 0.0
        %2187 = vmatpush1.xpose.msra.mxu0 0.0
        %2188 = vmatprep.subr.mxu0 0.0
        %2189 = vmatpush1.xpose.msra.mxu0 0.0
        %2190 = vmatprep.subr.mxu0 0.0
        %2191 = vmatpush1.xpose.msra.mxu0 0.0
        %2192 = vmatprep.subr.mxu0 0.0
        %2193 = vmatpush1.xpose.msra.mxu0 0.0
        %2194 = vmatprep.subr.mxu0 0.0
        %2195 = vmatpush1.xpose.msra.mxu0 0.0
        %2196 = vmatprep.subr.mxu0 0.0
        %2197 = vmatpush1.xpose.msra.mxu0 0.0
        %2198 = vmatprep.subr.mxu0 0.0
        %2199 = vmatpush1.xpose.msra.mxu0 0.0
        %2200 = vmatprep.subr.mxu0 0.0
        %2201 = vmatpush1.xpose.msra.mxu0 0.0
        %2202 = vmatprep.subr.mxu0 0.0
        %2203 = vmatpush1.xpose.msra.mxu0 0.0
        %2204 = vmatprep.subr.mxu0 0.0
        %2205 = vmatpush1.xpose.msra.mxu0 0.0
        %2206 = vmatprep.subr.mxu0 0.0
        %2207 = vmatpush1.xpose.msra.mxu0 0.0
        %2208 = vmatprep.subr.mxu0 0.0
        %2209 = vmatpush1.xpose.msra.mxu0 0.0
        %2210 = vmatprep.subr.mxu0 0.0
        %2211 = vmatpush1.xpose.msra.mxu0 0.0
        %2212 = vmatprep.subr.mxu0 0.0
        %2213 = vmatpush1.xpose.msra.mxu0 0.0
        %2214 = vmatprep.subr.mxu0 0.0
        %2215 = vmatpush1.xpose.msra.mxu0 0.0
        %2216 = vmatprep.subr.mxu0 0.0
        %2217 = vmatpush1.xpose.msra.mxu0 0.0
        %2218 = vmatprep.subr.mxu0 0.0
        %2219 = vmatpush1.xpose.msra.mxu0 0.0
        %2220 = vmatprep.subr.mxu0 0.0
        %2221 = vmatpush1.xpose.msra.mxu0 0.0
        %2222 = vmatprep.subr.mxu0 0.0
        %2223 = vmatpush1.xpose.msra.mxu0 0.0
        %2224 = vmatprep.subr.mxu0 0.0
        %2225 = vmatpush1.xpose.msra.mxu0 0.0
        %2226 = vmatprep.subr.mxu0 0.0
        %2227 = vmatpush1.xpose.msra.mxu0 0.0
        %2228 = vmatprep.subr.mxu0 0.0
        %2229 = vmatpush1.xpose.msra.mxu0 0.0
        %2230 = vmatprep.subr.mxu0 0.0
        %2231 = vmatpush1.xpose.msra.mxu0 0.0
        %2232 = vmatprep.subr.mxu0 0.0
        %2233 = vmatpush1.xpose.msra.mxu0 0.0
        %2234 = vmatprep.subr.mxu0 0.0
        %2235 = vmatpush1.xpose.msra.mxu0 0.0
        %2236 = vmatprep.subr.mxu0 0.0
        %2237 = vmatpush1.xpose.msra.mxu0 0.0
        %2238 = vmatprep.subr.mxu0 0.0
        %2239 = vmatpush1.xpose.msra.mxu0 0.0
        %2240 = vmatprep.subr.mxu0 0.0
        %2241 = vmatpush1.xpose.msra.mxu0 0.0
        %2242 = vmatprep.subr.mxu0 0.0
        %2243 = vmatpush1.xpose.msra.mxu0 0.0
        %2244 = vmatprep.subr.mxu0 0.0
        %2245 = vmatpush1.xpose.msra.mxu0 0.0
        %2246 = vmatprep.subr.mxu0 0.0
        %2247 = vmatpush1.xpose.msra.mxu0 0.0
        %2248 = vmatprep.mubr.f32.mxu0 0.0
        %2249 = vmatmul.mubr.f32.gmra.mrb[0].mxu0 %v2180
        %v2250 = vpop.f32.mrb[0].mxu0
        %v2251 = vadd.f32 0.0, %v2250
        %v2252 = vpop.f32.mrb[0].mxu0
        %2253 = vdwg.mxu0
        %v2254 = vmul.f32 %v2251, 0.35355338
        %v2255 = vadd.f32 %v2254, %v762
        %v2256 = vsel %vm682, %v2255, -inf
        %2257 = vmax.xlane.f32.xlu0 %v2256
        %v2258 = vpop.xlane.xlu0 %2257
        %v2259 = vsub.f32 %v2255, %v2258
        %v2260 = vmul.f32 %v2259, 1.442695
        %v2261 = vpow.pop %v2260
        %v2262 = vsel %vm682, %v2261, 0.0
        %2263 = vadd.xlane.f32.xlu0 %v2262
        %v2264 = vpop.xlane.xlu0 %2263
        %v2265 = vrcp.pop %v2264
        %v2266 = vmul.f32 %v2261, %v2265
        %2267 = vrot.lane.b32.xlu0 %v1838, 48
        %v2268 = vpop.permute.xlu0 %2267
        %v2271 = vsel %vm682, %v2266, 0
        %2273 = vmatprep.subr.mxu0 0.0
        %2274 = vmatpush1.msra.mxu0 %v2268
        %2275 = vmatprep.subr.mxu0 0.0
        %2276 = vmatpush1.msra.mxu0 0.0
        %2277 = vmatprep.subr.mxu0 0.0
        %2278 = vmatpush1.msra.mxu0 0.0
        %2279 = vmatprep.subr.mxu0 0.0
        %2280 = vmatpush1.msra.mxu0 0.0
        %2281 = vmatprep.subr.mxu0 0.0
        %2282 = vmatpush1.msra.mxu0 0.0
        %2283 = vmatprep.subr.mxu0 0.0
        %2284 = vmatpush1.msra.mxu0 0.0
        %2285 = vmatprep.subr.mxu0 0.0
        %2286 = vmatpush1.msra.mxu0 0.0
        %2287 = vmatprep.subr.mxu0 0.0
        %2288 = vmatpush1.msra.mxu0 0.0
        %2289 = vmatprep.subr.mxu0 0.0
        %2290 = vmatpush1.msra.mxu0 0.0
        %2291 = vmatprep.subr.mxu0 0.0
        %2292 = vmatpush1.msra.mxu0 0.0
        %2293 = vmatprep.subr.mxu0 0.0
        %2294 = vmatpush1.msra.mxu0 0.0
        %2295 = vmatprep.subr.mxu0 0.0
        %2296 = vmatpush1.msra.mxu0 0.0
        %2297 = vmatprep.subr.mxu0 0.0
        %2298 = vmatpush1.msra.mxu0 0.0
        %2299 = vmatprep.subr.mxu0 0.0
        %2300 = vmatpush1.msra.mxu0 0.0
        %2301 = vmatprep.subr.mxu0 0.0
        %2302 = vmatpush1.msra.mxu0 0.0
        %2303 = vmatprep.subr.mxu0 0.0
        %2304 = vmatpush1.msra.mxu0 0.0
        %2305 = vmatprep.subr.mxu0 0.0
        %2306 = vmatpush1.msra.mxu0 0.0
        %2307 = vmatprep.subr.mxu0 0.0
        %2308 = vmatpush1.msra.mxu0 0.0
        %2309 = vmatprep.subr.mxu0 0.0
        %2310 = vmatpush1.msra.mxu0 0.0
        %2311 = vmatprep.subr.mxu0 0.0
        %2312 = vmatpush1.msra.mxu0 0.0
        %2313 = vmatprep.subr.mxu0 0.0
        %2314 = vmatpush1.msra.mxu0 0.0
        %2315 = vmatprep.subr.mxu0 0.0
        %2316 = vmatpush1.msra.mxu0 0.0
        %2317 = vmatprep.subr.mxu0 0.0
        %2318 = vmatpush1.msra.mxu0 0.0
        %2319 = vmatprep.subr.mxu0 0.0
        %2320 = vmatpush1.msra.mxu0 0.0
        %2321 = vmatprep.subr.mxu0 0.0
        %2322 = vmatpush1.msra.mxu0 0.0
        %2323 = vmatprep.subr.mxu0 0.0
        %2324 = vmatpush1.msra.mxu0 0.0
        %2325 = vmatprep.subr.mxu0 0.0
        %2326 = vmatpush1.msra.mxu0 0.0
        %2327 = vmatprep.subr.mxu0 0.0
        %2328 = vmatpush1.msra.mxu0 0.0
        %2329 = vmatprep.subr.mxu0 0.0
        %2330 = vmatpush1.msra.mxu0 0.0
        %2331 = vmatprep.subr.mxu0 0.0
        %2332 = vmatpush1.msra.mxu0 0.0
        %2333 = vmatprep.subr.mxu0 0.0
        %2334 = vmatpush1.msra.mxu0 0.0
        %2335 = vmatprep.subr.mxu0 0.0
        %2336 = vmatpush1.msra.mxu0 0.0
        %2337 = vmatprep.mubr.f32.mxu0 0.0
        %2338 = vmatmul.mubr.f32.gmra.mrb[0].mxu0 %v2271
        %v2339 = vpop.f32.mrb[0].mxu0
        %v2340 = vadd.f32 0.0, %v2339
        %v2341 = vpop.f32.mrb[0].mxu0
        %2342 = vdwg.mxu0
        %2343 = vrot.lane.b32.xlu0 %v1838, 104
        %v2344 = vpop.permute.xlu0 %2343
        %2345 = vrot.lane.b32.xlu0 %v1838, 72
        %v2346 = vpop.permute.xlu0 %2345
        %v2347 = vsel %vm682, %v2344, 0
        %v2349 = vsel %vm682, %v2346, 0
        %2351 = vmatprep.subr.mxu0 0.0
        %2352 = vmatpush1.xpose.msra.mxu0 %v2349
        %2353 = vmatprep.subr.mxu0 0.0
        %2354 = vmatpush1.xpose.msra.mxu0 0.0
        %2355 = vmatprep.subr.mxu0 0.0
        %2356 = vmatpush1.xpose.msra.mxu0 0.0
        %2357 = vmatprep.subr.mxu0 0.0
        %2358 = vmatpush1.xpose.msra.mxu0 0.0
        %2359 = vmatprep.subr.mxu0 0.0
        %2360 = vmatpush1.xpose.msra.mxu0 0.0
        %2361 = vmatprep.subr.mxu0 0.0
        %2362 = vmatpush1.xpose.msra.mxu0 0.0
        %2363 = vmatprep.subr.mxu0 0.0
        %2364 = vmatpush1.xpose.msra.mxu0 0.0
        %2365 = vmatprep.subr.mxu0 0.0
        %2366 = vmatpush1.xpose.msra.mxu0 0.0
        %2367 = vmatprep.subr.mxu0 0.0
        %2368 = vmatpush1.xpose.msra.mxu0 0.0
        %2369 = vmatprep.subr.mxu0 0.0
        %2370 = vmatpush1.xpose.msra.mxu0 0.0
        %2371 = vmatprep.subr.mxu0 0.0
        %2372 = vmatpush1.xpose.msra.mxu0 0.0
        %2373 = vmatprep.subr.mxu0 0.0
        %2374 = vmatpush1.xpose.msra.mxu0 0.0
        %2375 = vmatprep.subr.mxu0 0.0
        %2376 = vmatpush1.xpose.msra.mxu0 0.0
        %2377 = vmatprep.subr.mxu0 0.0
        %2378 = vmatpush1.xpose.msra.mxu0 0.0
        %2379 = vmatprep.subr.mxu0 0.0
        %2380 = vmatpush1.xpose.msra.mxu0 0.0
        %2381 = vmatprep.subr.mxu0 0.0
        %2382 = vmatpush1.xpose.msra.mxu0 0.0
        %2383 = vmatprep.subr.mxu0 0.0
        %2384 = vmatpush1.xpose.msra.mxu0 0.0
        %2385 = vmatprep.subr.mxu0 0.0
        %2386 = vmatpush1.xpose.msra.mxu0 0.0
        %2387 = vmatprep.subr.mxu0 0.0
        %2388 = vmatpush1.xpose.msra.mxu0 0.0
        %2389 = vmatprep.subr.mxu0 0.0
        %2390 = vmatpush1.xpose.msra.mxu0 0.0
        %2391 = vmatprep.subr.mxu0 0.0
        %2392 = vmatpush1.xpose.msra.mxu0 0.0
        %2393 = vmatprep.subr.mxu0 0.0
        %2394 = vmatpush1.xpose.msra.mxu0 0.0
        %2395 = vmatprep.subr.mxu0 0.0
        %2396 = vmatpush1.xpose.msra.mxu0 0.0
        %2397 = vmatprep.subr.mxu0 0.0
        %2398 = vmatpush1.xpose.msra.mxu0 0.0
        %2399 = vmatprep.subr.mxu0 0.0
        %2400 = vmatpush1.xpose.msra.mxu0 0.0
        %2401 = vmatprep.subr.mxu0 0.0
        %2402 = vmatpush1.xpose.msra.mxu0 0.0
        %2403 = vmatprep.subr.mxu0 0.0
        %2404 = vmatpush1.xpose.msra.mxu0 0.0
        %2405 = vmatprep.subr.mxu0 0.0
        %2406 = vmatpush1.xpose.msra.mxu0 0.0
        %2407 = vmatprep.subr.mxu0 0.0
        %2408 = vmatpush1.xpose.msra.mxu0 0.0
        %2409 = vmatprep.subr.mxu0 0.0
        %2410 = vmatpush1.xpose.msra.mxu0 0.0
        %2411 = vmatprep.subr.mxu0 0.0
        %2412 = vmatpush1.xpose.msra.mxu0 0.0
        %2413 = vmatprep.subr.mxu0 0.0
        %2414 = vmatpush1.xpose.msra.mxu0 0.0
        %2415 = vmatprep.mubr.f32.mxu0 0.0
        %2416 = vmatmul.mubr.f32.gmra.mrb[0].mxu0 %v2347
        %v2417 = vpop.f32.mrb[0].mxu0
        %v2418 = vadd.f32 0.0, %v2417
        %v2419 = vpop.f32.mrb[0].mxu0
        %2420 = vdwg.mxu0
        %v2421 = vmul.f32 %v2418, 0.35355338
        %v2422 = vadd.f32 %v2421, %v762
        %v2423 = vsel %vm682, %v2422, -inf
        %2424 = vmax.xlane.f32.xlu0 %v2423
        %v2425 = vpop.xlane.xlu0 %2424
        %v2426 = vsub.f32 %v2422, %v2425
        %v2427 = vmul.f32 %v2426, 1.442695
        %v2428 = vpow.pop %v2427
        %v2429 = vsel %vm682, %v2428, 0.0
        %2430 = vadd.xlane.f32.xlu0 %v2429
        %v2431 = vpop.xlane.xlu0 %2430
        %v2432 = vrcp.pop %v2431
        %v2433 = vmul.f32 %v2428, %v2432
        %2434 = vrot.lane.b32.xlu0 %v1838, 40
        %v2435 = vpop.permute.xlu0 %2434
        %v2438 = vsel %vm682, %v2433, 0
        %2440 = vmatprep.subr.mxu0 0.0
        %2441 = vmatpush1.msra.mxu0 %v2435
        %2442 = vmatprep.subr.mxu0 0.0
        %2443 = vmatpush1.msra.mxu0 0.0
        %2444 = vmatprep.subr.mxu0 0.0
        %2445 = vmatpush1.msra.mxu0 0.0
        %2446 = vmatprep.subr.mxu0 0.0
        %2447 = vmatpush1.msra.mxu0 0.0
        %2448 = vmatprep.subr.mxu0 0.0
        %2449 = vmatpush1.msra.mxu0 0.0
        %2450 = vmatprep.subr.mxu0 0.0
        %2451 = vmatpush1.msra.mxu0 0.0
        %2452 = vmatprep.subr.mxu0 0.0
        %2453 = vmatpush1.msra.mxu0 0.0
        %2454 = vmatprep.subr.mxu0 0.0
        %2455 = vmatpush1.msra.mxu0 0.0
        %2456 = vmatprep.subr.mxu0 0.0
        %2457 = vmatpush1.msra.mxu0 0.0
        %2458 = vmatprep.subr.mxu0 0.0
        %2459 = vmatpush1.msra.mxu0 0.0
        %2460 = vmatprep.subr.mxu0 0.0
        %2461 = vmatpush1.msra.mxu0 0.0
        %2462 = vmatprep.subr.mxu0 0.0
        %2463 = vmatpush1.msra.mxu0 0.0
        %2464 = vmatprep.subr.mxu0 0.0
        %2465 = vmatpush1.msra.mxu0 0.0
        %2466 = vmatprep.subr.mxu0 0.0
        %2467 = vmatpush1.msra.mxu0 0.0
        %2468 = vmatprep.subr.mxu0 0.0
        %2469 = vmatpush1.msra.mxu0 0.0
        %2470 = vmatprep.subr.mxu0 0.0
        %2471 = vmatpush1.msra.mxu0 0.0
        %2472 = vmatprep.subr.mxu0 0.0
        %2473 = vmatpush1.msra.mxu0 0.0
        %2474 = vmatprep.subr.mxu0 0.0
        %2475 = vmatpush1.msra.mxu0 0.0
        %2476 = vmatprep.subr.mxu0 0.0
        %2477 = vmatpush1.msra.mxu0 0.0
        %2478 = vmatprep.subr.mxu0 0.0
        %2479 = vmatpush1.msra.mxu0 0.0
        %2480 = vmatprep.subr.mxu0 0.0
        %2481 = vmatpush1.msra.mxu0 0.0
        %2482 = vmatprep.subr.mxu0 0.0
        %2483 = vmatpush1.msra.mxu0 0.0
        %2484 = vmatprep.subr.mxu0 0.0
        %2485 = vmatpush1.msra.mxu0 0.0
        %2486 = vmatprep.subr.mxu0 0.0
        %2487 = vmatpush1.msra.mxu0 0.0
        %2488 = vmatprep.subr.mxu0 0.0
        %2489 = vmatpush1.msra.mxu0 0.0
        %2490 = vmatprep.subr.mxu0 0.0
        %2491 = vmatpush1.msra.mxu0 0.0
        %2492 = vmatprep.subr.mxu0 0.0
        %2493 = vmatpush1.msra.mxu0 0.0
        %2494 = vmatprep.subr.mxu0 0.0
        %2495 = vmatpush1.msra.mxu0 0.0
        %2496 = vmatprep.subr.mxu0 0.0
        %2497 = vmatpush1.msra.mxu0 0.0
        %2498 = vmatprep.subr.mxu0 0.0
        %2499 = vmatpush1.msra.mxu0 0.0
        %2500 = vmatprep.subr.mxu0 0.0
        %2501 = vmatpush1.msra.mxu0 0.0
        %2502 = vmatprep.subr.mxu0 0.0
        %2503 = vmatpush1.msra.mxu0 0.0
        %2504 = vmatprep.mubr.f32.mxu0 0.0
        %2505 = vmatmul.mubr.f32.gmra.mrb[0].mxu0 %v2438
        %v2506 = vpop.f32.mrb[0].mxu0
        %v2507 = vadd.f32 0.0, %v2506
        %v2508 = vpop.f32.mrb[0].mxu0
        %2509 = vdwg.mxu0
        %2511 = vrot.lane.b32.xlu0 %v2173, 8
        %v2512 = vpop.permute.xlu0 %2511
        %2515 = vrot.lane.b32.xlu0 %v2340, 16
        %v2516 = vpop.permute.xlu0 %2515
        %2519 = vrot.lane.b32.xlu0 %v2507, 24
        %v2520 = vpop.permute.xlu0 %2519
        %v2522 = vsel %vm682, %v2006, %v2512
        %v2523 = vsel %vm1366, %v2522, %v2516
        %v2524 = vsel %vm1368, %v2523, %v2520
        %v2525 = vpack.c.bf16 %v2524, %v2524
        %s2526 = scalar_lea.vmem %s6, 16
        %v2527 = vld [vmem:[%s2526] sm:$0xf]
        %v2528 = vld [vmem:[%s2526 + $0x4] sm:$0xf]
        %v2529 = vld [vmem:[%s2526 + $0x8] sm:$0xf]
        %v2530 = vld [vmem:[%s2526 + $0xc] sm:$0xf]
        %s2531 = scalar_lea.vmem %s7, 1
        %v2532 = vld [vmem:[%s2531] sm:$0x1]
        %v2534 = vlaneseq
        %v2535 = vshrl.u32 %v2534, 7
        %v2536 = vsub.s32 0, %v2535
        %v2537 = vrot.slane %v2532, %v2536
        %v2543 = vunpack.c.l.b16 %v2527
        %v2544 = vunpack.c.l.b16 %v2528
        %v2545 = vunpack.c.l.b16 %v2529
        %v2546 = vunpack.c.l.b16 %v2530
        %v2547 = vpack.c.b16 %v2544, %v2543
        %v2548 = vpack.c.b16 %v2546, %v2545
        %v2552 = vsel %vm1394, %v2525, 0
        %2554 = vmatprep.subr.bf16.mxu0 0
        %2555 = vmatpush1.bf16.msra.mxu0 %v2547
        %2556 = vmatprep.subr.bf16.mxu0 0
        %2557 = vmatpush1.bf16.msra.mxu0 %v2548
        %2558 = vmatprep.subr.bf16.mxu0 0
        %2559 = vmatpush1.bf16.msra.mxu0 0
        %2560 = vmatprep.subr.bf16.mxu0 0
        %2561 = vmatpush1.bf16.msra.mxu0 0
        %2562 = vmatprep.subr.bf16.mxu0 0
        %2563 = vmatpush1.bf16.msra.mxu0 0
        %2564 = vmatprep.subr.bf16.mxu0 0
        %2565 = vmatpush1.bf16.msra.mxu0 0
        %2566 = vmatprep.subr.bf16.mxu0 0
        %2567 = vmatpush1.bf16.msra.mxu0 0
        %2568 = vmatprep.subr.bf16.mxu0 0
        %2569 = vmatpush1.bf16.msra.mxu0 0
        %2570 = vmatprep.subr.bf16.mxu0 0
        %2571 = vmatpush1.bf16.msra.mxu0 0
        %2572 = vmatprep.subr.bf16.mxu0 0
        %2573 = vmatpush1.bf16.msra.mxu0 0
        %2574 = vmatprep.subr.bf16.mxu0 0
        %2575 = vmatpush1.bf16.msra.mxu0 0
        %2576 = vmatprep.subr.bf16.mxu0 0
        %2577 = vmatpush1.bf16.msra.mxu0 0
        %2578 = vmatprep.subr.bf16.mxu0 0
        %2579 = vmatpush1.bf16.msra.mxu0 0
        %2580 = vmatprep.subr.bf16.mxu0 0
        %2581 = vmatpush1.bf16.msra.mxu0 0
        %2582 = vmatprep.subr.bf16.mxu0 0
        %2583 = vmatpush1.bf16.msra.mxu0 0
        %2584 = vmatprep.subr.bf16.mxu0 0
        %2585 = vmatpush1.bf16.msra.mxu0 0
        %2586 = vmatprep.mubr.bf16.mxu0 0
        %2587 = vmatmul.mubr.bf16.gmra.mrb[0].mxu0 %v2552
        %v2588 = vpop.f32.mrb[0].mxu0
        %v2589 = vadd.f32 %v2537, %v2588
        %v2590 = vpop.f32.mrb[0].mxu0
        %v2591 = vpop.f32.mrb[0].mxu0
        %v2592 = vpop.f32.mrb[0].mxu0
        %2593 = vdwg.mxu0
        %v2594 = vadd.f32 %v1728, %v2589
        %s2595 = scalar_lea.vmem %s8, 1
        %v2596 = vld [vmem:[%s2595] sm:$0x1]
        %s2597 = scalar_lea.vmem %s9, 1
        %v2598 = vld [vmem:[%s2597] sm:$0x1]
        %2599 = vadd.xlane.f32.xlu0 %v2594
        %v2600 = vpop.xlane.xlu0 %2599
        %v2601 = vmul.f32 %v2600, 0.03125
        %v2602 = vsub.f32 %v2594, %v2601
        %v2603 = vmul.f32 %v2602, %v536
        %v2604 = vmul.f32 %v2603, %v2603
        %2605 = vadd.xlane.f32.xlu0 %v2604
        %v2606 = vpop.xlane.xlu0 %2605
        %v2607 = vmul.f32 %v2606, 0.03125
        %v2608 = vadd.f32 %v2607, 1e-12
        %v2609 = vrsqrt.pop %v2608
        %v2610 = vmul.f32 %v2603, %v2609
        %v2612 = vlaneseq
        %v2613 = vshrl.u32 %v2612, 7
        %v2614 = vsub.s32 0, %v2613
        %v2615 = vrot.slane %v2596, %v2614
        %v2617 = vmul.f32 %v2610, %v2615
        %v2619 = vlaneseq
        %v2620 = vshrl.u32 %v2619, 7
        %v2621 = vsub.s32 0, %v2620
        %v2622 = vrot.slane %v2598, %v2621
        %v2624 = vadd.f32 %v2617, %v2622
        %v2625 = vpack.c.bf16 %v2624, %v2624
        %s2626 = scalar_lea.vmem %s10, 64
        %v2627 = vld [vmem:[%s2626] sm:$0xf]
        %v2628 = vld [vmem:[%s2626 + $0x4] sm:$0xf]
        %v2629 = vld [vmem:[%s2626 + $0x8] sm:$0xf]
        %v2630 = vld [vmem:[%s2626 + $0xc] sm:$0xf]
        %v2631 = vld [vmem:[%s2626 + $0x10] sm:$0xf]
        %v2632 = vld [vmem:[%s2626 + $0x14] sm:$0xf]
        %v2633 = vld [vmem:[%s2626 + $0x18] sm:$0xf]
        %v2634 = vld [vmem:[%s2626 + $0x1c] sm:$0xf]
        %v2635 = vld [vmem:[%s2626 + $0x20] sm:$0xf]
        %v2636 = vld [vmem:[%s2626 + $0x24] sm:$0xf]
        %v2637 = vld [vmem:[%s2626 + $0x28] sm:$0xf]
        %v2638 = vld [vmem:[%s2626 + $0x2c] sm:$0xf]
        %v2639 = vld [vmem:[%s2626 + $0x30] sm:$0xf]
        %v2640 = vld [vmem:[%s2626 + $0x34] sm:$0xf]
        %v2641 = vld [vmem:[%s2626 + $0x38] sm:$0xf]
        %v2642 = vld [vmem:[%s2626 + $0x3c] sm:$0xf]
        %s2643 = scalar_lea.vmem %s11, 1
        %v2644 = vld [vmem:[%s2643] sm:$0x1]
        %v2646 = vlaneseq
        %v2647 = vshrl.u32 %v2646, 7
        %v2648 = vsub.s32 0, %v2647
        %v2649 = vrot.slane %v2644, %v2648
        %v2667 = vunpack.c.l.b16 %v2627
        %v2668 = vunpack.c.l.b16 %v2628
        %v2669 = vunpack.c.l.b16 %v2629
        %v2670 = vunpack.c.l.b16 %v2630
        %v2671 = vunpack.c.l.b16 %v2631
        %v2672 = vunpack.c.l.b16 %v2632
        %v2673 = vunpack.c.l.b16 %v2633
        %v2674 = vunpack.c.l.b16 %v2634
        %v2675 = vunpack.c.l.b16 %v2635
        %v2676 = vunpack.c.l.b16 %v2636
        %v2677 = vunpack.c.l.b16 %v2637
        %v2678 = vunpack.c.l.b16 %v2638
        %v2679 = vunpack.c.l.b16 %v2639
        %v2680 = vunpack.c.l.b16 %v2640
        %v2681 = vunpack.c.l.b16 %v2641
        %v2682 = vunpack.c.l.b16 %v2642
        %v2683 = vpack.c.b16 %v2668, %v2667
        %v2684 = vpack.c.b16 %v2670, %v2669
        %v2685 = vpack.c.b16 %v2672, %v2671
        %v2686 = vpack.c.b16 %v2674, %v2673
        %v2687 = vpack.c.b16 %v2676, %v2675
        %v2688 = vpack.c.b16 %v2678, %v2677
        %v2689 = vpack.c.b16 %v2680, %v2679
        %v2690 = vpack.c.b16 %v2682, %v2681
        %2699 = vmatprep.subr.bf16.mxu0 0
        %2700 = vmatpush1.bf16.msra.mxu0 %v2683
        %2701 = vmatprep.subr.bf16.mxu0 0
        %2702 = vmatpush1.bf16.msra.mxu0 %v2684
        %2703 = vmatprep.subr.bf16.mxu0 0
        %2704 = vmatpush1.bf16.msra.mxu0 %v2685
        %2705 = vmatprep.subr.bf16.mxu0 0
        %2706 = vmatpush1.bf16.msra.mxu0 %v2686
        %2707 = vmatprep.subr.bf16.mxu0 0
        %2708 = vmatpush1.bf16.msra.mxu0 %v2687
        %2709 = vmatprep.subr.bf16.mxu0 0
        %2710 = vmatpush1.bf16.msra.mxu0 %v2688
        %2711 = vmatprep.subr.bf16.mxu0 0
        %2712 = vmatpush1.bf16.msra.mxu0 %v2689
        %2713 = vmatprep.subr.bf16.mxu0 0
        %2714 = vmatpush1.bf16.msra.mxu0 %v2690
        %2715 = vmatprep.subr.bf16.mxu0 0
        %2716 = vmatpush1.bf16.msra.mxu0 0
        %2717 = vmatprep.subr.bf16.mxu0 0
        %2718 = vmatpush1.bf16.msra.mxu0 0
        %2719 = vmatprep.subr.bf16.mxu0 0
        %2720 = vmatpush1.bf16.msra.mxu0 0
        %2721 = vmatprep.subr.bf16.mxu0 0
        %2722 = vmatpush1.bf16.msra.mxu0 0
        %2723 = vmatprep.subr.bf16.mxu0 0
        %2724 = vmatpush1.bf16.msra.mxu0 0
        %2725 = vmatprep.subr.bf16.mxu0 0
        %2726 = vmatpush1.bf16.msra.mxu0 0
        %2727 = vmatprep.subr.bf16.mxu0 0
        %2728 = vmatpush1.bf16.msra.mxu0 0
        %2729 = vmatprep.subr.bf16.mxu0 0
        %2730 = vmatpush1.bf16.msra.mxu0 0
        %2731 = vmatprep.mubr.bf16.mxu0 0
        %2732 = vmatmul.mubr.bf16.gmra.mrb[0].mxu0 %v2625
        %v2733 = vpop.f32.mrb[0].mxu0
        %v2734 = vadd.f32 %v2649, %v2733
        %v2735 = vpop.f32.mrb[0].mxu0
        %v2736 = vpop.f32.mrb[0].mxu0
        %v2737 = vpop.f32.mrb[0].mxu0
        %2738 = vdwg.mxu0
        %v2739 = vmul.f32 %v2734, 0.5
        %v2740 = vmul.f32 %v2734, 0.044715
        %v2741 = vmul.f32 %v2740, %v2734
        %v2742 = vmul.f32 %v2741, %v2734
        %v2743 = vadd.f32 %v2734, %v2742
        %v2744 = vmul.f32 %v2743, 0.7978846
        %v2745 = vtanh.pop %v2744
        %v2746 = vadd.f32 %v2745, 1.0
        %v2747 = vmul.f32 %v2739, %v2746
        %v2748 = vpack.c.bf16 %v2747, %v2747
        %s2749 = scalar_lea.vmem %s12, 64
        %v2750 = vld [vmem:[%s2749] sm:$0xf]
        %v2751 = vld [vmem:[%s2749 + $0x4] sm:$0xf]
        %v2752 = vld [vmem:[%s2749 + $0x8] sm:$0xf]
        %v2753 = vld [vmem:[%s2749 + $0xc] sm:$0xf]
        %v2754 = vld [vmem:[%s2749 + $0x10] sm:$0xf]
        %v2755 = vld [vmem:[%s2749 + $0x14] sm:$0xf]
        %v2756 = vld [vmem:[%s2749 + $0x18] sm:$0xf]
        %v2757 = vld [vmem:[%s2749 + $0x1c] sm:$0xf]
        %v2758 = vld [vmem:[%s2749 + $0x20] sm:$0xf]
        %v2759 = vld [vmem:[%s2749 + $0x24] sm:$0xf]
        %v2760 = vld [vmem:[%s2749 + $0x28] sm:$0xf]
        %v2761 = vld [vmem:[%s2749 + $0x2c] sm:$0xf]
        %v2762 = vld [vmem:[%s2749 + $0x30] sm:$0xf]
        %v2763 = vld [vmem:[%s2749 + $0x34] sm:$0xf]
        %v2764 = vld [vmem:[%s2749 + $0x38] sm:$0xf]
        %v2765 = vld [vmem:[%s2749 + $0x3c] sm:$0xf]
        %s2766 = scalar_lea.vmem %s13, 1
        %v2767 = vld [vmem:[%s2766] sm:$0x1]
        %v2769 = vlaneseq
        %v2770 = vshrl.u32 %v2769, 7
        %v2771 = vsub.s32 0, %v2770
        %v2772 = vrot.slane %v2767, %v2771
        %v2790 = vunpack.c.l.b16 %v2750
        %v2791 = vunpack.c.l.b16 %v2751
        %v2792 = vunpack.c.l.b16 %v2752
        %v2793 = vunpack.c.l.b16 %v2753
        %v2794 = vunpack.c.l.b16 %v2754
        %v2795 = vunpack.c.l.b16 %v2755
        %v2796 = vunpack.c.l.b16 %v2756
        %v2797 = vunpack.c.l.b16 %v2757
        %v2798 = vunpack.c.l.b16 %v2758
        %v2799 = vunpack.c.l.b16 %v2759
        %v2800 = vunpack.c.l.b16 %v2760
        %v2801 = vunpack.c.l.b16 %v2761
        %v2802 = vunpack.c.l.b16 %v2762
        %v2803 = vunpack.c.l.b16 %v2763
        %v2804 = vunpack.c.l.b16 %v2764
        %v2805 = vunpack.c.l.b16 %v2765
        %v2806 = vpack.c.b16 %v2791, %v2790
        %v2807 = vpack.c.b16 %v2793, %v2792
        %v2808 = vpack.c.b16 %v2795, %v2794
        %v2809 = vpack.c.b16 %v2797, %v2796
        %v2810 = vpack.c.b16 %v2799, %v2798
        %v2811 = vpack.c.b16 %v2801, %v2800
        %v2812 = vpack.c.b16 %v2803, %v2802
        %v2813 = vpack.c.b16 %v2805, %v2804
        %2822 = vmatprep.subr.bf16.mxu0 0
        %2823 = vmatpush1.bf16.msra.mxu0 %v2806
        %2824 = vmatprep.subr.bf16.mxu0 0
        %2825 = vmatpush1.bf16.msra.mxu0 %v2807
        %2826 = vmatprep.subr.bf16.mxu0 0
        %2827 = vmatpush1.bf16.msra.mxu0 %v2808
        %2828 = vmatprep.subr.bf16.mxu0 0
        %2829 = vmatpush1.bf16.msra.mxu0 %v2809
        %2830 = vmatprep.subr.bf16.mxu0 0
        %2831 = vmatpush1.bf16.msra.mxu0 %v2810
        %2832 = vmatprep.subr.bf16.mxu0 0
        %2833 = vmatpush1.bf16.msra.mxu0 %v2811
        %2834 = vmatprep.subr.bf16.mxu0 0
        %2835 = vmatpush1.bf16.msra.mxu0 %v2812
        %2836 = vmatprep.subr.bf16.mxu0 0
        %2837 = vmatpush1.bf16.msra.mxu0 %v2813
        %2838 = vmatprep.subr.bf16.mxu0 0
        %2839 = vmatpush1.bf16.msra.mxu0 0
        %2840 = vmatprep.subr.bf16.mxu0 0
        %2841 = vmatpush1.bf16.msra.mxu0 0
        %2842 = vmatprep.subr.bf16.mxu0 0
        %2843 = vmatpush1.bf16.msra.mxu0 0
        %2844 = vmatprep.subr.bf16.mxu0 0
        %2845 = vmatpush1.bf16.msra.mxu0 0
        %2846 = vmatprep.subr.bf16.mxu0 0
        %2847 = vmatpush1.bf16.msra.mxu0 0
        %2848 = vmatprep.subr.bf16.mxu0 0
        %2849 = vmatpush1.bf16.msra.mxu0 0
        %2850 = vmatprep.subr.bf16.mxu0 0
        %2851 = vmatpush1.bf16.msra.mxu0 0
        %2852 = vmatprep.subr.bf16.mxu0 0
        %2853 = vmatpush1.bf16.msra.mxu0 0
        %2854 = vmatprep.mubr.bf16.mxu0 0
        %2855 = vmatmul.mubr.bf16.gmra.mrb[0].mxu0 %v2748
        %v2856 = vpop.f32.mrb[0].mxu0
        %v2857 = vadd.f32 %v2772, %v2856
        %v2858 = vpop.f32.mrb[0].mxu0
        %v2859 = vpop.f32.mrb[0].mxu0
        %v2860 = vpop.f32.mrb[0].mxu0
        %2861 = vdwg.mxu0
        %v2862 = vadd.f32 %v2624, %v2857
        %s2863 = scalar_lea.vmem %s14, 1
        %v2864 = vld [vmem:[%s2863] sm:$0x1]
        %s2865 = scalar_lea.vmem %s15, 1
        %v2866 = vld [vmem:[%s2865] sm:$0x1]
        %2867 = vadd.xlane.f32.xlu0 %v2862
        %v2868 = vpop.xlane.xlu0 %2867
        %v2869 = vmul.f32 %v2868, 0.03125
        %v2870 = vsub.f32 %v2862, %v2869
        %v2871 = vmul.f32 %v2870, %v536
        %v2872 = vmul.f32 %v2871, %v2871
        %2873 = vadd.xlane.f32.xlu0 %v2872
        %v2874 = vpop.xlane.xlu0 %2873
        %v2875 = vmul.f32 %v2874, 0.03125
        %v2876 = vadd.f32 %v2875, 1e-12
        %v2877 = vrsqrt.pop %v2876
        %v2878 = vmul.f32 %v2871, %v2877
        %v2880 = vlaneseq
        %v2881 = vshrl.u32 %v2880, 7
        %v2882 = vsub.s32 0, %v2881
        %v2883 = vrot.slane %v2864, %v2882
        %v2885 = vmul.f32 %v2878, %v2883
        %v2887 = vlaneseq
        %v2888 = vshrl.u32 %v2887, 7
        %v2889 = vsub.s32 0, %v2888
        %v2890 = vrot.slane %v2866, %v2889
        %v2892 = vadd.f32 %v2885, %v2890
        %2893 = vst [vmem:[%s523] sm:$0xff] %v2892
        %s2894 = sand.u32 %s384, 1
        %s2895 = scalar_lea.sflag [#allocation3], %s2894
        %s2896 = sand.u32 %s384, 1
        %s2897 = smul.addr %s2896, 8
        %s2898 = scalar_lea.vmem [#allocation2], %s2897
        // Predicated region
        $region85: #{bert_tower_forward.1} parent=83 // pred_check
          %p2899 = pneg %p394
        $region86: #{bert_tower_forward.1} parent=83 // pred_check_branch
          %2901 = sbr.rel (%p2899) target = $region88
        $region87: #{bert_tower_forward.1} parent=83 // pred_region
          %s2903 = ssub.s32 128, 128
          %2904 = vsyncadd %s2895, %s2903
          %s2905 = smul.addr %s30, 128
          %s2906 = scalar_lea.hbm %s16, %s2905
          %s2908 = sshll.u32 %s2898, 4
          %s2909 = int_to_ptr.vmem [resolvable:$true] %s2908
          %2911 = dma.vmem_to_hbm [thread:$0]  %s2909, 128, %s2906, %s2895
        $region88: #{bert_tower_forward.1} parent=83 // pred_fallthru
          _
      $region84: #{bert_tower_forward.1} parent=5 // pred_fallthru
        _
      %p2912 = scmp.le.s32.totalorder 2, %s25
      // Predicated region
      $region89: #{bert_tower_forward.1} parent=5 // pred_check
        %p2913 = pneg %p2912
      $region90: #{bert_tower_forward.1} parent=5 // pred_check_branch
        %2915 = sbr.rel (%p2913) target = $region92
      $region91: #{bert_tower_forward.1} parent=5 // pred_region
        %s2916 = ssub.s32 %s25, 2
        // Predicated region
        $region93: #{bert_tower_forward.1} parent=91 // pred_check
          %p2917 = pneg %p400
        $region94: #{bert_tower_forward.1} parent=91 // pred_check_branch
          %2919 = sbr.rel (%p2917) target = $region96
        $region95: #{bert_tower_forward.1} parent=91 // pred_region
          %s2920 = sand.u32 %s385, 1
          %s2921 = scalar_lea.sflag [#allocation3], %s2920
          %s2922 = sand.u32 %s385, 1
          %s2923 = smul.addr %s2922, 8
          %s2924 = scalar_lea.vmem [#allocation2], %s2923
          %2925 = dma.done %s2921, 128
        $region96: #{bert_tower_forward.1} parent=91 // pred_fallthru
          _
      $region92: #{bert_tower_forward.1} parent=5 // pred_fallthru
        _
    $region6: #{bert_tower_forward.1} parent=1 // loop_footer
      %s29 = sadd.s32 1, %s25
    $region7: #{bert_tower_forward.1} parent=1 // loop_footer_branch
      %24 = sbr.rel target = $region3
    $region8: #{bert_tower_forward.1} parent=1 // loop_exit
      _
    %2926 = vsyncpa [#allocation3], 1
    %s2927 = scalar_lea.sflag [#allocation3], 1
    %2928 = vsyncpa %s2927, 1

</llo_original>
